<compile_context>
chip_gen: v7x
topology: tpu7x:2x2x1
jax: 0.10.0
libtpu: 0.0.40
codegen_flags: <defaults>
</compile_context>

<pallas_src>
import functools

import jax
import jax.numpy as jnp
from jax import lax
from jax.experimental import pallas as pl
from jax.experimental.pallas import tpu as pltpu

# ---- module-consistent sizes -------------------------------------------------
B = 2          # batch
C_IN = 4       # c_in
C_H = 32       # c_h
C_OUT = 4      # c_out
T = 16         # time length of enc/cond features
N_BLOCKS = 2   # n_conv_blocks

L = B * T      # lane-batched length (channels on sublanes, batch*time on lanes)
H = C_H

EPS = 1e-5
NEG_SLOPE = 0.01  # nn.LeakyReLU default

# ---- packed parameter row layout (shared by pack_params and the kernel) ------
ROW_IN = 0                                   # rows [0,32):   [w(t-1)|w(t)|w(t+1)|b]      cols 0:13


def ROW_BLK(i):                              # rows [32+32i,64+32i): [taps|b|gamma|beta]  cols 0:99
    return C_H * (1 + i)


ROW_IH0 = C_H * (1 + N_BLOCKS)               # 96 : [W_ih l0 | b_ih l0]                   cols 0:33
ROW_IH1 = ROW_IH0 + 3 * C_H                  # 192: [W_ih l1 | b_ih l1]                   cols 0:33
ROW_HH = ROW_IH1 + 3 * C_H                   # 288: block-diag [[Whh0,0],[0,Whh1]] | bhh  cols 0:65
ROW_OUT = ROW_HH + 6 * C_H                   # 480: block-diag [[ow,0],[0,ow]] | ob       cols 0:65
P_ROWS = ((ROW_OUT + 2 * C_OUT + 7) // 8) * 8  # 488
P_COLS = 128


def decoder_kernel(ys_ref, affs_ref, p_ref, out_ref):
    f32 = jnp.float32

    # ---- lane / segment constants (built once, reused everywhere) ----
    lane = lax.broadcasted_iota(jnp.int32, (1, L), 1)
    is_t0 = functools.reduce(jnp.logical_or, [lane == b * T for b in range(B)])
    is_tl = functools.reduce(jnp.logical_or,
                             [lane == b * T + (T - 1) for b in range(B)])
    # (L, B) 0/1 segment-indicator matrix: column b selects the lanes of batch b.
    l_col = lax.broadcasted_iota(jnp.int32, (L, B), 0)
    b_col = lax.broadcasted_iota(jnp.int32, (L, B), 1)
    seg_sel = jnp.logical_and(l_col >= b_col * T,
                              l_col < (b_col + 1) * T).astype(f32)
    ones_col = jnp.ones((L, 1), f32)

    def leaky(x):
        return jnp.maximum(x, NEG_SLOPE * x)

    def shift_taps(x):
        # x[:, t-1] / x[:, t+1] within each length-T batch segment, zero at edges.
        # pltpu.roll follows np.roll semantics: out[..., l] = x[..., l - shift].
        xp = jnp.where(is_t0, 0.0, pltpu.roll(x, 1, 1))
        xn = jnp.where(is_tl, 0.0, pltpu.roll(x, L - 1, 1))
        return xp, xn

    def seg_bcast(x_cb):
        # (rows, B) per-(row, batch) scalars -> (rows, L) lane-broadcast
        out = x_cb[:, 0:1]
        for b in range(1, B):
            out = jnp.where(lane >= b * T, x_cb[:, b:b + 1], out)
        return out

    def seg_mean_var(x):
        # Per-(row, batch) mean / UNBIASED variance over time (torch .var()),
        # reductions done on the MXU: one dot against the segment matrix.
        mn_cb = jnp.dot(x, seg_sel, preferred_element_type=f32) * (1.0 / T)
        mn_l = seg_bcast(mn_cb)
        d = x - mn_l
        var_cb = jnp.dot(d * d, seg_sel,
                         preferred_element_type=f32) * (1.0 / (T - 1))
        return mn_l, d, var_cb

    # ---------------- input affine: c = IN(y1); c_affine = c*sd2 + mn2 ----------------
    y1 = ys_ref[0]                               # (C_IN, L)  enc features
    y2 = ys_ref[1]                               # (C_IN, L)  cond features
    _, d1, var1_cb = seg_mean_var(y1)
    mn2_l, _, var2_cb = seg_mean_var(y2)
    scale_cb = jnp.sqrt(var2_cb + EPS) * lax.rsqrt(var1_cb + EPS)   # sd2/sd1, (C_IN, B)
    c_aff = d1 * seg_bcast(scale_cb) + mn2_l                        # (C_IN, L)

    # ---------------- in_layer (k=3 conv) + LeakyReLU ----------------
    w_in = p_ref[pl.ds(ROW_IN, C_H), :]          # full-lane load; value-sliced below
    xp, xn = shift_taps(c_aff)
    y = (jnp.dot(w_in[:, 0:C_IN], xp, preferred_element_type=f32)
         + jnp.dot(w_in[:, C_IN:2 * C_IN], c_aff, preferred_element_type=f32)
         + jnp.dot(w_in[:, 2 * C_IN:3 * C_IN], xn, preferred_element_type=f32)
         + w_in[:, 3 * C_IN:3 * C_IN + 1])
    y = leaky(y)

    # ---- ConvBlocks (Conv+BN(train)+LeakyReLU, residual) + InstanceNorm + cond affine ----
    for i in range(N_BLOCKS):
        blk = p_ref[pl.ds(ROW_BLK(i), C_H), :]                   # (C_H, 128) full-lane load
        w = blk[:, 0:3 * C_H]
        cb = blk[:, 3 * C_H:3 * C_H + 1]
        gamma = blk[:, 3 * C_H + 1:3 * C_H + 2]
        beta = blk[:, 3 * C_H + 2:3 * C_H + 3]

        xp, xn = shift_taps(y)
        stacked = jnp.concatenate([xp, y, xn], axis=0)           # (3*C_H, L), aligned
        conv = jnp.dot(w, stacked, preferred_element_type=f32) + cb

        # BatchNorm1d, training-mode batch stats over (B, T), biased variance (MXU reduce).
        bm = jnp.dot(conv, ones_col, preferred_element_type=f32) * (1.0 / L)
        dc = conv - bm
        bv = jnp.dot(dc * dc, ones_col, preferred_element_type=f32) * (1.0 / L)
        y = y + leaky(dc * (gamma * lax.rsqrt(bv + EPS)) + beta)  # residual

        # InstanceNorm then y*sd + mn (per-block cond affine), folded into one scale.
        _, dy, var_cb = seg_mean_var(y)
        aff_mn = affs_ref[i, 0]                                   # (C_H, B)
        aff_sd = affs_ref[i, 1]                                   # (C_H, B)
        y = dy * seg_bcast(aff_sd * lax.rsqrt(var_cb + EPS)) + seg_bcast(aff_mn)

    # ---------------- 2-layer GRU over the 2 "sequence" steps (= batch elems) ----------------
    # Batch columns are independent and the torch.cat'ed `mn` column is dropped
    # by y[:, 1:, :] before the output layer, so it is skipped (exact).
    wih0_b = p_ref[pl.ds(ROW_IH0, 3 * C_H), :]
    wih1_b = p_ref[pl.ds(ROW_IH1, 3 * C_H), :]
    whh_b = p_ref[pl.ds(ROW_HH, 6 * C_H), :]
    wih0, bih0 = wih0_b[:, 0:C_H], wih0_b[:, C_H:C_H + 1]
    wih1, bih1 = wih1_b[:, 0:C_H], wih1_b[:, C_H:C_H + 1]
    whh_bd, bhh = whh_b[:, 0:2 * C_H], whh_b[:, 2 * C_H:2 * C_H + 1]

    def gru_update(gi, gh, h_prev):
        r = jax.nn.sigmoid(gi[0:H] + gh[0:H])
        z = jax.nn.sigmoid(gi[H:2 * H] + gh[H:2 * H])
        n = jnp.tanh(gi[2 * H:3 * H] + r * gh[2 * H:3 * H])
        new = (1.0 - z) * n
        return new if h_prev is None else new + z * h_prev

    # Hoisted: layer-0 input-to-hidden gates for BOTH sequence steps in one matmul.
    gi0_all = jnp.dot(wih0, y, preferred_element_type=f32) + bih0     # (3H, L)

    # ---- step t = 0 (h == 0 for both layers -> gh reduces to the hh bias) ----
    h0 = gru_update(gi0_all[:, 0:T], bhh[0:3 * H], None)              # (H, T)
    h1 = gru_update(jnp.dot(wih1, h0, preferred_element_type=f32) + bih1,
                    bhh[3 * H:6 * H], None)                           # (H, T)
    top0 = h1

    # Both step-1 hidden-to-hidden matmuls fused into one block-diagonal dot.
    gh_all = (jnp.dot(whh_bd, jnp.concatenate([h0, h1], axis=0),
                      preferred_element_type=f32) + bhh)              # (6H, T)

    # ---- step t = 1 ----
    h0 = gru_update(gi0_all[:, T:2 * T], gh_all[0:3 * H], h0)
    h1 = gru_update(jnp.dot(wih1, h0, preferred_element_type=f32) + bih1,
                    gh_all[3 * H:6 * H], h1)

    # ------- Linear(c_h -> c_out): block-diag over both batches, single store -------
    ow = p_ref[pl.ds(ROW_OUT, 2 * C_OUT), :]                          # (2*C_OUT, 128)
    tops = jnp.concatenate([top0, h1], axis=0)                        # (2H, T), aligned
    out_ref[...] = (jnp.dot(ow[:, 0:2 * C_H], tops, preferred_element_type=f32)
                    + ow[:, 2 * C_H:2 * C_H + 1])


def init_params(key):
    # PyTorch-like parameter shapes (Conv1d weight: (C_out, C_in, 3), etc.)
    ks = jax.random.split(key, 12)
    s = 0.1
    return {
        "in_w": s * jax.random.normal(ks[0], (C_H, C_IN, 3), jnp.float32),
        "in_b": s * jax.random.normal(ks[1], (C_H,), jnp.float32),
        "conv_w": s * jax.random.normal(ks[2], (N_BLOCKS, C_H, C_H, 3), jnp.float32),
        "conv_b": s * jax.random.normal(ks[3], (N_BLOCKS, C_H), jnp.float32),
        "bn_g": 1.0 + s * jax.random.normal(ks[4], (N_BLOCKS, C_H), jnp.float32),
        "bn_b": s * jax.random.normal(ks[5], (N_BLOCKS, C_H), jnp.float32),
        "w_ih": s * jax.random.normal(ks[6], (2, 3 * C_H, C_H), jnp.float32),
        "w_hh": s * jax.random.normal(ks[7], (2, 3 * C_H, C_H), jnp.float32),
        "b_ih": s * jax.random.normal(ks[8], (2, 3 * C_H), jnp.float32),
        "b_hh": s * jax.random.normal(ks[9], (2, 3 * C_H), jnp.float32),
        "out_w": s * jax.random.normal(ks[10], (C_OUT, C_H), jnp.float32),
        "out_b": s * jax.random.normal(ks[11], (C_OUT,), jnp.float32),
    }


def pack_params(p):
    # Host-side, once: every weight/bias goes into ONE (P_ROWS, 128) f32 array.
    P = jnp.zeros((P_ROWS, P_COLS), jnp.float32)

    # in_layer: [w(t-1) | w(t) | w(t+1) | b]
    w_in = p["in_w"]
    P = P.at[ROW_IN:ROW_IN + C_H, 0:3 * C_IN + 1].set(
        jnp.concatenate([w_in[:, :, 0], w_in[:, :, 1], w_in[:, :, 2],
                         p["in_b"][:, None]], axis=1))
    # conv blocks: [taps | b | gamma | beta]
    for i in range(N_BLOCKS):
        w = p["conv_w"][i]
        P = P.at[ROW_BLK(i):ROW_BLK(i) + C_H, 0:3 * C_H + 3].set(
            jnp.concatenate([w[:, :, 0], w[:, :, 1], w[:, :, 2],
                             p["conv_b"][i][:, None], p["bn_g"][i][:, None],
                             p["bn_b"][i][:, None]], axis=1))
    # GRU input-to-hidden per layer: [W_ih | b_ih]
    for layer, r in ((0, ROW_IH0), (1, ROW_IH1)):
        P = P.at[r:r + 3 * C_H, 0:C_H + 1].set(
            jnp.concatenate([p["w_ih"][layer], p["b_ih"][layer][:, None]], axis=1))
    # GRU hidden-to-hidden, fused block-diag [[Whh0, 0], [0, Whh1]] | [bhh0; bhh1]
    P = P.at[ROW_HH:ROW_HH + 3 * C_H, 0:C_H].set(p["w_hh"][0])
    P = P.at[ROW_HH + 3 * C_H:ROW_HH + 6 * C_H, C_H:2 * C_H].set(p["w_hh"][1])
    P = P.at[ROW_HH:ROW_HH + 6 * C_H, 2 * C_H:2 * C_H + 1].set(
        jnp.concatenate([p["b_hh"][0], p["b_hh"][1]])[:, None])
    # out layer, block-diag [[ow, 0], [0, ow]] | [ob; ob]
    P = P.at[ROW_OUT:ROW_OUT + C_OUT, 0:C_H].set(p["out_w"])
    P = P.at[ROW_OUT + C_OUT:ROW_OUT + 2 * C_OUT, C_H:2 * C_H].set(p["out_w"])
    P = P.at[ROW_OUT:ROW_OUT + 2 * C_OUT, 2 * C_H:2 * C_H + 1].set(
        jnp.concatenate([p["out_b"], p["out_b"]])[:, None])
    return P


@jax.jit
def decoder_forward(y1, y2, mns_a, sds_a, packed_params):
    # Layout plumbing only: channels on sublanes, (batch*time) on lanes.
    ys = jnp.stack([y1, y2], axis=0).transpose(0, 2, 1, 3).reshape(2, C_IN, L)
    # Per-block cond affine as tiny per-(channel, batch) scalars: (NB, 2, C_H, B).
    aff = jnp.stack([mns_a, sds_a], axis=1)[..., 0].transpose(0, 1, 3, 2)

    vmem = pl.BlockSpec(memory_space=pltpu.MemorySpace.VMEM)
    out = pl.pallas_call(
        decoder_kernel,
        out_shape=jax.ShapeDtypeStruct((B * C_OUT, T), jnp.float32),
        in_specs=[vmem, vmem, vmem],
        out_specs=vmem,
    )(ys, aff, packed_params)
    # (B*C_OUT, T) rows are [b0c0..b0c3, b1c0..b1c3] -> (B, C_OUT, T)
    return out.reshape(B, C_OUT, T)


if __name__ == "__main__":
    key = jax.random.PRNGKey(0)
    k = jax.random.split(key, 8)

    # enc = (y1, _, _);  cond = (y2, mns, sds)
    y1 = jax.random.normal(k[0], (B, C_IN, T), jnp.float32)
    y2 = jax.random.normal(k[1], (B, C_IN, T), jnp.float32)
    mns = [0.5 * jax.random.normal(k[2 + i], (B, C_H, 1), jnp.float32)
           for i in range(N_BLOCKS)]
    sds = [jnp.abs(jax.random.normal(k[4 + i], (B, C_H, 1), jnp.float32)) + 0.5
           for i in range(N_BLOCKS)]
    mns_a = jnp.stack(mns, axis=0)   # (N_BLOCKS, B, C_H, 1)
    sds_a = jnp.stack(sds, axis=0)

    params = init_params(k[6])
    packed = pack_params(params)     # packed once, outside the jitted forward

    out = decoder_forward(y1, y2, mns_a, sds_a, packed)
    out = jax.block_until_ready(out)

    assert out.shape == (B, C_OUT, T), out.shape
    assert bool(jnp.all(jnp.isfinite(out)))
    print("KERNEL_OK")
</pallas_src>

<mosaic_0001>
module attributes {stable_mosaic.version = 11 : i64} {
  func.func @decoder_kernel(%arg0: memref<2x4x32xf32, #tpu.memory_space<vmem>>, %arg1: memref<2x2x32x2xf32, #tpu.memory_space<vmem>>, %arg2: memref<488x128xf32, #tpu.memory_space<vmem>>, %arg3: memref<8x16xf32, #tpu.memory_space<vmem>>) attributes {dimension_semantics = [], scalar_prefetch = 0 : i64, scratch_operands = 0 : i64, tpu.core_type = #tpu.core_type<tc>} {
    %0 = tpu.iota {dimensions = array<i32: 1>} : vector<1x32xi32>
    %c0_i32 = arith.constant 0 : i32
    %1 = vector.broadcast %c0_i32 : i32 to vector<1x32xi32>
    %2 = arith.cmpi eq, %0, %1 : vector<1x32xi32>
    %c16_i32 = arith.constant 16 : i32
    %3 = vector.broadcast %c16_i32 : i32 to vector<1x32xi32>
    %4 = arith.cmpi eq, %0, %3 : vector<1x32xi32>
    %5 = arith.ori %2, %4 : vector<1x32xi1>
    %c15_i32 = arith.constant 15 : i32
    %6 = vector.broadcast %c15_i32 : i32 to vector<1x32xi32>
    %7 = arith.cmpi eq, %0, %6 : vector<1x32xi32>
    %c31_i32 = arith.constant 31 : i32
    %8 = vector.broadcast %c31_i32 : i32 to vector<1x32xi32>
    %9 = arith.cmpi eq, %0, %8 : vector<1x32xi32>
    %10 = arith.ori %7, %9 : vector<1x32xi1>
    %11 = tpu.iota {dimensions = array<i32: 0>} : vector<32x2xi32>
    %12 = tpu.iota {dimensions = array<i32: 1>} : vector<32x2xi32>
    %c16_i32_0 = arith.constant 16 : i32
    %13 = vector.broadcast %c16_i32_0 : i32 to vector<32x2xi32>
    %14 = arith.muli %12, %13 : vector<32x2xi32>
    %15 = arith.cmpi sge, %11, %14 : vector<32x2xi32>
    %c1_i32 = arith.constant 1 : i32
    %16 = vector.broadcast %c1_i32 : i32 to vector<32x2xi32>
    %17 = arith.addi %12, %16 : vector<32x2xi32>
    %c16_i32_1 = arith.constant 16 : i32
    %18 = vector.broadcast %c16_i32_1 : i32 to vector<32x2xi32>
    %19 = arith.muli %17, %18 : vector<32x2xi32>
    %20 = arith.cmpi slt, %11, %19 : vector<32x2xi32>
    %21 = arith.andi %15, %20 : vector<32x2xi1>
    %22 = arith.extui %21 : vector<32x2xi1> to vector<32x2xi32>
    %23 = arith.sitofp %22 : vector<32x2xi32> to vector<32x2xf32>
    %cst = arith.constant 1.000000e+00 : f32
    %24 = vector.broadcast %cst : f32 to vector<32x1xf32>
    %c0 = arith.constant 0 : index
    %c0_2 = arith.constant 0 : index
    %c0_3 = arith.constant 0 : index
    %25 = vector.load %arg0[%c0, %c0_2, %c0_3] : memref<2x4x32xf32, #tpu.memory_space<vmem>>, vector<1x4x32xf32>
    %26 = vector.shape_cast %25 : vector<1x4x32xf32> to vector<4x32xf32>
    %c1 = arith.constant 1 : index
    %c0_4 = arith.constant 0 : index
    %c0_5 = arith.constant 0 : index
    %27 = vector.load %arg0[%c1, %c0_4, %c0_5] : memref<2x4x32xf32, #tpu.memory_space<vmem>>, vector<1x4x32xf32>
    %28 = vector.shape_cast %27 : vector<1x4x32xf32> to vector<4x32xf32>
    %cst_6 = arith.constant dense<0.000000e+00> : vector<4x2xf32>
    %29 = tpu.matmul %26, %23, %cst_6 {dimension_numbers = #tpu.dot_dimension_numbers<[1], [0], [0], [1], [0, 0, 1, 1], [], []>} : vector<4x32xf32>, vector<32x2xf32>, vector<4x2xf32> -> vector<4x2xf32>
    %cst_7 = arith.constant 6.250000e-02 : f32
    %30 = vector.broadcast %cst_7 : f32 to vector<4x2xf32>
    %31 = arith.mulf %29, %30 : vector<4x2xf32>
    %32 = vector.extract_strided_slice %31 {offsets = [0, 0], sizes = [4, 1], strides = [1, 1]} : vector<4x2xf32> to vector<4x1xf32>
    %c16_i32_8 = arith.constant 16 : i32
    %33 = vector.broadcast %c16_i32_8 : i32 to vector<1x32xi32>
    %34 = arith.cmpi sge, %0, %33 : vector<1x32xi32>
    %35 = vector.extract_strided_slice %31 {offsets = [0, 1], sizes = [4, 1], strides = [1, 1]} : vector<4x2xf32> to vector<4x1xf32>
    %36 = vector.shape_cast %34 : vector<1x32xi1> to vector<1x32xi1>
    %37 = vector.broadcast %36 : vector<1x32xi1> to vector<4x32xi1>
    %38 = vector.shape_cast %35 : vector<4x1xf32> to vector<4x1xf32>
    %39 = vector.broadcast %38 : vector<4x1xf32> to vector<4x32xf32>
    %40 = vector.shape_cast %32 : vector<4x1xf32> to vector<4x1xf32>
    %41 = vector.broadcast %40 : vector<4x1xf32> to vector<4x32xf32>
    %42 = arith.select %37, %39, %41 : vector<4x32xi1>, vector<4x32xf32>
    %43 = arith.subf %26, %42 : vector<4x32xf32>
    %44 = arith.mulf %43, %43 : vector<4x32xf32>
    %cst_9 = arith.constant dense<0.000000e+00> : vector<4x2xf32>
    %45 = tpu.matmul %44, %23, %cst_9 {dimension_numbers = #tpu.dot_dimension_numbers<[1], [0], [0], [1], [0, 0, 1, 1], [], []>} : vector<4x32xf32>, vector<32x2xf32>, vector<4x2xf32> -> vector<4x2xf32>
    %cst_10 = arith.constant 0.0666666701 : f32
    %46 = vector.broadcast %cst_10 : f32 to vector<4x2xf32>
    %47 = arith.mulf %45, %46 : vector<4x2xf32>
    %cst_11 = arith.constant dense<0.000000e+00> : vector<4x2xf32>
    %48 = tpu.matmul %28, %23, %cst_11 {dimension_numbers = #tpu.dot_dimension_numbers<[1], [0], [0], [1], [0, 0, 1, 1], [], []>} : vector<4x32xf32>, vector<32x2xf32>, vector<4x2xf32> -> vector<4x2xf32>
    %cst_12 = arith.constant 6.250000e-02 : f32
    %49 = vector.broadcast %cst_12 : f32 to vector<4x2xf32>
    %50 = arith.mulf %48, %49 : vector<4x2xf32>
    %51 = vector.extract_strided_slice %50 {offsets = [0, 0], sizes = [4, 1], strides = [1, 1]} : vector<4x2xf32> to vector<4x1xf32>
    %c16_i32_13 = arith.constant 16 : i32
    %52 = vector.broadcast %c16_i32_13 : i32 to vector<1x32xi32>
    %53 = arith.cmpi sge, %0, %52 : vector<1x32xi32>
    %54 = vector.extract_strided_slice %50 {offsets = [0, 1], sizes = [4, 1], strides = [1, 1]} : vector<4x2xf32> to vector<4x1xf32>
    %55 = vector.shape_cast %53 : vector<1x32xi1> to vector<1x32xi1>
    %56 = vector.broadcast %55 : vector<1x32xi1> to vector<4x32xi1>
    %57 = vector.shape_cast %54 : vector<4x1xf32> to vector<4x1xf32>
    %58 = vector.broadcast %57 : vector<4x1xf32> to vector<4x32xf32>
    %59 = vector.shape_cast %51 : vector<4x1xf32> to vector<4x1xf32>
    %60 = vector.broadcast %59 : vector<4x1xf32> to vector<4x32xf32>
    %61 = arith.select %56, %58, %60 : vector<4x32xi1>, vector<4x32xf32>
    %62 = arith.subf %28, %61 : vector<4x32xf32>
    %63 = arith.mulf %62, %62 : vector<4x32xf32>
    %cst_14 = arith.constant dense<0.000000e+00> : vector<4x2xf32>
    %64 = tpu.matmul %63, %23, %cst_14 {dimension_numbers = #tpu.dot_dimension_numbers<[1], [0], [0], [1], [0, 0, 1, 1], [], []>} : vector<4x32xf32>, vector<32x2xf32>, vector<4x2xf32> -> vector<4x2xf32>
    %cst_15 = arith.constant 0.0666666701 : f32
    %65 = vector.broadcast %cst_15 : f32 to vector<4x2xf32>
    %66 = arith.mulf %64, %65 : vector<4x2xf32>
    %cst_16 = arith.constant 9.99999974E-6 : f32
    %67 = vector.broadcast %cst_16 : f32 to vector<4x2xf32>
    %68 = arith.addf %66, %67 : vector<4x2xf32>
    %69 = math.sqrt %68 : vector<4x2xf32>
    %cst_17 = arith.constant 9.99999974E-6 : f32
    %70 = vector.broadcast %cst_17 : f32 to vector<4x2xf32>
    %71 = arith.addf %47, %70 : vector<4x2xf32>
    %72 = math.rsqrt %71 : vector<4x2xf32>
    %73 = arith.mulf %69, %72 : vector<4x2xf32>
    %74 = vector.extract_strided_slice %73 {offsets = [0, 0], sizes = [4, 1], strides = [1, 1]} : vector<4x2xf32> to vector<4x1xf32>
    %c16_i32_18 = arith.constant 16 : i32
    %75 = vector.broadcast %c16_i32_18 : i32 to vector<1x32xi32>
    %76 = arith.cmpi sge, %0, %75 : vector<1x32xi32>
    %77 = vector.extract_strided_slice %73 {offsets = [0, 1], sizes = [4, 1], strides = [1, 1]} : vector<4x2xf32> to vector<4x1xf32>
    %78 = vector.shape_cast %76 : vector<1x32xi1> to vector<1x32xi1>
    %79 = vector.broadcast %78 : vector<1x32xi1> to vector<4x32xi1>
    %80 = vector.shape_cast %77 : vector<4x1xf32> to vector<4x1xf32>
    %81 = vector.broadcast %80 : vector<4x1xf32> to vector<4x32xf32>
    %82 = vector.shape_cast %74 : vector<4x1xf32> to vector<4x1xf32>
    %83 = vector.broadcast %82 : vector<4x1xf32> to vector<4x32xf32>
    %84 = arith.select %79, %81, %83 : vector<4x32xi1>, vector<4x32xf32>
    %85 = arith.mulf %43, %84 : vector<4x32xf32>
    %86 = arith.addf %85, %61 : vector<4x32xf32>
    %c0_19 = arith.constant 0 : index
    %c0_20 = arith.constant 0 : index
    %87 = vector.load %arg2[%c0_19, %c0_20] : memref<488x128xf32, #tpu.memory_space<vmem>>, vector<32x128xf32>
    %c1_i32_21 = arith.constant 1 : i32
    %88 = tpu.dynamic_rotate %86 by %c1_i32_21 dim 1 : vector<4x32xf32>, i32 -> vector<4x32xf32>
    %cst_22 = arith.constant 0.000000e+00 : f32
    %89 = vector.shape_cast %5 : vector<1x32xi1> to vector<1x32xi1>
    %90 = vector.broadcast %89 : vector<1x32xi1> to vector<4x32xi1>
    %91 = vector.broadcast %cst_22 : f32 to vector<4x32xf32>
    %92 = arith.select %90, %91, %88 : vector<4x32xi1>, vector<4x32xf32>
    %c31_i32_23 = arith.constant 31 : i32
    %93 = tpu.dynamic_rotate %86 by %c31_i32_23 dim 1 : vector<4x32xf32>, i32 -> vector<4x32xf32>
    %cst_24 = arith.constant 0.000000e+00 : f32
    %94 = vector.shape_cast %10 : vector<1x32xi1> to vector<1x32xi1>
    %95 = vector.broadcast %94 : vector<1x32xi1> to vector<4x32xi1>
    %96 = vector.broadcast %cst_24 : f32 to vector<4x32xf32>
    %97 = arith.select %95, %96, %93 : vector<4x32xi1>, vector<4x32xf32>
    %98 = vector.extract_strided_slice %87 {offsets = [0, 0], sizes = [32, 4], strides = [1, 1]} : vector<32x128xf32> to vector<32x4xf32>
    %cst_25 = arith.constant dense<0.000000e+00> : vector<32x32xf32>
    %99 = tpu.matmul %98, %92, %cst_25 {dimension_numbers = #tpu.dot_dimension_numbers<[1], [0], [0], [1], [0, 0, 1, 1], [], []>} : vector<32x4xf32>, vector<4x32xf32>, vector<32x32xf32> -> vector<32x32xf32>
    %100 = vector.extract_strided_slice %87 {offsets = [0, 4], sizes = [32, 4], strides = [1, 1]} : vector<32x128xf32> to vector<32x4xf32>
    %cst_26 = arith.constant dense<0.000000e+00> : vector<32x32xf32>
    %101 = tpu.matmul %100, %86, %cst_26 {dimension_numbers = #tpu.dot_dimension_numbers<[1], [0], [0], [1], [0, 0, 1, 1], [], []>} : vector<32x4xf32>, vector<4x32xf32>, vector<32x32xf32> -> vector<32x32xf32>
    %102 = arith.addf %99, %101 : vector<32x32xf32>
    %103 = vector.extract_strided_slice %87 {offsets = [0, 8], sizes = [32, 4], strides = [1, 1]} : vector<32x128xf32> to vector<32x4xf32>
    %cst_27 = arith.constant dense<0.000000e+00> : vector<32x32xf32>
    %104 = tpu.matmul %103, %97, %cst_27 {dimension_numbers = #tpu.dot_dimension_numbers<[1], [0], [0], [1], [0, 0, 1, 1], [], []>} : vector<32x4xf32>, vector<4x32xf32>, vector<32x32xf32> -> vector<32x32xf32>
    %105 = arith.addf %102, %104 : vector<32x32xf32>
    %106 = vector.extract_strided_slice %87 {offsets = [0, 12], sizes = [32, 1], strides = [1, 1]} : vector<32x128xf32> to vector<32x1xf32>
    %107 = vector.broadcast %106 : vector<32x1xf32> to vector<32x32xf32>
    %108 = arith.addf %105, %107 : vector<32x32xf32>
    %cst_28 = arith.constant 0.00999999977 : f32
    %109 = vector.broadcast %cst_28 : f32 to vector<32x32xf32>
    %110 = arith.mulf %109, %108 : vector<32x32xf32>
    %111 = arith.maximumf %108, %110 : vector<32x32xf32>
    %c32 = arith.constant 32 : index
    %c0_29 = arith.constant 0 : index
    %112 = vector.load %arg2[%c32, %c0_29] : memref<488x128xf32, #tpu.memory_space<vmem>>, vector<32x128xf32>
    %113 = vector.extract_strided_slice %112 {offsets = [0, 0], sizes = [32, 96], strides = [1, 1]} : vector<32x128xf32> to vector<32x96xf32>
    %114 = vector.extract_strided_slice %112 {offsets = [0, 96], sizes = [32, 1], strides = [1, 1]} : vector<32x128xf32> to vector<32x1xf32>
    %115 = vector.extract_strided_slice %112 {offsets = [0, 97], sizes = [32, 1], strides = [1, 1]} : vector<32x128xf32> to vector<32x1xf32>
    %116 = vector.extract_strided_slice %112 {offsets = [0, 98], sizes = [32, 1], strides = [1, 1]} : vector<32x128xf32> to vector<32x1xf32>
    %c1_i32_30 = arith.constant 1 : i32
    %117 = tpu.dynamic_rotate %111 by %c1_i32_30 dim 1 : vector<32x32xf32>, i32 -> vector<32x32xf32>
    %cst_31 = arith.constant 0.000000e+00 : f32
    %118 = vector.shape_cast %5 : vector<1x32xi1> to vector<1x32xi1>
    %119 = vector.broadcast %118 : vector<1x32xi1> to vector<32x32xi1>
    %120 = vector.broadcast %cst_31 : f32 to vector<32x32xf32>
    %121 = arith.select %119, %120, %117 : vector<32x32xi1>, vector<32x32xf32>
    %c31_i32_32 = arith.constant 31 : i32
    %122 = tpu.dynamic_rotate %111 by %c31_i32_32 dim 1 : vector<32x32xf32>, i32 -> vector<32x32xf32>
    %cst_33 = arith.constant 0.000000e+00 : f32
    %123 = vector.shape_cast %10 : vector<1x32xi1> to vector<1x32xi1>
    %124 = vector.broadcast %123 : vector<1x32xi1> to vector<32x32xi1>
    %125 = vector.broadcast %cst_33 : f32 to vector<32x32xf32>
    %126 = arith.select %124, %125, %122 : vector<32x32xi1>, vector<32x32xf32>
    %127 = tpu.concatenate %121, %111, %126 in 0 : vector<32x32xf32>, vector<32x32xf32>, vector<32x32xf32> -> vector<96x32xf32>
    %cst_34 = arith.constant dense<0.000000e+00> : vector<32x32xf32>
    %128 = tpu.matmul %113, %127, %cst_34 {dimension_numbers = #tpu.dot_dimension_numbers<[1], [0], [0], [1], [0, 0, 1, 1], [], []>} : vector<32x96xf32>, vector<96x32xf32>, vector<32x32xf32> -> vector<32x32xf32>
    %129 = vector.broadcast %114 : vector<32x1xf32> to vector<32x32xf32>
    %130 = arith.addf %128, %129 : vector<32x32xf32>
    %cst_35 = arith.constant dense<0.000000e+00> : vector<32x1xf32>
    %131 = tpu.matmul %130, %24, %cst_35 {dimension_numbers = #tpu.dot_dimension_numbers<[1], [0], [0], [1], [0, 0, 1, 1], [], []>} : vector<32x32xf32>, vector<32x1xf32>, vector<32x1xf32> -> vector<32x1xf32>
    %cst_36 = arith.constant 3.125000e-02 : f32
    %132 = vector.broadcast %cst_36 : f32 to vector<32x1xf32>
    %133 = arith.mulf %131, %132 : vector<32x1xf32>
    %134 = vector.broadcast %133 : vector<32x1xf32> to vector<32x32xf32>
    %135 = arith.subf %130, %134 : vector<32x32xf32>
    %136 = arith.mulf %135, %135 : vector<32x32xf32>
    %cst_37 = arith.constant dense<0.000000e+00> : vector<32x1xf32>
    %137 = tpu.matmul %136, %24, %cst_37 {dimension_numbers = #tpu.dot_dimension_numbers<[1], [0], [0], [1], [0, 0, 1, 1], [], []>} : vector<32x32xf32>, vector<32x1xf32>, vector<32x1xf32> -> vector<32x1xf32>
    %cst_38 = arith.constant 3.125000e-02 : f32
    %138 = vector.broadcast %cst_38 : f32 to vector<32x1xf32>
    %139 = arith.mulf %137, %138 : vector<32x1xf32>
    %cst_39 = arith.constant 9.99999974E-6 : f32
    %140 = vector.broadcast %cst_39 : f32 to vector<32x1xf32>
    %141 = arith.addf %139, %140 : vector<32x1xf32>
    %142 = math.rsqrt %141 : vector<32x1xf32>
    %143 = arith.mulf %115, %142 : vector<32x1xf32>
    %144 = vector.broadcast %143 : vector<32x1xf32> to vector<32x32xf32>
    %145 = arith.mulf %135, %144 : vector<32x32xf32>
    %146 = vector.broadcast %116 : vector<32x1xf32> to vector<32x32xf32>
    %147 = arith.addf %145, %146 : vector<32x32xf32>
    %cst_40 = arith.constant 0.00999999977 : f32
    %148 = vector.broadcast %cst_40 : f32 to vector<32x32xf32>
    %149 = arith.mulf %148, %147 : vector<32x32xf32>
    %150 = arith.maximumf %147, %149 : vector<32x32xf32>
    %151 = arith.addf %111, %150 : vector<32x32xf32>
    %cst_41 = arith.constant dense<0.000000e+00> : vector<32x2xf32>
    %152 = tpu.matmul %151, %23, %cst_41 {dimension_numbers = #tpu.dot_dimension_numbers<[1], [0], [0], [1], [0, 0, 1, 1], [], []>} : vector<32x32xf32>, vector<32x2xf32>, vector<32x2xf32> -> vector<32x2xf32>
    %cst_42 = arith.constant 6.250000e-02 : f32
    %153 = vector.broadcast %cst_42 : f32 to vector<32x2xf32>
    %154 = arith.mulf %152, %153 : vector<32x2xf32>
    %155 = vector.extract_strided_slice %154 {offsets = [0, 0], sizes = [32, 1], strides = [1, 1]} : vector<32x2xf32> to vector<32x1xf32>
    %c16_i32_43 = arith.constant 16 : i32
    %156 = vector.broadcast %c16_i32_43 : i32 to vector<1x32xi32>
    %157 = arith.cmpi sge, %0, %156 : vector<1x32xi32>
    %158 = vector.extract_strided_slice %154 {offsets = [0, 1], sizes = [32, 1], strides = [1, 1]} : vector<32x2xf32> to vector<32x1xf32>
    %159 = vector.shape_cast %157 : vector<1x32xi1> to vector<1x32xi1>
    %160 = vector.broadcast %159 : vector<1x32xi1> to vector<32x32xi1>
    %161 = vector.shape_cast %158 : vector<32x1xf32> to vector<32x1xf32>
    %162 = vector.broadcast %161 : vector<32x1xf32> to vector<32x32xf32>
    %163 = vector.shape_cast %155 : vector<32x1xf32> to vector<32x1xf32>
    %164 = vector.broadcast %163 : vector<32x1xf32> to vector<32x32xf32>
    %165 = arith.select %160, %162, %164 : vector<32x32xi1>, vector<32x32xf32>
    %166 = arith.subf %151, %165 : vector<32x32xf32>
    %167 = arith.mulf %166, %166 : vector<32x32xf32>
    %cst_44 = arith.constant dense<0.000000e+00> : vector<32x2xf32>
    %168 = tpu.matmul %167, %23, %cst_44 {dimension_numbers = #tpu.dot_dimension_numbers<[1], [0], [0], [1], [0, 0, 1, 1], [], []>} : vector<32x32xf32>, vector<32x2xf32>, vector<32x2xf32> -> vector<32x2xf32>
    %cst_45 = arith.constant 0.0666666701 : f32
    %169 = vector.broadcast %cst_45 : f32 to vector<32x2xf32>
    %170 = arith.mulf %168, %169 : vector<32x2xf32>
    %c0_46 = arith.constant 0 : index
    %c0_47 = arith.constant 0 : index
    %c0_48 = arith.constant 0 : index
    %c0_49 = arith.constant 0 : index
    %171 = vector.load %arg1[%c0_46, %c0_47, %c0_48, %c0_49] : memref<2x2x32x2xf32, #tpu.memory_space<vmem>>, vector<1x1x32x2xf32>
    %172 = vector.shape_cast %171 : vector<1x1x32x2xf32> to vector<32x2xf32>
    %c0_50 = arith.constant 0 : index
    %c1_51 = arith.constant 1 : index
    %c0_52 = arith.constant 0 : index
    %c0_53 = arith.constant 0 : index
    %173 = vector.load %arg1[%c0_50, %c1_51, %c0_52, %c0_53] : memref<2x2x32x2xf32, #tpu.memory_space<vmem>>, vector<1x1x32x2xf32>
    %174 = vector.shape_cast %173 : vector<1x1x32x2xf32> to vector<32x2xf32>
    %cst_54 = arith.constant 9.99999974E-6 : f32
    %175 = vector.broadcast %cst_54 : f32 to vector<32x2xf32>
    %176 = arith.addf %170, %175 : vector<32x2xf32>
    %177 = math.rsqrt %176 : vector<32x2xf32>
    %178 = arith.mulf %174, %177 : vector<32x2xf32>
    %179 = vector.extract_strided_slice %178 {offsets = [0, 0], sizes = [32, 1], strides = [1, 1]} : vector<32x2xf32> to vector<32x1xf32>
    %c16_i32_55 = arith.constant 16 : i32
    %180 = vector.broadcast %c16_i32_55 : i32 to vector<1x32xi32>
    %181 = arith.cmpi sge, %0, %180 : vector<1x32xi32>
    %182 = vector.extract_strided_slice %178 {offsets = [0, 1], sizes = [32, 1], strides = [1, 1]} : vector<32x2xf32> to vector<32x1xf32>
    %183 = vector.shape_cast %181 : vector<1x32xi1> to vector<1x32xi1>
    %184 = vector.broadcast %183 : vector<1x32xi1> to vector<32x32xi1>
    %185 = vector.shape_cast %182 : vector<32x1xf32> to vector<32x1xf32>
    %186 = vector.broadcast %185 : vector<32x1xf32> to vector<32x32xf32>
    %187 = vector.shape_cast %179 : vector<32x1xf32> to vector<32x1xf32>
    %188 = vector.broadcast %187 : vector<32x1xf32> to vector<32x32xf32>
    %189 = arith.select %184, %186, %188 : vector<32x32xi1>, vector<32x32xf32>
    %190 = arith.mulf %166, %189 : vector<32x32xf32>
    %191 = vector.extract_strided_slice %172 {offsets = [0, 0], sizes = [32, 1], strides = [1, 1]} : vector<32x2xf32> to vector<32x1xf32>
    %c16_i32_56 = arith.constant 16 : i32
    %192 = vector.broadcast %c16_i32_56 : i32 to vector<1x32xi32>
    %193 = arith.cmpi sge, %0, %192 : vector<1x32xi32>
    %194 = vector.extract_strided_slice %172 {offsets = [0, 1], sizes = [32, 1], strides = [1, 1]} : vector<32x2xf32> to vector<32x1xf32>
    %195 = vector.shape_cast %193 : vector<1x32xi1> to vector<1x32xi1>
    %196 = vector.broadcast %195 : vector<1x32xi1> to vector<32x32xi1>
    %197 = vector.shape_cast %194 : vector<32x1xf32> to vector<32x1xf32>
    %198 = vector.broadcast %197 : vector<32x1xf32> to vector<32x32xf32>
    %199 = vector.shape_cast %191 : vector<32x1xf32> to vector<32x1xf32>
    %200 = vector.broadcast %199 : vector<32x1xf32> to vector<32x32xf32>
    %201 = arith.select %196, %198, %200 : vector<32x32xi1>, vector<32x32xf32>
    %202 = arith.addf %190, %201 : vector<32x32xf32>
    %c64 = arith.constant 64 : index
    %c0_57 = arith.constant 0 : index
    %203 = vector.load %arg2[%c64, %c0_57] : memref<488x128xf32, #tpu.memory_space<vmem>>, vector<32x128xf32>
    %204 = vector.extract_strided_slice %203 {offsets = [0, 0], sizes = [32, 96], strides = [1, 1]} : vector<32x128xf32> to vector<32x96xf32>
    %205 = vector.extract_strided_slice %203 {offsets = [0, 96], sizes = [32, 1], strides = [1, 1]} : vector<32x128xf32> to vector<32x1xf32>
    %206 = vector.extract_strided_slice %203 {offsets = [0, 97], sizes = [32, 1], strides = [1, 1]} : vector<32x128xf32> to vector<32x1xf32>
    %207 = vector.extract_strided_slice %203 {offsets = [0, 98], sizes = [32, 1], strides = [1, 1]} : vector<32x128xf32> to vector<32x1xf32>
    %c1_i32_58 = arith.constant 1 : i32
    %208 = tpu.dynamic_rotate %202 by %c1_i32_58 dim 1 : vector<32x32xf32>, i32 -> vector<32x32xf32>
    %cst_59 = arith.constant 0.000000e+00 : f32
    %209 = vector.shape_cast %5 : vector<1x32xi1> to vector<1x32xi1>
    %210 = vector.broadcast %209 : vector<1x32xi1> to vector<32x32xi1>
    %211 = vector.broadcast %cst_59 : f32 to vector<32x32xf32>
    %212 = arith.select %210, %211, %208 : vector<32x32xi1>, vector<32x32xf32>
    %c31_i32_60 = arith.constant 31 : i32
    %213 = tpu.dynamic_rotate %202 by %c31_i32_60 dim 1 : vector<32x32xf32>, i32 -> vector<32x32xf32>
    %cst_61 = arith.constant 0.000000e+00 : f32
    %214 = vector.shape_cast %10 : vector<1x32xi1> to vector<1x32xi1>
    %215 = vector.broadcast %214 : vector<1x32xi1> to vector<32x32xi1>
    %216 = vector.broadcast %cst_61 : f32 to vector<32x32xf32>
    %217 = arith.select %215, %216, %213 : vector<32x32xi1>, vector<32x32xf32>
    %218 = tpu.concatenate %212, %202, %217 in 0 : vector<32x32xf32>, vector<32x32xf32>, vector<32x32xf32> -> vector<96x32xf32>
    %cst_62 = arith.constant dense<0.000000e+00> : vector<32x32xf32>
    %219 = tpu.matmul %204, %218, %cst_62 {dimension_numbers = #tpu.dot_dimension_numbers<[1], [0], [0], [1], [0, 0, 1, 1], [], []>} : vector<32x96xf32>, vector<96x32xf32>, vector<32x32xf32> -> vector<32x32xf32>
    %220 = vector.broadcast %205 : vector<32x1xf32> to vector<32x32xf32>
    %221 = arith.addf %219, %220 : vector<32x32xf32>
    %cst_63 = arith.constant dense<0.000000e+00> : vector<32x1xf32>
    %222 = tpu.matmul %221, %24, %cst_63 {dimension_numbers = #tpu.dot_dimension_numbers<[1], [0], [0], [1], [0, 0, 1, 1], [], []>} : vector<32x32xf32>, vector<32x1xf32>, vector<32x1xf32> -> vector<32x1xf32>
    %cst_64 = arith.constant 3.125000e-02 : f32
    %223 = vector.broadcast %cst_64 : f32 to vector<32x1xf32>
    %224 = arith.mulf %222, %223 : vector<32x1xf32>
    %225 = vector.broadcast %224 : vector<32x1xf32> to vector<32x32xf32>
    %226 = arith.subf %221, %225 : vector<32x32xf32>
    %227 = arith.mulf %226, %226 : vector<32x32xf32>
    %cst_65 = arith.constant dense<0.000000e+00> : vector<32x1xf32>
    %228 = tpu.matmul %227, %24, %cst_65 {dimension_numbers = #tpu.dot_dimension_numbers<[1], [0], [0], [1], [0, 0, 1, 1], [], []>} : vector<32x32xf32>, vector<32x1xf32>, vector<32x1xf32> -> vector<32x1xf32>
    %cst_66 = arith.constant 3.125000e-02 : f32
    %229 = vector.broadcast %cst_66 : f32 to vector<32x1xf32>
    %230 = arith.mulf %228, %229 : vector<32x1xf32>
    %cst_67 = arith.constant 9.99999974E-6 : f32
    %231 = vector.broadcast %cst_67 : f32 to vector<32x1xf32>
    %232 = arith.addf %230, %231 : vector<32x1xf32>
    %233 = math.rsqrt %232 : vector<32x1xf32>
    %234 = arith.mulf %206, %233 : vector<32x1xf32>
    %235 = vector.broadcast %234 : vector<32x1xf32> to vector<32x32xf32>
    %236 = arith.mulf %226, %235 : vector<32x32xf32>
    %237 = vector.broadcast %207 : vector<32x1xf32> to vector<32x32xf32>
    %238 = arith.addf %236, %237 : vector<32x32xf32>
    %cst_68 = arith.constant 0.00999999977 : f32
    %239 = vector.broadcast %cst_68 : f32 to vector<32x32xf32>
    %240 = arith.mulf %239, %238 : vector<32x32xf32>
    %241 = arith.maximumf %238, %240 : vector<32x32xf32>
    %242 = arith.addf %202, %241 : vector<32x32xf32>
    %cst_69 = arith.constant dense<0.000000e+00> : vector<32x2xf32>
    %243 = tpu.matmul %242, %23, %cst_69 {dimension_numbers = #tpu.dot_dimension_numbers<[1], [0], [0], [1], [0, 0, 1, 1], [], []>} : vector<32x32xf32>, vector<32x2xf32>, vector<32x2xf32> -> vector<32x2xf32>
    %cst_70 = arith.constant 6.250000e-02 : f32
    %244 = vector.broadcast %cst_70 : f32 to vector<32x2xf32>
    %245 = arith.mulf %243, %244 : vector<32x2xf32>
    %246 = vector.extract_strided_slice %245 {offsets = [0, 0], sizes = [32, 1], strides = [1, 1]} : vector<32x2xf32> to vector<32x1xf32>
    %c16_i32_71 = arith.constant 16 : i32
    %247 = vector.broadcast %c16_i32_71 : i32 to vector<1x32xi32>
    %248 = arith.cmpi sge, %0, %247 : vector<1x32xi32>
    %249 = vector.extract_strided_slice %245 {offsets = [0, 1], sizes = [32, 1], strides = [1, 1]} : vector<32x2xf32> to vector<32x1xf32>
    %250 = vector.shape_cast %248 : vector<1x32xi1> to vector<1x32xi1>
    %251 = vector.broadcast %250 : vector<1x32xi1> to vector<32x32xi1>
    %252 = vector.shape_cast %249 : vector<32x1xf32> to vector<32x1xf32>
    %253 = vector.broadcast %252 : vector<32x1xf32> to vector<32x32xf32>
    %254 = vector.shape_cast %246 : vector<32x1xf32> to vector<32x1xf32>
    %255 = vector.broadcast %254 : vector<32x1xf32> to vector<32x32xf32>
    %256 = arith.select %251, %253, %255 : vector<32x32xi1>, vector<32x32xf32>
    %257 = arith.subf %242, %256 : vector<32x32xf32>
    %258 = arith.mulf %257, %257 : vector<32x32xf32>
    %cst_72 = arith.constant dense<0.000000e+00> : vector<32x2xf32>
    %259 = tpu.matmul %258, %23, %cst_72 {dimension_numbers = #tpu.dot_dimension_numbers<[1], [0], [0], [1], [0, 0, 1, 1], [], []>} : vector<32x32xf32>, vector<32x2xf32>, vector<32x2xf32> -> vector<32x2xf32>
    %cst_73 = arith.constant 0.0666666701 : f32
    %260 = vector.broadcast %cst_73 : f32 to vector<32x2xf32>
    %261 = arith.mulf %259, %260 : vector<32x2xf32>
    %c1_74 = arith.constant 1 : index
    %c0_75 = arith.constant 0 : index
    %c0_76 = arith.constant 0 : index
    %c0_77 = arith.constant 0 : index
    %262 = vector.load %arg1[%c1_74, %c0_75, %c0_76, %c0_77] : memref<2x2x32x2xf32, #tpu.memory_space<vmem>>, vector<1x1x32x2xf32>
    %263 = vector.shape_cast %262 : vector<1x1x32x2xf32> to vector<32x2xf32>
    %c1_78 = arith.constant 1 : index
    %c1_79 = arith.constant 1 : index
    %c0_80 = arith.constant 0 : index
    %c0_81 = arith.constant 0 : index
    %264 = vector.load %arg1[%c1_78, %c1_79, %c0_80, %c0_81] : memref<2x2x32x2xf32, #tpu.memory_space<vmem>>, vector<1x1x32x2xf32>
    %265 = vector.shape_cast %264 : vector<1x1x32x2xf32> to vector<32x2xf32>
    %cst_82 = arith.constant 9.99999974E-6 : f32
    %266 = vector.broadcast %cst_82 : f32 to vector<32x2xf32>
    %267 = arith.addf %261, %266 : vector<32x2xf32>
    %268 = math.rsqrt %267 : vector<32x2xf32>
    %269 = arith.mulf %265, %268 : vector<32x2xf32>
    %270 = vector.extract_strided_slice %269 {offsets = [0, 0], sizes = [32, 1], strides = [1, 1]} : vector<32x2xf32> to vector<32x1xf32>
    %c16_i32_83 = arith.constant 16 : i32
    %271 = vector.broadcast %c16_i32_83 : i32 to vector<1x32xi32>
    %272 = arith.cmpi sge, %0, %271 : vector<1x32xi32>
    %273 = vector.extract_strided_slice %269 {offsets = [0, 1], sizes = [32, 1], strides = [1, 1]} : vector<32x2xf32> to vector<32x1xf32>
    %274 = vector.shape_cast %272 : vector<1x32xi1> to vector<1x32xi1>
    %275 = vector.broadcast %274 : vector<1x32xi1> to vector<32x32xi1>
    %276 = vector.shape_cast %273 : vector<32x1xf32> to vector<32x1xf32>
    %277 = vector.broadcast %276 : vector<32x1xf32> to vector<32x32xf32>
    %278 = vector.shape_cast %270 : vector<32x1xf32> to vector<32x1xf32>
    %279 = vector.broadcast %278 : vector<32x1xf32> to vector<32x32xf32>
    %280 = arith.select %275, %277, %279 : vector<32x32xi1>, vector<32x32xf32>
    %281 = arith.mulf %257, %280 : vector<32x32xf32>
    %282 = vector.extract_strided_slice %263 {offsets = [0, 0], sizes = [32, 1], strides = [1, 1]} : vector<32x2xf32> to vector<32x1xf32>
    %c16_i32_84 = arith.constant 16 : i32
    %283 = vector.broadcast %c16_i32_84 : i32 to vector<1x32xi32>
    %284 = arith.cmpi sge, %0, %283 : vector<1x32xi32>
    %285 = vector.extract_strided_slice %263 {offsets = [0, 1], sizes = [32, 1], strides = [1, 1]} : vector<32x2xf32> to vector<32x1xf32>
    %286 = vector.shape_cast %284 : vector<1x32xi1> to vector<1x32xi1>
    %287 = vector.broadcast %286 : vector<1x32xi1> to vector<32x32xi1>
    %288 = vector.shape_cast %285 : vector<32x1xf32> to vector<32x1xf32>
    %289 = vector.broadcast %288 : vector<32x1xf32> to vector<32x32xf32>
    %290 = vector.shape_cast %282 : vector<32x1xf32> to vector<32x1xf32>
    %291 = vector.broadcast %290 : vector<32x1xf32> to vector<32x32xf32>
    %292 = arith.select %287, %289, %291 : vector<32x32xi1>, vector<32x32xf32>
    %293 = arith.addf %281, %292 : vector<32x32xf32>
    %c96 = arith.constant 96 : index
    %c0_85 = arith.constant 0 : index
    %294 = vector.load %arg2[%c96, %c0_85] : memref<488x128xf32, #tpu.memory_space<vmem>>, vector<96x128xf32>
    %c192 = arith.constant 192 : index
    %c0_86 = arith.constant 0 : index
    %295 = vector.load %arg2[%c192, %c0_86] : memref<488x128xf32, #tpu.memory_space<vmem>>, vector<96x128xf32>
    %c288 = arith.constant 288 : index
    %c0_87 = arith.constant 0 : index
    %296 = vector.load %arg2[%c288, %c0_87] : memref<488x128xf32, #tpu.memory_space<vmem>>, vector<192x128xf32>
    %297 = vector.extract_strided_slice %294 {offsets = [0, 0], sizes = [96, 32], strides = [1, 1]} : vector<96x128xf32> to vector<96x32xf32>
    %298 = vector.extract_strided_slice %294 {offsets = [0, 32], sizes = [96, 1], strides = [1, 1]} : vector<96x128xf32> to vector<96x1xf32>
    %299 = vector.extract_strided_slice %295 {offsets = [0, 0], sizes = [96, 32], strides = [1, 1]} : vector<96x128xf32> to vector<96x32xf32>
    %300 = vector.extract_strided_slice %295 {offsets = [0, 32], sizes = [96, 1], strides = [1, 1]} : vector<96x128xf32> to vector<96x1xf32>
    %301 = vector.extract_strided_slice %296 {offsets = [0, 0], sizes = [192, 64], strides = [1, 1]} : vector<192x128xf32> to vector<192x64xf32>
    %302 = vector.extract_strided_slice %296 {offsets = [0, 64], sizes = [192, 1], strides = [1, 1]} : vector<192x128xf32> to vector<192x1xf32>
    %cst_88 = arith.constant dense<0.000000e+00> : vector<96x32xf32>
    %303 = tpu.matmul %297, %293, %cst_88 {dimension_numbers = #tpu.dot_dimension_numbers<[1], [0], [0], [1], [0, 0, 1, 1], [], []>} : vector<96x32xf32>, vector<32x32xf32>, vector<96x32xf32> -> vector<96x32xf32>
    %304 = vector.broadcast %298 : vector<96x1xf32> to vector<96x32xf32>
    %305 = arith.addf %303, %304 : vector<96x32xf32>
    %306 = vector.extract_strided_slice %305 {offsets = [0, 0], sizes = [96, 16], strides = [1, 1]} : vector<96x32xf32> to vector<96x16xf32>
    %307 = vector.extract_strided_slice %302 {offsets = [0, 0], sizes = [96, 1], strides = [1, 1]} : vector<192x1xf32> to vector<96x1xf32>
    %308 = vector.extract_strided_slice %306 {offsets = [0, 0], sizes = [32, 16], strides = [1, 1]} : vector<96x16xf32> to vector<32x16xf32>
    %309 = vector.extract_strided_slice %307 {offsets = [0, 0], sizes = [32, 1], strides = [1, 1]} : vector<96x1xf32> to vector<32x1xf32>
    %310 = vector.broadcast %309 : vector<32x1xf32> to vector<32x16xf32>
    %311 = arith.addf %308, %310 : vector<32x16xf32>
    %312 = arith.negf %311 : vector<32x16xf32>
    %313 = math.exp %312 : vector<32x16xf32>
    %cst_89 = arith.constant 1.000000e+00 : f32
    %314 = vector.broadcast %cst_89 : f32 to vector<32x16xf32>
    %315 = arith.addf %314, %313 : vector<32x16xf32>
    %316 = arith.divf %314, %315 : vector<32x16xf32>
    %317 = vector.extract_strided_slice %306 {offsets = [32, 0], sizes = [32, 16], strides = [1, 1]} : vector<96x16xf32> to vector<32x16xf32>
    %318 = vector.extract_strided_slice %307 {offsets = [32, 0], sizes = [32, 1], strides = [1, 1]} : vector<96x1xf32> to vector<32x1xf32>
    %319 = vector.broadcast %318 : vector<32x1xf32> to vector<32x16xf32>
    %320 = arith.addf %317, %319 : vector<32x16xf32>
    %321 = arith.negf %320 : vector<32x16xf32>
    %322 = math.exp %321 : vector<32x16xf32>
    %cst_90 = arith.constant 1.000000e+00 : f32
    %323 = vector.broadcast %cst_90 : f32 to vector<32x16xf32>
    %324 = arith.addf %323, %322 : vector<32x16xf32>
    %325 = arith.divf %323, %324 : vector<32x16xf32>
    %326 = vector.extract_strided_slice %306 {offsets = [64, 0], sizes = [32, 16], strides = [1, 1]} : vector<96x16xf32> to vector<32x16xf32>
    %327 = vector.extract_strided_slice %307 {offsets = [64, 0], sizes = [32, 1], strides = [1, 1]} : vector<96x1xf32> to vector<32x1xf32>
    %328 = vector.broadcast %327 : vector<32x1xf32> to vector<32x16xf32>
    %329 = arith.mulf %316, %328 : vector<32x16xf32>
    %330 = arith.addf %326, %329 : vector<32x16xf32>
    %331 = math.tanh %330 : vector<32x16xf32>
    %cst_91 = arith.constant 1.000000e+00 : f32
    %332 = vector.broadcast %cst_91 : f32 to vector<32x16xf32>
    %333 = arith.subf %332, %325 : vector<32x16xf32>
    %334 = arith.mulf %333, %331 : vector<32x16xf32>
    %cst_92 = arith.constant dense<0.000000e+00> : vector<96x16xf32>
    %335 = tpu.matmul %299, %334, %cst_92 {dimension_numbers = #tpu.dot_dimension_numbers<[1], [0], [0], [1], [0, 0, 1, 1], [], []>} : vector<96x32xf32>, vector<32x16xf32>, vector<96x16xf32> -> vector<96x16xf32>
    %336 = vector.broadcast %300 : vector<96x1xf32> to vector<96x16xf32>
    %337 = arith.addf %335, %336 : vector<96x16xf32>
    %338 = vector.extract_strided_slice %302 {offsets = [96, 0], sizes = [96, 1], strides = [1, 1]} : vector<192x1xf32> to vector<96x1xf32>
    %339 = vector.extract_strided_slice %337 {offsets = [0, 0], sizes = [32, 16], strides = [1, 1]} : vector<96x16xf32> to vector<32x16xf32>
    %340 = vector.extract_strided_slice %338 {offsets = [0, 0], sizes = [32, 1], strides = [1, 1]} : vector<96x1xf32> to vector<32x1xf32>
    %341 = vector.broadcast %340 : vector<32x1xf32> to vector<32x16xf32>
    %342 = arith.addf %339, %341 : vector<32x16xf32>
    %343 = arith.negf %342 : vector<32x16xf32>
    %344 = math.exp %343 : vector<32x16xf32>
    %cst_93 = arith.constant 1.000000e+00 : f32
    %345 = vector.broadcast %cst_93 : f32 to vector<32x16xf32>
    %346 = arith.addf %345, %344 : vector<32x16xf32>
    %347 = arith.divf %345, %346 : vector<32x16xf32>
    %348 = vector.extract_strided_slice %337 {offsets = [32, 0], sizes = [32, 16], strides = [1, 1]} : vector<96x16xf32> to vector<32x16xf32>
    %349 = vector.extract_strided_slice %338 {offsets = [32, 0], sizes = [32, 1], strides = [1, 1]} : vector<96x1xf32> to vector<32x1xf32>
    %350 = vector.broadcast %349 : vector<32x1xf32> to vector<32x16xf32>
    %351 = arith.addf %348, %350 : vector<32x16xf32>
    %352 = arith.negf %351 : vector<32x16xf32>
    %353 = math.exp %352 : vector<32x16xf32>
    %cst_94 = arith.constant 1.000000e+00 : f32
    %354 = vector.broadcast %cst_94 : f32 to vector<32x16xf32>
    %355 = arith.addf %354, %353 : vector<32x16xf32>
    %356 = arith.divf %354, %355 : vector<32x16xf32>
    %357 = vector.extract_strided_slice %337 {offsets = [64, 0], sizes = [32, 16], strides = [1, 1]} : vector<96x16xf32> to vector<32x16xf32>
    %358 = vector.extract_strided_slice %338 {offsets = [64, 0], sizes = [32, 1], strides = [1, 1]} : vector<96x1xf32> to vector<32x1xf32>
    %359 = vector.broadcast %358 : vector<32x1xf32> to vector<32x16xf32>
    %360 = arith.mulf %347, %359 : vector<32x16xf32>
    %361 = arith.addf %357, %360 : vector<32x16xf32>
    %362 = math.tanh %361 : vector<32x16xf32>
    %cst_95 = arith.constant 1.000000e+00 : f32
    %363 = vector.broadcast %cst_95 : f32 to vector<32x16xf32>
    %364 = arith.subf %363, %356 : vector<32x16xf32>
    %365 = arith.mulf %364, %362 : vector<32x16xf32>
    %366 = tpu.concatenate %334, %365 in 0 : vector<32x16xf32>, vector<32x16xf32> -> vector<64x16xf32>
    %cst_96 = arith.constant dense<0.000000e+00> : vector<192x16xf32>
    %367 = tpu.matmul %301, %366, %cst_96 {dimension_numbers = #tpu.dot_dimension_numbers<[1], [0], [0], [1], [0, 0, 1, 1], [], []>} : vector<192x64xf32>, vector<64x16xf32>, vector<192x16xf32> -> vector<192x16xf32>
    %368 = vector.broadcast %302 : vector<192x1xf32> to vector<192x16xf32>
    %369 = arith.addf %367, %368 : vector<192x16xf32>
    %370 = vector.extract_strided_slice %305 {offsets = [0, 16], sizes = [96, 16], strides = [1, 1]} : vector<96x32xf32> to vector<96x16xf32>
    %371 = vector.extract_strided_slice %369 {offsets = [0, 0], sizes = [96, 16], strides = [1, 1]} : vector<192x16xf32> to vector<96x16xf32>
    %372 = vector.extract_strided_slice %370 {offsets = [0, 0], sizes = [32, 16], strides = [1, 1]} : vector<96x16xf32> to vector<32x16xf32>
    %373 = vector.extract_strided_slice %371 {offsets = [0, 0], sizes = [32, 16], strides = [1, 1]} : vector<96x16xf32> to vector<32x16xf32>
    %374 = arith.addf %372, %373 : vector<32x16xf32>
    %375 = arith.negf %374 : vector<32x16xf32>
    %376 = math.exp %375 : vector<32x16xf32>
    %cst_97 = arith.constant 1.000000e+00 : f32
    %377 = vector.broadcast %cst_97 : f32 to vector<32x16xf32>
    %378 = arith.addf %377, %376 : vector<32x16xf32>
    %379 = arith.divf %377, %378 : vector<32x16xf32>
    %380 = vector.extract_strided_slice %370 {offsets = [32, 0], sizes = [32, 16], strides = [1, 1]} : vector<96x16xf32> to vector<32x16xf32>
    %381 = vector.extract_strided_slice %371 {offsets = [32, 0], sizes = [32, 16], strides = [1, 1]} : vector<96x16xf32> to vector<32x16xf32>
    %382 = arith.addf %380, %381 : vector<32x16xf32>
    %383 = arith.negf %382 : vector<32x16xf32>
    %384 = math.exp %383 : vector<32x16xf32>
    %cst_98 = arith.constant 1.000000e+00 : f32
    %385 = vector.broadcast %cst_98 : f32 to vector<32x16xf32>
    %386 = arith.addf %385, %384 : vector<32x16xf32>
    %387 = arith.divf %385, %386 : vector<32x16xf32>
    %388 = vector.extract_strided_slice %370 {offsets = [64, 0], sizes = [32, 16], strides = [1, 1]} : vector<96x16xf32> to vector<32x16xf32>
    %389 = vector.extract_strided_slice %371 {offsets = [64, 0], sizes = [32, 16], strides = [1, 1]} : vector<96x16xf32> to vector<32x16xf32>
    %390 = arith.mulf %379, %389 : vector<32x16xf32>
    %391 = arith.addf %388, %390 : vector<32x16xf32>
    %392 = math.tanh %391 : vector<32x16xf32>
    %cst_99 = arith.constant 1.000000e+00 : f32
    %393 = vector.broadcast %cst_99 : f32 to vector<32x16xf32>
    %394 = arith.subf %393, %387 : vector<32x16xf32>
    %395 = arith.mulf %394, %392 : vector<32x16xf32>
    %396 = arith.mulf %387, %334 : vector<32x16xf32>
    %397 = arith.addf %395, %396 : vector<32x16xf32>
    %cst_100 = arith.constant dense<0.000000e+00> : vector<96x16xf32>
    %398 = tpu.matmul %299, %397, %cst_100 {dimension_numbers = #tpu.dot_dimension_numbers<[1], [0], [0], [1], [0, 0, 1, 1], [], []>} : vector<96x32xf32>, vector<32x16xf32>, vector<96x16xf32> -> vector<96x16xf32>
    %399 = vector.broadcast %300 : vector<96x1xf32> to vector<96x16xf32>
    %400 = arith.addf %398, %399 : vector<96x16xf32>
    %401 = vector.extract_strided_slice %369 {offsets = [96, 0], sizes = [96, 16], strides = [1, 1]} : vector<192x16xf32> to vector<96x16xf32>
    %402 = vector.extract_strided_slice %400 {offsets = [0, 0], sizes = [32, 16], strides = [1, 1]} : vector<96x16xf32> to vector<32x16xf32>
    %403 = vector.extract_strided_slice %401 {offsets = [0, 0], sizes = [32, 16], strides = [1, 1]} : vector<96x16xf32> to vector<32x16xf32>
    %404 = arith.addf %402, %403 : vector<32x16xf32>
    %405 = arith.negf %404 : vector<32x16xf32>
    %406 = math.exp %405 : vector<32x16xf32>
    %cst_101 = arith.constant 1.000000e+00 : f32
    %407 = vector.broadcast %cst_101 : f32 to vector<32x16xf32>
    %408 = arith.addf %407, %406 : vector<32x16xf32>
    %409 = arith.divf %407, %408 : vector<32x16xf32>
    %410 = vector.extract_strided_slice %400 {offsets = [32, 0], sizes = [32, 16], strides = [1, 1]} : vector<96x16xf32> to vector<32x16xf32>
    %411 = vector.extract_strided_slice %401 {offsets = [32, 0], sizes = [32, 16], strides = [1, 1]} : vector<96x16xf32> to vector<32x16xf32>
    %412 = arith.addf %410, %411 : vector<32x16xf32>
    %413 = arith.negf %412 : vector<32x16xf32>
    %414 = math.exp %413 : vector<32x16xf32>
    %cst_102 = arith.constant 1.000000e+00 : f32
    %415 = vector.broadcast %cst_102 : f32 to vector<32x16xf32>
    %416 = arith.addf %415, %414 : vector<32x16xf32>
    %417 = arith.divf %415, %416 : vector<32x16xf32>
    %418 = vector.extract_strided_slice %400 {offsets = [64, 0], sizes = [32, 16], strides = [1, 1]} : vector<96x16xf32> to vector<32x16xf32>
    %419 = vector.extract_strided_slice %401 {offsets = [64, 0], sizes = [32, 16], strides = [1, 1]} : vector<96x16xf32> to vector<32x16xf32>
    %420 = arith.mulf %409, %419 : vector<32x16xf32>
    %421 = arith.addf %418, %420 : vector<32x16xf32>
    %422 = math.tanh %421 : vector<32x16xf32>
    %cst_103 = arith.constant 1.000000e+00 : f32
    %423 = vector.broadcast %cst_103 : f32 to vector<32x16xf32>
    %424 = arith.subf %423, %417 : vector<32x16xf32>
    %425 = arith.mulf %424, %422 : vector<32x16xf32>
    %426 = arith.mulf %417, %365 : vector<32x16xf32>
    %427 = arith.addf %425, %426 : vector<32x16xf32>
    %c480 = arith.constant 480 : index
    %c0_104 = arith.constant 0 : index
    %428 = vector.load %arg2[%c480, %c0_104] : memref<488x128xf32, #tpu.memory_space<vmem>>, vector<8x128xf32>
    %429 = tpu.concatenate %365, %427 in 0 : vector<32x16xf32>, vector<32x16xf32> -> vector<64x16xf32>
    %430 = vector.extract_strided_slice %428 {offsets = [0, 0], sizes = [8, 64], strides = [1, 1]} : vector<8x128xf32> to vector<8x64xf32>
    %cst_105 = arith.constant dense<0.000000e+00> : vector<8x16xf32>
    %431 = tpu.matmul %430, %429, %cst_105 {dimension_numbers = #tpu.dot_dimension_numbers<[1], [0], [0], [1], [0, 0, 1, 1], [], []>} : vector<8x64xf32>, vector<64x16xf32>, vector<8x16xf32> -> vector<8x16xf32>
    %432 = vector.extract_strided_slice %428 {offsets = [0, 64], sizes = [8, 1], strides = [1, 1]} : vector<8x128xf32> to vector<8x1xf32>
    %433 = vector.broadcast %432 : vector<8x1xf32> to vector<8x16xf32>
    %434 = arith.addf %431, %433 : vector<8x16xf32>
    %c0_106 = arith.constant 0 : index
    %c0_107 = arith.constant 0 : index
    %435 = vector.load %arg3[%c0_106, %c0_107] : memref<8x16xf32, #tpu.memory_space<vmem>>, vector<8x16xf32>
    tpu.vector_store %arg3[%c0_106, %c0_107], %434 {strides = array<i32>} : memref<8x16xf32, #tpu.memory_space<vmem>>, vector<8x16xf32>,
    return
  }
}

</mosaic_0001>

<llo_original>
// kernel: decoder_forward.1
$region0: #{decoder_forward.1}
  #allocation0 [shape = 'u32[]', space=smem, size = 0x4, offset = 0x4, fixed_abs, tag = 'smem constant byte address 0x4 - core index']
  #allocation1 [shape = 'u32[144,128]{1,0:T(1,128)}', space=vmem, size = 0x12000, scoped, tag = 'internal scratch']
  %s0 = inlined_call_operand.vmem [shape: f32[2,4,32], index: 0, kind: input, shape index: {}]
  %s1 = inlined_call_operand.vmem [shape: f32[2,2,32,2], index: 1, kind: input, shape index: {}]
  %s2 = inlined_call_operand.vmem [shape: f32[488,128], index: 2, kind: input, shape index: {}]
  %s3 = inlined_call_operand.hbm [shape: f32[8,16], index: 3, kind: output, shape index: {}]
  %s4 = sld [smem:[#allocation0]]
  $region22: #{decoder_forward.1} parent=0
    _
  %s6 = ssub.s32 1, %s4
  %s7 = scalar_select 0, %s6, %s4
  $region1: #{decoder_forward.1} parent=0
    #allocation2 [shape = 'u8[4096]{0}', space=vmem, size = 0x1000, scoped, tag = 'output window, operand 0, single buffered']
    #allocation3 [shape = 's32[1]{0}', space=sflag, size = 0x4, scoped, tag = 'scoped memory for decoder_forward.1']
    %8 = vsyncpa [#allocation3], 0
    // Predicated region
    $region2: #{decoder_forward.1} parent=1 // pred_check
      _
    $region3: #{decoder_forward.1} parent=1 // pred_check_branch
      %10 = sbr.rel (0) target = $region5
    $region4: #{decoder_forward.1} parent=1 // pred_region
      _
    $region5: #{decoder_forward.1} parent=1 // pred_fallthru
      _
    // Predicated region
    $region6: #{decoder_forward.1} parent=1 // pred_check
      _
    $region7: #{decoder_forward.1} parent=1 // pred_check_branch
      %12 = sbr.rel (0) target = $region9
    $region8: #{decoder_forward.1} parent=1 // pred_region
      _
    $region9: #{decoder_forward.1} parent=1 // pred_fallthru
      _
    // Predicated region
    $region10: #{decoder_forward.1} parent=1 // pred_check
      _
    $region11: #{decoder_forward.1} parent=1 // pred_check_branch
      %14 = sbr.rel (0) target = $region13
    $region12: #{decoder_forward.1} parent=1 // pred_region
      _
    $region13: #{decoder_forward.1} parent=1 // pred_fallthru
      _
    %v15 = vlaneseq
    %v16 = vand.u32 %v15, 127
    %vm17 = vcmp.eq.s32.totalorder %v16, 0
    %vm18 = vcmp.eq.s32.totalorder %v16, 16
    %vm19 = vmor %vm17, %vm18
    %vm20 = vcmp.eq.s32.totalorder %v16, 15
    %vm21 = vcmp.eq.s32.totalorder %v16, 31
    %vm22 = vmor %vm20, %vm21
    %v23 = vlaneseq
    %v24 = vshrl.u32 %v23, 7
    %v25 = vadd.s32 %v24, 8
    %v26 = vadd.s32 %v24, 16
    %v27 = vadd.s32 %v24, 24
    %v28 = vmul.u32 %v16, 16
    %vm29 = vcmp.ge.s32.totalorder %v24, %v28
    %vm30 = vcmp.ge.s32.totalorder %v25, %v28
    %vm31 = vcmp.ge.s32.totalorder %v26, %v28
    %vm32 = vcmp.ge.s32.totalorder %v27, %v28
    %v33 = vadd.s32 %v16, 1
    %v34 = vmul.u32 %v33, 16
    %vm35 = vcmp.lt.s32.totalorder %v24, %v34
    %vm36 = vcmp.lt.s32.totalorder %v25, %v34
    %vm37 = vcmp.lt.s32.totalorder %v26, %v34
    %vm38 = vcmp.lt.s32.totalorder %v27, %v34
    %vm39 = vmand %vm29, %vm35
    %vm40 = vmand %vm30, %vm36
    %vm41 = vmand %vm31, %vm37
    %vm42 = vmand %vm32, %vm38
    %v43 = vsel %vm39, 1, 0
    %v44 = vsel %vm40, 1, 0
    %v45 = vsel %vm41, 1, 0
    %v46 = vsel %vm42, 1, 0
    %v47 = vcvt.s32.f32 %v43
    %v48 = vcvt.s32.f32 %v44
    %v49 = vcvt.s32.f32 %v45
    %v50 = vcvt.s32.f32 %v46
    %v51 = vld [vmem:[%s0] sm:$0xf]
    %s52 = scalar_lea.vmem %s0, 4
    %v53 = vld [vmem:[%s52] sm:$0xf]
    %vm54 = vcmask 261120
    %v56 = vsel %vm54, %v51, 0
    %58 = vmatprep.subr.mxu0 0.0
    %59 = vmatpush1.msra.mxu0 %v47
    %60 = vmatprep.subr.mxu0 0.0
    %61 = vmatpush1.msra.mxu0 %v48
    %62 = vmatprep.subr.mxu0 0.0
    %63 = vmatpush1.msra.mxu0 %v49
    %64 = vmatprep.subr.mxu0 0.0
    %65 = vmatpush1.msra.mxu0 %v50
    %66 = vmatprep.subr.mxu0 0.0
    %67 = vmatpush1.msra.mxu0 0.0
    %68 = vmatprep.subr.mxu0 0.0
    %69 = vmatpush1.msra.mxu0 0.0
    %70 = vmatprep.subr.mxu0 0.0
    %71 = vmatpush1.msra.mxu0 0.0
    %72 = vmatprep.subr.mxu0 0.0
    %73 = vmatpush1.msra.mxu0 0.0
    %74 = vmatprep.subr.mxu0 0.0
    %75 = vmatpush1.msra.mxu0 0.0
    %76 = vmatprep.subr.mxu0 0.0
    %77 = vmatpush1.msra.mxu0 0.0
    %78 = vmatprep.subr.mxu0 0.0
    %79 = vmatpush1.msra.mxu0 0.0
    %80 = vmatprep.subr.mxu0 0.0
    %81 = vmatpush1.msra.mxu0 0.0
    %82 = vmatprep.subr.mxu0 0.0
    %83 = vmatpush1.msra.mxu0 0.0
    %84 = vmatprep.subr.mxu0 0.0
    %85 = vmatpush1.msra.mxu0 0.0
    %86 = vmatprep.subr.mxu0 0.0
    %87 = vmatpush1.msra.mxu0 0.0
    %88 = vmatprep.subr.mxu0 0.0
    %89 = vmatpush1.msra.mxu0 0.0
    %90 = vmatprep.subr.mxu0 0.0
    %91 = vmatpush1.msra.mxu0 0.0
    %92 = vmatprep.subr.mxu0 0.0
    %93 = vmatpush1.msra.mxu0 0.0
    %94 = vmatprep.subr.mxu0 0.0
    %95 = vmatpush1.msra.mxu0 0.0
    %96 = vmatprep.subr.mxu0 0.0
    %97 = vmatpush1.msra.mxu0 0.0
    %98 = vmatprep.subr.mxu0 0.0
    %99 = vmatpush1.msra.mxu0 0.0
    %100 = vmatprep.subr.mxu0 0.0
    %101 = vmatpush1.msra.mxu0 0.0
    %102 = vmatprep.subr.mxu0 0.0
    %103 = vmatpush1.msra.mxu0 0.0
    %104 = vmatprep.subr.mxu0 0.0
    %105 = vmatpush1.msra.mxu0 0.0
    %106 = vmatprep.subr.mxu0 0.0
    %107 = vmatpush1.msra.mxu0 0.0
    %108 = vmatprep.subr.mxu0 0.0
    %109 = vmatpush1.msra.mxu0 0.0
    %110 = vmatprep.subr.mxu0 0.0
    %111 = vmatpush1.msra.mxu0 0.0
    %112 = vmatprep.subr.mxu0 0.0
    %113 = vmatpush1.msra.mxu0 0.0
    %114 = vmatprep.subr.mxu0 0.0
    %115 = vmatpush1.msra.mxu0 0.0
    %116 = vmatprep.subr.mxu0 0.0
    %117 = vmatpush1.msra.mxu0 0.0
    %118 = vmatprep.subr.mxu0 0.0
    %119 = vmatpush1.msra.mxu0 0.0
    %120 = vmatprep.subr.mxu0 0.0
    %121 = vmatpush1.msra.mxu0 0.0
    %122 = vmatprep.mubr.f32.mxu0 0.0
    %123 = vmatmul.mubr.f32.gmra.mrb[0].mxu0 %v56
    %v124 = vpop.f32.mrb[0].mxu0
    %v125 = vadd.f32 0.0, %v124
    %v126 = vpop.f32.mrb[0].mxu0
    %127 = vdwg.mxu0
    %v128 = vmul.f32 %v125, 0.0625
    %vm129 = vcmp.ge.s32.totalorder %v16, 16
    %v130 = vsel %vm129, 1, 0
    %vm131 = vcmp.eq.s32.totalorder %v130, 1
    %133 = vset.pattern.permute.xlu0 1
    %134 = vperm.xlu0 %133, %v128
    %v135 = vpop.permute.xlu0 %134
    %137 = vset.pattern.permute.xlu0 0
    %138 = vperm.xlu0 %137, %v128
    %v139 = vpop.permute.xlu0 %138
    %v141 = vsel %vm131, %v135, %v139
    %v142 = vsub.f32 %v51, %v141
    %v143 = vmul.f32 %v142, %v142
    %v145 = vsel %vm54, %v143, 0
    %147 = vmatprep.subr.mxu0 0.0
    %148 = vmatpush1.msra.mxu0 %v47
    %149 = vmatprep.subr.mxu0 0.0
    %150 = vmatpush1.msra.mxu0 %v48
    %151 = vmatprep.subr.mxu0 0.0
    %152 = vmatpush1.msra.mxu0 %v49
    %153 = vmatprep.subr.mxu0 0.0
    %154 = vmatpush1.msra.mxu0 %v50
    %155 = vmatprep.subr.mxu0 0.0
    %156 = vmatpush1.msra.mxu0 0.0
    %157 = vmatprep.subr.mxu0 0.0
    %158 = vmatpush1.msra.mxu0 0.0
    %159 = vmatprep.subr.mxu0 0.0
    %160 = vmatpush1.msra.mxu0 0.0
    %161 = vmatprep.subr.mxu0 0.0
    %162 = vmatpush1.msra.mxu0 0.0
    %163 = vmatprep.subr.mxu0 0.0
    %164 = vmatpush1.msra.mxu0 0.0
    %165 = vmatprep.subr.mxu0 0.0
    %166 = vmatpush1.msra.mxu0 0.0
    %167 = vmatprep.subr.mxu0 0.0
    %168 = vmatpush1.msra.mxu0 0.0
    %169 = vmatprep.subr.mxu0 0.0
    %170 = vmatpush1.msra.mxu0 0.0
    %171 = vmatprep.subr.mxu0 0.0
    %172 = vmatpush1.msra.mxu0 0.0
    %173 = vmatprep.subr.mxu0 0.0
    %174 = vmatpush1.msra.mxu0 0.0
    %175 = vmatprep.subr.mxu0 0.0
    %176 = vmatpush1.msra.mxu0 0.0
    %177 = vmatprep.subr.mxu0 0.0
    %178 = vmatpush1.msra.mxu0 0.0
    %179 = vmatprep.subr.mxu0 0.0
    %180 = vmatpush1.msra.mxu0 0.0
    %181 = vmatprep.subr.mxu0 0.0
    %182 = vmatpush1.msra.mxu0 0.0
    %183 = vmatprep.subr.mxu0 0.0
    %184 = vmatpush1.msra.mxu0 0.0
    %185 = vmatprep.subr.mxu0 0.0
    %186 = vmatpush1.msra.mxu0 0.0
    %187 = vmatprep.subr.mxu0 0.0
    %188 = vmatpush1.msra.mxu0 0.0
    %189 = vmatprep.subr.mxu0 0.0
    %190 = vmatpush1.msra.mxu0 0.0
    %191 = vmatprep.subr.mxu0 0.0
    %192 = vmatpush1.msra.mxu0 0.0
    %193 = vmatprep.subr.mxu0 0.0
    %194 = vmatpush1.msra.mxu0 0.0
    %195 = vmatprep.subr.mxu0 0.0
    %196 = vmatpush1.msra.mxu0 0.0
    %197 = vmatprep.subr.mxu0 0.0
    %198 = vmatpush1.msra.mxu0 0.0
    %199 = vmatprep.subr.mxu0 0.0
    %200 = vmatpush1.msra.mxu0 0.0
    %201 = vmatprep.subr.mxu0 0.0
    %202 = vmatpush1.msra.mxu0 0.0
    %203 = vmatprep.subr.mxu0 0.0
    %204 = vmatpush1.msra.mxu0 0.0
    %205 = vmatprep.subr.mxu0 0.0
    %206 = vmatpush1.msra.mxu0 0.0
    %207 = vmatprep.subr.mxu0 0.0
    %208 = vmatpush1.msra.mxu0 0.0
    %209 = vmatprep.subr.mxu0 0.0
    %210 = vmatpush1.msra.mxu0 0.0
    %211 = vmatprep.mubr.f32.mxu0 0.0
    %212 = vmatmul.mubr.f32.gmra.mrb[0].mxu0 %v145
    %v213 = vpop.f32.mrb[0].mxu0
    %v214 = vadd.f32 0.0, %v213
    %v215 = vpop.f32.mrb[0].mxu0
    %216 = vdwg.mxu0
    %v217 = vmul.f32 %v214, 0.06666667
    %v219 = vsel %vm54, %v53, 0
    %221 = vmatprep.subr.mxu0 0.0
    %222 = vmatpush1.msra.mxu0 %v47
    %223 = vmatprep.subr.mxu0 0.0
    %224 = vmatpush1.msra.mxu0 %v48
    %225 = vmatprep.subr.mxu0 0.0
    %226 = vmatpush1.msra.mxu0 %v49
    %227 = vmatprep.subr.mxu0 0.0
    %228 = vmatpush1.msra.mxu0 %v50
    %229 = vmatprep.subr.mxu0 0.0
    %230 = vmatpush1.msra.mxu0 0.0
    %231 = vmatprep.subr.mxu0 0.0
    %232 = vmatpush1.msra.mxu0 0.0
    %233 = vmatprep.subr.mxu0 0.0
    %234 = vmatpush1.msra.mxu0 0.0
    %235 = vmatprep.subr.mxu0 0.0
    %236 = vmatpush1.msra.mxu0 0.0
    %237 = vmatprep.subr.mxu0 0.0
    %238 = vmatpush1.msra.mxu0 0.0
    %239 = vmatprep.subr.mxu0 0.0
    %240 = vmatpush1.msra.mxu0 0.0
    %241 = vmatprep.subr.mxu0 0.0
    %242 = vmatpush1.msra.mxu0 0.0
    %243 = vmatprep.subr.mxu0 0.0
    %244 = vmatpush1.msra.mxu0 0.0
    %245 = vmatprep.subr.mxu0 0.0
    %246 = vmatpush1.msra.mxu0 0.0
    %247 = vmatprep.subr.mxu0 0.0
    %248 = vmatpush1.msra.mxu0 0.0
    %249 = vmatprep.subr.mxu0 0.0
    %250 = vmatpush1.msra.mxu0 0.0
    %251 = vmatprep.subr.mxu0 0.0
    %252 = vmatpush1.msra.mxu0 0.0
    %253 = vmatprep.subr.mxu0 0.0
    %254 = vmatpush1.msra.mxu0 0.0
    %255 = vmatprep.subr.mxu0 0.0
    %256 = vmatpush1.msra.mxu0 0.0
    %257 = vmatprep.subr.mxu0 0.0
    %258 = vmatpush1.msra.mxu0 0.0
    %259 = vmatprep.subr.mxu0 0.0
    %260 = vmatpush1.msra.mxu0 0.0
    %261 = vmatprep.subr.mxu0 0.0
    %262 = vmatpush1.msra.mxu0 0.0
    %263 = vmatprep.subr.mxu0 0.0
    %264 = vmatpush1.msra.mxu0 0.0
    %265 = vmatprep.subr.mxu0 0.0
    %266 = vmatpush1.msra.mxu0 0.0
    %267 = vmatprep.subr.mxu0 0.0
    %268 = vmatpush1.msra.mxu0 0.0
    %269 = vmatprep.subr.mxu0 0.0
    %270 = vmatpush1.msra.mxu0 0.0
    %271 = vmatprep.subr.mxu0 0.0
    %272 = vmatpush1.msra.mxu0 0.0
    %273 = vmatprep.subr.mxu0 0.0
    %274 = vmatpush1.msra.mxu0 0.0
    %275 = vmatprep.subr.mxu0 0.0
    %276 = vmatpush1.msra.mxu0 0.0
    %277 = vmatprep.subr.mxu0 0.0
    %278 = vmatpush1.msra.mxu0 0.0
    %279 = vmatprep.subr.mxu0 0.0
    %280 = vmatpush1.msra.mxu0 0.0
    %281 = vmatprep.subr.mxu0 0.0
    %282 = vmatpush1.msra.mxu0 0.0
    %283 = vmatprep.subr.mxu0 0.0
    %284 = vmatpush1.msra.mxu0 0.0
    %285 = vmatprep.mubr.f32.mxu0 0.0
    %286 = vmatmul.mubr.f32.gmra.mrb[0].mxu0 %v219
    %v287 = vpop.f32.mrb[0].mxu0
    %v288 = vadd.f32 0.0, %v287
    %v289 = vpop.f32.mrb[0].mxu0
    %290 = vdwg.mxu0
    %v291 = vmul.f32 %v288, 0.0625
    %293 = vset.pattern.permute.xlu0 1
    %294 = vperm.xlu0 %293, %v291
    %v295 = vpop.permute.xlu0 %294
    %297 = vset.pattern.permute.xlu0 0
    %298 = vperm.xlu0 %297, %v291
    %v299 = vpop.permute.xlu0 %298
    %v301 = vsel %vm131, %v295, %v299
    %v302 = vsub.f32 %v53, %v301
    %v303 = vmul.f32 %v302, %v302
    %v305 = vsel %vm54, %v303, 0
    %307 = vmatprep.subr.mxu0 0.0
    %308 = vmatpush1.msra.mxu0 %v47
    %309 = vmatprep.subr.mxu0 0.0
    %310 = vmatpush1.msra.mxu0 %v48
    %311 = vmatprep.subr.mxu0 0.0
    %312 = vmatpush1.msra.mxu0 %v49
    %313 = vmatprep.subr.mxu0 0.0
    %314 = vmatpush1.msra.mxu0 %v50
    %315 = vmatprep.subr.mxu0 0.0
    %316 = vmatpush1.msra.mxu0 0.0
    %317 = vmatprep.subr.mxu0 0.0
    %318 = vmatpush1.msra.mxu0 0.0
    %319 = vmatprep.subr.mxu0 0.0
    %320 = vmatpush1.msra.mxu0 0.0
    %321 = vmatprep.subr.mxu0 0.0
    %322 = vmatpush1.msra.mxu0 0.0
    %323 = vmatprep.subr.mxu0 0.0
    %324 = vmatpush1.msra.mxu0 0.0
    %325 = vmatprep.subr.mxu0 0.0
    %326 = vmatpush1.msra.mxu0 0.0
    %327 = vmatprep.subr.mxu0 0.0
    %328 = vmatpush1.msra.mxu0 0.0
    %329 = vmatprep.subr.mxu0 0.0
    %330 = vmatpush1.msra.mxu0 0.0
    %331 = vmatprep.subr.mxu0 0.0
    %332 = vmatpush1.msra.mxu0 0.0
    %333 = vmatprep.subr.mxu0 0.0
    %334 = vmatpush1.msra.mxu0 0.0
    %335 = vmatprep.subr.mxu0 0.0
    %336 = vmatpush1.msra.mxu0 0.0
    %337 = vmatprep.subr.mxu0 0.0
    %338 = vmatpush1.msra.mxu0 0.0
    %339 = vmatprep.subr.mxu0 0.0
    %340 = vmatpush1.msra.mxu0 0.0
    %341 = vmatprep.subr.mxu0 0.0
    %342 = vmatpush1.msra.mxu0 0.0
    %343 = vmatprep.subr.mxu0 0.0
    %344 = vmatpush1.msra.mxu0 0.0
    %345 = vmatprep.subr.mxu0 0.0
    %346 = vmatpush1.msra.mxu0 0.0
    %347 = vmatprep.subr.mxu0 0.0
    %348 = vmatpush1.msra.mxu0 0.0
    %349 = vmatprep.subr.mxu0 0.0
    %350 = vmatpush1.msra.mxu0 0.0
    %351 = vmatprep.subr.mxu0 0.0
    %352 = vmatpush1.msra.mxu0 0.0
    %353 = vmatprep.subr.mxu0 0.0
    %354 = vmatpush1.msra.mxu0 0.0
    %355 = vmatprep.subr.mxu0 0.0
    %356 = vmatpush1.msra.mxu0 0.0
    %357 = vmatprep.subr.mxu0 0.0
    %358 = vmatpush1.msra.mxu0 0.0
    %359 = vmatprep.subr.mxu0 0.0
    %360 = vmatpush1.msra.mxu0 0.0
    %361 = vmatprep.subr.mxu0 0.0
    %362 = vmatpush1.msra.mxu0 0.0
    %363 = vmatprep.subr.mxu0 0.0
    %364 = vmatpush1.msra.mxu0 0.0
    %365 = vmatprep.subr.mxu0 0.0
    %366 = vmatpush1.msra.mxu0 0.0
    %367 = vmatprep.subr.mxu0 0.0
    %368 = vmatpush1.msra.mxu0 0.0
    %369 = vmatprep.subr.mxu0 0.0
    %370 = vmatpush1.msra.mxu0 0.0
    %371 = vmatprep.mubr.f32.mxu0 0.0
    %372 = vmatmul.mubr.f32.gmra.mrb[0].mxu0 %v305
    %v373 = vpop.f32.mrb[0].mxu0
    %v374 = vadd.f32 0.0, %v373
    %v375 = vpop.f32.mrb[0].mxu0
    %376 = vdwg.mxu0
    %v377 = vmul.f32 %v374, 0.06666667
    %v378 = vadd.f32 %v377, 1e-05
    %v379 = vrsqrt.pop %v378
    %v380 = vmul.f32 %v378, %v379
    %vm381 = vcmp.eq.f32.partialorder %v378, inf
    %v382 = vsel %vm381, %v378, %v380
    %vm383 = vcmp.eq.f32.partialorder %v378, 0.0
    %v384 = vand.u32 %v378, 2147483648
    %v385 = vsel %vm383, %v384, %v382
    %v386 = vadd.f32 %v217, 1e-05
    %v387 = vrsqrt.pop %v386
    %v388 = vmul.f32 %v385, %v387
    %390 = vset.pattern.permute.xlu0 1
    %391 = vperm.xlu0 %390, %v388
    %v392 = vpop.permute.xlu0 %391
    %394 = vset.pattern.permute.xlu0 0
    %395 = vperm.xlu0 %394, %v388
    %v396 = vpop.permute.xlu0 %395
    %v398 = vsel %vm131, %v392, %v396
    %v399 = vmul.f32 %v142, %v398
    %v400 = vadd.f32 %v399, %v301
    %v401 = vld [vmem:[%s2] sm:$0xff]
    %v402 = vld [vmem:[%s2 + $0x8] sm:$0xff]
    %v403 = vld [vmem:[%s2 + $0x10] sm:$0xff]
    %v404 = vld [vmem:[%s2 + $0x18] sm:$0xff]
    %vm405 = vcmask 1047808
    %406 = vrot.lane.b32.xlu0 %v400, 32
    %v407 = vpop.permute.xlu0 %406
    %v408 = vsel %vm405, %v407, %v400
    %409 = vrot.lane.b32.xlu0 %v408, 32
    %v410 = vpop.permute.xlu0 %409
    %v411 = vsel %vm405, %v410, %v400
    %v412 = vsel %vm19, 1, 0
    %vm413 = vcmp.eq.s32.totalorder %v412, 1
    %415 = vrot.lane.b32.xlu0 %v411, 97
    %v416 = vpop.permute.xlu0 %415
    %v418 = vsel %vm413, 0.0, %v416
    %v419 = vsel %vm22, 1, 0
    %vm420 = vcmp.eq.s32.totalorder %v419, 1
    %421 = vrot.lane.b32.xlu0 %v411, 127
    %v422 = vpop.permute.xlu0 %421
    %v424 = vsel %vm420, 0.0, %v422
    %429 = vrot.lane.b32.xlu0 %v401, 124
    %v430 = vpop.permute.xlu0 %429
    %431 = vrot.lane.b32.xlu0 %v402, 124
    %v432 = vpop.permute.xlu0 %431
    %433 = vrot.lane.b32.xlu0 %v403, 124
    %v434 = vpop.permute.xlu0 %433
    %435 = vrot.lane.b32.xlu0 %v404, 124
    %v436 = vpop.permute.xlu0 %435
    %vm437 = vcmask 31744
    %v438 = vsel %vm437, %v430, 0
    %v440 = vsel %vm437, %v432, 0
    %v442 = vsel %vm437, %v434, 0
    %v444 = vsel %vm437, %v436, 0
    %vm446 = vcmask 1043456
    %v448 = vsel %vm446, %v400, 0
    %450 = vmatprep.subr.mxu0 0.0
    %451 = vmatpush1.msra.mxu0 %v448
    %452 = vmatprep.subr.mxu0 0.0
    %453 = vmatpush1.msra.mxu0 0.0
    %454 = vmatprep.subr.mxu0 0.0
    %455 = vmatpush1.msra.mxu0 0.0
    %456 = vmatprep.subr.mxu0 0.0
    %457 = vmatpush1.msra.mxu0 0.0
    %458 = vmatprep.subr.mxu0 0.0
    %459 = vmatpush1.msra.mxu0 0.0
    %460 = vmatprep.subr.mxu0 0.0
    %461 = vmatpush1.msra.mxu0 0.0
    %462 = vmatprep.subr.mxu0 0.0
    %463 = vmatpush1.msra.mxu0 0.0
    %464 = vmatprep.subr.mxu0 0.0
    %465 = vmatpush1.msra.mxu0 0.0
    %466 = vmatprep.subr.mxu0 0.0
    %467 = vmatpush1.msra.mxu0 0.0
    %468 = vmatprep.subr.mxu0 0.0
    %469 = vmatpush1.msra.mxu0 0.0
    %470 = vmatprep.subr.mxu0 0.0
    %471 = vmatpush1.msra.mxu0 0.0
    %472 = vmatprep.subr.mxu0 0.0
    %473 = vmatpush1.msra.mxu0 0.0
    %474 = vmatprep.subr.mxu0 0.0
    %475 = vmatpush1.msra.mxu0 0.0
    %476 = vmatprep.subr.mxu0 0.0
    %477 = vmatpush1.msra.mxu0 0.0
    %478 = vmatprep.subr.mxu0 0.0
    %479 = vmatpush1.msra.mxu0 0.0
    %480 = vmatprep.subr.mxu0 0.0
    %481 = vmatpush1.msra.mxu0 0.0
    %482 = vmatprep.subr.mxu0 0.0
    %483 = vmatpush1.msra.mxu0 0.0
    %484 = vmatprep.subr.mxu0 0.0
    %485 = vmatpush1.msra.mxu0 0.0
    %486 = vmatprep.subr.mxu0 0.0
    %487 = vmatpush1.msra.mxu0 0.0
    %488 = vmatprep.subr.mxu0 0.0
    %489 = vmatpush1.msra.mxu0 0.0
    %490 = vmatprep.subr.mxu0 0.0
    %491 = vmatpush1.msra.mxu0 0.0
    %492 = vmatprep.subr.mxu0 0.0
    %493 = vmatpush1.msra.mxu0 0.0
    %494 = vmatprep.subr.mxu0 0.0
    %495 = vmatpush1.msra.mxu0 0.0
    %496 = vmatprep.subr.mxu0 0.0
    %497 = vmatpush1.msra.mxu0 0.0
    %498 = vmatprep.subr.mxu0 0.0
    %499 = vmatpush1.msra.mxu0 0.0
    %500 = vmatprep.subr.mxu0 0.0
    %501 = vmatpush1.msra.mxu0 0.0
    %502 = vmatprep.subr.mxu0 0.0
    %503 = vmatpush1.msra.mxu0 0.0
    %504 = vmatprep.subr.mxu0 0.0
    %505 = vmatpush1.msra.mxu0 0.0
    %506 = vmatprep.subr.mxu0 0.0
    %507 = vmatpush1.msra.mxu0 0.0
    %508 = vmatprep.subr.mxu0 0.0
    %509 = vmatpush1.msra.mxu0 0.0
    %510 = vmatprep.subr.mxu0 0.0
    %511 = vmatpush1.msra.mxu0 0.0
    %512 = vmatprep.subr.mxu0 0.0
    %513 = vmatpush1.msra.mxu0 0.0
    %514 = vmatprep.mubr.f32.mxu0 0.0
    %515 = vmatmul.mubr.f32.gmra.mrb[0].mxu0 %v438
    %v516 = vpop.f32.mrb[0].mxu0
    %v517 = vadd.f32 0.0, %v516
    %v518 = vpop.f32.mrb[0].mxu0
    %519 = vmatprep.mubr.f32.mxu0 0.0
    %520 = vmatmul.mubr.f32.gmra.mrb[0].mxu0 %v440
    %v521 = vpop.f32.mrb[0].mxu0
    %v522 = vadd.f32 0.0, %v521
    %v523 = vpop.f32.mrb[0].mxu0
    %524 = vmatprep.mubr.f32.mxu0 0.0
    %525 = vmatmul.mubr.f32.gmra.mrb[0].mxu0 %v442
    %v526 = vpop.f32.mrb[0].mxu0
    %v527 = vadd.f32 0.0, %v526
    %v528 = vpop.f32.mrb[0].mxu0
    %529 = vmatprep.mubr.f32.mxu0 0.0
    %530 = vmatmul.mubr.f32.gmra.mrb[0].mxu0 %v444
    %v531 = vpop.f32.mrb[0].mxu0
    %v532 = vadd.f32 0.0, %v531
    %v533 = vpop.f32.mrb[0].mxu0
    %534 = vdwg.mxu0
    %v535 = vsel %vm437, %v401, 0
    %v537 = vsel %vm437, %v402, 0
    %v539 = vsel %vm437, %v403, 0
    %v541 = vsel %vm437, %v404, 0
    %v544 = vsel %vm446, %v418, 0
    %546 = vmatprep.subr.mxu0 0.0
    %547 = vmatpush1.msra.mxu0 %v544
    %548 = vmatprep.subr.mxu0 0.0
    %549 = vmatpush1.msra.mxu0 0.0
    %550 = vmatprep.subr.mxu0 0.0
    %551 = vmatpush1.msra.mxu0 0.0
    %552 = vmatprep.subr.mxu0 0.0
    %553 = vmatpush1.msra.mxu0 0.0
    %554 = vmatprep.subr.mxu0 0.0
    %555 = vmatpush1.msra.mxu0 0.0
    %556 = vmatprep.subr.mxu0 0.0
    %557 = vmatpush1.msra.mxu0 0.0
    %558 = vmatprep.subr.mxu0 0.0
    %559 = vmatpush1.msra.mxu0 0.0
    %560 = vmatprep.subr.mxu0 0.0
    %561 = vmatpush1.msra.mxu0 0.0
    %562 = vmatprep.subr.mxu0 0.0
    %563 = vmatpush1.msra.mxu0 0.0
    %564 = vmatprep.subr.mxu0 0.0
    %565 = vmatpush1.msra.mxu0 0.0
    %566 = vmatprep.subr.mxu0 0.0
    %567 = vmatpush1.msra.mxu0 0.0
    %568 = vmatprep.subr.mxu0 0.0
    %569 = vmatpush1.msra.mxu0 0.0
    %570 = vmatprep.subr.mxu0 0.0
    %571 = vmatpush1.msra.mxu0 0.0
    %572 = vmatprep.subr.mxu0 0.0
    %573 = vmatpush1.msra.mxu0 0.0
    %574 = vmatprep.subr.mxu0 0.0
    %575 = vmatpush1.msra.mxu0 0.0
    %576 = vmatprep.subr.mxu0 0.0
    %577 = vmatpush1.msra.mxu0 0.0
    %578 = vmatprep.subr.mxu0 0.0
    %579 = vmatpush1.msra.mxu0 0.0
    %580 = vmatprep.subr.mxu0 0.0
    %581 = vmatpush1.msra.mxu0 0.0
    %582 = vmatprep.subr.mxu0 0.0
    %583 = vmatpush1.msra.mxu0 0.0
    %584 = vmatprep.subr.mxu0 0.0
    %585 = vmatpush1.msra.mxu0 0.0
    %586 = vmatprep.subr.mxu0 0.0
    %587 = vmatpush1.msra.mxu0 0.0
    %588 = vmatprep.subr.mxu0 0.0
    %589 = vmatpush1.msra.mxu0 0.0
    %590 = vmatprep.subr.mxu0 0.0
    %591 = vmatpush1.msra.mxu0 0.0
    %592 = vmatprep.subr.mxu0 0.0
    %593 = vmatpush1.msra.mxu0 0.0
    %594 = vmatprep.subr.mxu0 0.0
    %595 = vmatpush1.msra.mxu0 0.0
    %596 = vmatprep.subr.mxu0 0.0
    %597 = vmatpush1.msra.mxu0 0.0
    %598 = vmatprep.subr.mxu0 0.0
    %599 = vmatpush1.msra.mxu0 0.0
    %600 = vmatprep.subr.mxu0 0.0
    %601 = vmatpush1.msra.mxu0 0.0
    %602 = vmatprep.subr.mxu0 0.0
    %603 = vmatpush1.msra.mxu0 0.0
    %604 = vmatprep.subr.mxu0 0.0
    %605 = vmatpush1.msra.mxu0 0.0
    %606 = vmatprep.subr.mxu0 0.0
    %607 = vmatpush1.msra.mxu0 0.0
    %608 = vmatprep.subr.mxu0 0.0
    %609 = vmatpush1.msra.mxu0 0.0
    %610 = vmatprep.mubr.f32.mxu0 0.0
    %611 = vmatmul.mubr.f32.gmra.mrb[0].mxu0 %v535
    %v612 = vpop.f32.mrb[0].mxu0
    %v613 = vadd.f32 %v517, %v612
    %v614 = vpop.f32.mrb[0].mxu0
    %615 = vmatprep.mubr.f32.mxu0 0.0
    %616 = vmatmul.mubr.f32.gmra.mrb[0].mxu0 %v537
    %v617 = vpop.f32.mrb[0].mxu0
    %v618 = vadd.f32 %v522, %v617
    %v619 = vpop.f32.mrb[0].mxu0
    %620 = vmatprep.mubr.f32.mxu0 0.0
    %621 = vmatmul.mubr.f32.gmra.mrb[0].mxu0 %v539
    %v622 = vpop.f32.mrb[0].mxu0
    %v623 = vadd.f32 %v527, %v622
    %v624 = vpop.f32.mrb[0].mxu0
    %625 = vmatprep.mubr.f32.mxu0 0.0
    %626 = vmatmul.mubr.f32.gmra.mrb[0].mxu0 %v541
    %v627 = vpop.f32.mrb[0].mxu0
    %v628 = vadd.f32 %v532, %v627
    %v629 = vpop.f32.mrb[0].mxu0
    %630 = vdwg.mxu0
    %631 = vrot.lane.b32.xlu0 %v401, 120
    %v632 = vpop.permute.xlu0 %631
    %633 = vrot.lane.b32.xlu0 %v402, 120
    %v634 = vpop.permute.xlu0 %633
    %635 = vrot.lane.b32.xlu0 %v403, 120
    %v636 = vpop.permute.xlu0 %635
    %637 = vrot.lane.b32.xlu0 %v404, 120
    %v638 = vpop.permute.xlu0 %637
    %v639 = vsel %vm437, %v632, 0
    %v641 = vsel %vm437, %v634, 0
    %v643 = vsel %vm437, %v636, 0
    %v645 = vsel %vm437, %v638, 0
    %v648 = vsel %vm446, %v424, 0
    %650 = vmatprep.subr.mxu0 0.0
    %651 = vmatpush1.msra.mxu0 %v648
    %652 = vmatprep.subr.mxu0 0.0
    %653 = vmatpush1.msra.mxu0 0.0
    %654 = vmatprep.subr.mxu0 0.0
    %655 = vmatpush1.msra.mxu0 0.0
    %656 = vmatprep.subr.mxu0 0.0
    %657 = vmatpush1.msra.mxu0 0.0
    %658 = vmatprep.subr.mxu0 0.0
    %659 = vmatpush1.msra.mxu0 0.0
    %660 = vmatprep.subr.mxu0 0.0
    %661 = vmatpush1.msra.mxu0 0.0
    %662 = vmatprep.subr.mxu0 0.0
    %663 = vmatpush1.msra.mxu0 0.0
    %664 = vmatprep.subr.mxu0 0.0
    %665 = vmatpush1.msra.mxu0 0.0
    %666 = vmatprep.subr.mxu0 0.0
    %667 = vmatpush1.msra.mxu0 0.0
    %668 = vmatprep.subr.mxu0 0.0
    %669 = vmatpush1.msra.mxu0 0.0
    %670 = vmatprep.subr.mxu0 0.0
    %671 = vmatpush1.msra.mxu0 0.0
    %672 = vmatprep.subr.mxu0 0.0
    %673 = vmatpush1.msra.mxu0 0.0
    %674 = vmatprep.subr.mxu0 0.0
    %675 = vmatpush1.msra.mxu0 0.0
    %676 = vmatprep.subr.mxu0 0.0
    %677 = vmatpush1.msra.mxu0 0.0
    %678 = vmatprep.subr.mxu0 0.0
    %679 = vmatpush1.msra.mxu0 0.0
    %680 = vmatprep.subr.mxu0 0.0
    %681 = vmatpush1.msra.mxu0 0.0
    %682 = vmatprep.subr.mxu0 0.0
    %683 = vmatpush1.msra.mxu0 0.0
    %684 = vmatprep.subr.mxu0 0.0
    %685 = vmatpush1.msra.mxu0 0.0
    %686 = vmatprep.subr.mxu0 0.0
    %687 = vmatpush1.msra.mxu0 0.0
    %688 = vmatprep.subr.mxu0 0.0
    %689 = vmatpush1.msra.mxu0 0.0
    %690 = vmatprep.subr.mxu0 0.0
    %691 = vmatpush1.msra.mxu0 0.0
    %692 = vmatprep.subr.mxu0 0.0
    %693 = vmatpush1.msra.mxu0 0.0
    %694 = vmatprep.subr.mxu0 0.0
    %695 = vmatpush1.msra.mxu0 0.0
    %696 = vmatprep.subr.mxu0 0.0
    %697 = vmatpush1.msra.mxu0 0.0
    %698 = vmatprep.subr.mxu0 0.0
    %699 = vmatpush1.msra.mxu0 0.0
    %700 = vmatprep.subr.mxu0 0.0
    %701 = vmatpush1.msra.mxu0 0.0
    %702 = vmatprep.subr.mxu0 0.0
    %703 = vmatpush1.msra.mxu0 0.0
    %704 = vmatprep.subr.mxu0 0.0
    %705 = vmatpush1.msra.mxu0 0.0
    %706 = vmatprep.subr.mxu0 0.0
    %707 = vmatpush1.msra.mxu0 0.0
    %708 = vmatprep.subr.mxu0 0.0
    %709 = vmatpush1.msra.mxu0 0.0
    %710 = vmatprep.subr.mxu0 0.0
    %711 = vmatpush1.msra.mxu0 0.0
    %712 = vmatprep.subr.mxu0 0.0
    %713 = vmatpush1.msra.mxu0 0.0
    %714 = vmatprep.mubr.f32.mxu0 0.0
    %715 = vmatmul.mubr.f32.gmra.mrb[0].mxu0 %v639
    %v716 = vpop.f32.mrb[0].mxu0
    %v717 = vadd.f32 0.0, %v716
    %v718 = vpop.f32.mrb[0].mxu0
    %719 = vmatprep.mubr.f32.mxu0 0.0
    %720 = vmatmul.mubr.f32.gmra.mrb[0].mxu0 %v641
    %v721 = vpop.f32.mrb[0].mxu0
    %v722 = vadd.f32 0.0, %v721
    %v723 = vpop.f32.mrb[0].mxu0
    %724 = vmatprep.mubr.f32.mxu0 0.0
    %725 = vmatmul.mubr.f32.gmra.mrb[0].mxu0 %v643
    %v726 = vpop.f32.mrb[0].mxu0
    %v727 = vadd.f32 0.0, %v726
    %v728 = vpop.f32.mrb[0].mxu0
    %729 = vmatprep.mubr.f32.mxu0 0.0
    %730 = vmatmul.mubr.f32.gmra.mrb[0].mxu0 %v645
    %v731 = vpop.f32.mrb[0].mxu0
    %v732 = vadd.f32 0.0, %v731
    %v733 = vpop.f32.mrb[0].mxu0
    %734 = vdwg.mxu0
    %v735 = vadd.f32 %v613, %v717
    %v736 = vadd.f32 %v618, %v722
    %v737 = vadd.f32 %v623, %v727
    %v738 = vadd.f32 %v628, %v732
    %739 = vset.pattern.permute.xlu0 12
    %740 = vperm.xlu0 %739, %v401
    %v741 = vpop.permute.xlu0 %740
    %743 = vset.pattern.permute.xlu0 12
    %744 = vperm.xlu0 %743, %v402
    %v745 = vpop.permute.xlu0 %744
    %747 = vset.pattern.permute.xlu0 12
    %748 = vperm.xlu0 %747, %v403
    %v749 = vpop.permute.xlu0 %748
    %751 = vset.pattern.permute.xlu0 12
    %752 = vperm.xlu0 %751, %v404
    %v753 = vpop.permute.xlu0 %752
    %v755 = vadd.f32 %v735, %v741
    %v756 = vadd.f32 %v736, %v745
    %v757 = vadd.f32 %v737, %v749
    %v758 = vadd.f32 %v738, %v753
    %v759 = vmul.f32 %v755, 0.01
    %v760 = vmul.f32 %v756, 0.01
    %v761 = vmul.f32 %v757, 0.01
    %v762 = vmul.f32 %v758, 0.01
    %v763 = vmax.f32 %v755, %v759
    %v764 = vmax.f32 %v756, %v760
    %v765 = vmax.f32 %v757, %v761
    %v766 = vmax.f32 %v758, %v762
    %v767 = vld [vmem:[%s2 + $0x20] sm:$0xff]
    %v768 = vld [vmem:[%s2 + $0x28] sm:$0xff]
    %v769 = vld [vmem:[%s2 + $0x30] sm:$0xff]
    %v770 = vld [vmem:[%s2 + $0x38] sm:$0xff]
    %771 = vrot.lane.b32.xlu0 %v763, 32
    %v772 = vpop.permute.xlu0 %771
    %v773 = vsel %vm405, %v772, %v763
    %774 = vrot.lane.b32.xlu0 %v764, 32
    %v775 = vpop.permute.xlu0 %774
    %v776 = vsel %vm405, %v775, %v764
    %777 = vrot.lane.b32.xlu0 %v765, 32
    %v778 = vpop.permute.xlu0 %777
    %v779 = vsel %vm405, %v778, %v765
    %780 = vrot.lane.b32.xlu0 %v766, 32
    %v781 = vpop.permute.xlu0 %780
    %v782 = vsel %vm405, %v781, %v766
    %783 = vrot.lane.b32.xlu0 %v773, 32
    %v784 = vpop.permute.xlu0 %783
    %785 = vrot.lane.b32.xlu0 %v776, 32
    %v786 = vpop.permute.xlu0 %785
    %787 = vrot.lane.b32.xlu0 %v779, 32
    %v788 = vpop.permute.xlu0 %787
    %789 = vrot.lane.b32.xlu0 %v782, 32
    %v790 = vpop.permute.xlu0 %789
    %v791 = vsel %vm405, %v784, %v763
    %v792 = vsel %vm405, %v786, %v764
    %v793 = vsel %vm405, %v788, %v765
    %v794 = vsel %vm405, %v790, %v766
    %799 = vrot.lane.b32.xlu0 %v791, 97
    %v800 = vpop.permute.xlu0 %799
    %801 = vrot.lane.b32.xlu0 %v792, 97
    %v802 = vpop.permute.xlu0 %801
    %803 = vrot.lane.b32.xlu0 %v793, 97
    %v804 = vpop.permute.xlu0 %803
    %805 = vrot.lane.b32.xlu0 %v794, 97
    %v806 = vpop.permute.xlu0 %805
    %v811 = vsel %vm413, 0.0, %v800
    %v812 = vsel %vm413, 0.0, %v802
    %v813 = vsel %vm413, 0.0, %v804
    %v814 = vsel %vm413, 0.0, %v806
    %815 = vrot.lane.b32.xlu0 %v791, 127
    %v816 = vpop.permute.xlu0 %815
    %817 = vrot.lane.b32.xlu0 %v792, 127
    %v818 = vpop.permute.xlu0 %817
    %819 = vrot.lane.b32.xlu0 %v793, 127
    %v820 = vpop.permute.xlu0 %819
    %821 = vrot.lane.b32.xlu0 %v794, 127
    %v822 = vpop.permute.xlu0 %821
    %v827 = vsel %vm420, 0.0, %v816
    %v828 = vsel %vm420, 0.0, %v818
    %v829 = vsel %vm420, 0.0, %v820
    %v830 = vsel %vm420, 0.0, %v822
    %832 = vset.pattern.permute.xlu0 96
    %833 = vperm.xlu0 %832, %v767
    %v834 = vpop.permute.xlu0 %833
    %837 = vset.pattern.permute.xlu0 96
    %838 = vperm.xlu0 %837, %v768
    %v839 = vpop.permute.xlu0 %838
    %842 = vset.pattern.permute.xlu0 96
    %843 = vperm.xlu0 %842, %v769
    %v844 = vpop.permute.xlu0 %843
    %847 = vset.pattern.permute.xlu0 96
    %848 = vperm.xlu0 %847, %v770
    %v849 = vpop.permute.xlu0 %848
    %vm851 = vcmask 785408
    %v852 = vsel %vm851, %v767, 0
    %v854 = vsel %vm851, %v768, 0
    %v856 = vsel %vm851, %v769, 0
    %v858 = vsel %vm851, %v770, 0
    %860 = vmatprep.subr.mxu0 0.0
    %861 = vmatpush1.msra.mxu0 %v811
    %862 = vmatprep.subr.mxu0 0.0
    %863 = vmatpush1.msra.mxu0 %v812
    %864 = vmatprep.subr.mxu0 0.0
    %865 = vmatpush1.msra.mxu0 %v813
    %866 = vmatprep.subr.mxu0 0.0
    %867 = vmatpush1.msra.mxu0 %v814
    %868 = vmatprep.subr.mxu0 0.0
    %869 = vmatpush1.msra.mxu0 %v763
    %870 = vmatprep.subr.mxu0 0.0
    %871 = vmatpush1.msra.mxu0 %v764
    %872 = vmatprep.subr.mxu0 0.0
    %873 = vmatpush1.msra.mxu0 %v765
    %874 = vmatprep.subr.mxu0 0.0
    %875 = vmatpush1.msra.mxu0 %v766
    %876 = vmatprep.subr.mxu0 0.0
    %877 = vmatpush1.msra.mxu0 %v827
    %878 = vmatprep.subr.mxu0 0.0
    %879 = vmatpush1.msra.mxu0 %v828
    %880 = vmatprep.subr.mxu0 0.0
    %881 = vmatpush1.msra.mxu0 %v829
    %882 = vmatprep.subr.mxu0 0.0
    %883 = vmatpush1.msra.mxu0 %v830
    %884 = vmatprep.subr.mxu0 0.0
    %885 = vmatpush1.msra.mxu0 0.0
    %886 = vmatprep.subr.mxu0 0.0
    %887 = vmatpush1.msra.mxu0 0.0
    %888 = vmatprep.subr.mxu0 0.0
    %889 = vmatpush1.msra.mxu0 0.0
    %890 = vmatprep.subr.mxu0 0.0
    %891 = vmatpush1.msra.mxu0 0.0
    %892 = vmatprep.subr.mxu0 0.0
    %893 = vmatpush1.msra.mxu0 0.0
    %894 = vmatprep.subr.mxu0 0.0
    %895 = vmatpush1.msra.mxu0 0.0
    %896 = vmatprep.subr.mxu0 0.0
    %897 = vmatpush1.msra.mxu0 0.0
    %898 = vmatprep.subr.mxu0 0.0
    %899 = vmatpush1.msra.mxu0 0.0
    %900 = vmatprep.subr.mxu0 0.0
    %901 = vmatpush1.msra.mxu0 0.0
    %902 = vmatprep.subr.mxu0 0.0
    %903 = vmatpush1.msra.mxu0 0.0
    %904 = vmatprep.subr.mxu0 0.0
    %905 = vmatpush1.msra.mxu0 0.0
    %906 = vmatprep.subr.mxu0 0.0
    %907 = vmatpush1.msra.mxu0 0.0
    %908 = vmatprep.subr.mxu0 0.0
    %909 = vmatpush1.msra.mxu0 0.0
    %910 = vmatprep.subr.mxu0 0.0
    %911 = vmatpush1.msra.mxu0 0.0
    %912 = vmatprep.subr.mxu0 0.0
    %913 = vmatpush1.msra.mxu0 0.0
    %914 = vmatprep.subr.mxu0 0.0
    %915 = vmatpush1.msra.mxu0 0.0
    %916 = vmatprep.subr.mxu0 0.0
    %917 = vmatpush1.msra.mxu0 0.0
    %918 = vmatprep.subr.mxu0 0.0
    %919 = vmatpush1.msra.mxu0 0.0
    %920 = vmatprep.subr.mxu0 0.0
    %921 = vmatpush1.msra.mxu0 0.0
    %922 = vmatprep.subr.mxu0 0.0
    %923 = vmatpush1.msra.mxu0 0.0
    %924 = vmatprep.mubr.f32.mxu0 0.0
    %925 = vmatmul.mubr.f32.gmra.mrb[0].mxu0 %v852
    %v926 = vpop.f32.mrb[0].mxu0
    %v927 = vadd.f32 %v834, %v926
    %v928 = vpop.f32.mrb[0].mxu0
    %929 = vmatprep.mubr.f32.mxu0 0.0
    %930 = vmatmul.mubr.f32.gmra.mrb[0].mxu0 %v854
    %v931 = vpop.f32.mrb[0].mxu0
    %v932 = vadd.f32 %v839, %v931
    %v933 = vpop.f32.mrb[0].mxu0
    %934 = vmatprep.mubr.f32.mxu0 0.0
    %935 = vmatmul.mubr.f32.gmra.mrb[0].mxu0 %v856
    %v936 = vpop.f32.mrb[0].mxu0
    %v937 = vadd.f32 %v844, %v936
    %v938 = vpop.f32.mrb[0].mxu0
    %939 = vmatprep.mubr.f32.mxu0 0.0
    %940 = vmatmul.mubr.f32.gmra.mrb[0].mxu0 %v858
    %v941 = vpop.f32.mrb[0].mxu0
    %v942 = vadd.f32 %v849, %v941
    %v943 = vpop.f32.mrb[0].mxu0
    %944 = vdwg.mxu0
    %v946 = vsel %vm54, %v927, 0
    %v949 = vsel %vm54, %v932, 0
    %v952 = vsel %vm54, %v937, 0
    %v955 = vsel %vm54, %v942, 0
    %957 = vmatprep.subr.mxu0 0.0
    %958 = vmatpush1.msra.mxu0 1.0
    %959 = vmatprep.subr.mxu0 0.0
    %960 = vmatpush1.msra.mxu0 1.0
    %961 = vmatprep.subr.mxu0 0.0
    %962 = vmatpush1.msra.mxu0 1.0
    %963 = vmatprep.subr.mxu0 0.0
    %964 = vmatpush1.msra.mxu0 1.0
    %965 = vmatprep.subr.mxu0 0.0
    %966 = vmatpush1.msra.mxu0 0.0
    %967 = vmatprep.subr.mxu0 0.0
    %968 = vmatpush1.msra.mxu0 0.0
    %969 = vmatprep.subr.mxu0 0.0
    %970 = vmatpush1.msra.mxu0 0.0
    %971 = vmatprep.subr.mxu0 0.0
    %972 = vmatpush1.msra.mxu0 0.0
    %973 = vmatprep.subr.mxu0 0.0
    %974 = vmatpush1.msra.mxu0 0.0
    %975 = vmatprep.subr.mxu0 0.0
    %976 = vmatpush1.msra.mxu0 0.0
    %977 = vmatprep.subr.mxu0 0.0
    %978 = vmatpush1.msra.mxu0 0.0
    %979 = vmatprep.subr.mxu0 0.0
    %980 = vmatpush1.msra.mxu0 0.0
    %981 = vmatprep.subr.mxu0 0.0
    %982 = vmatpush1.msra.mxu0 0.0
    %983 = vmatprep.subr.mxu0 0.0
    %984 = vmatpush1.msra.mxu0 0.0
    %985 = vmatprep.subr.mxu0 0.0
    %986 = vmatpush1.msra.mxu0 0.0
    %987 = vmatprep.subr.mxu0 0.0
    %988 = vmatpush1.msra.mxu0 0.0
    %989 = vmatprep.subr.mxu0 0.0
    %990 = vmatpush1.msra.mxu0 0.0
    %991 = vmatprep.subr.mxu0 0.0
    %992 = vmatpush1.msra.mxu0 0.0
    %993 = vmatprep.subr.mxu0 0.0
    %994 = vmatpush1.msra.mxu0 0.0
    %995 = vmatprep.subr.mxu0 0.0
    %996 = vmatpush1.msra.mxu0 0.0
    %997 = vmatprep.subr.mxu0 0.0
    %998 = vmatpush1.msra.mxu0 0.0
    %999 = vmatprep.subr.mxu0 0.0
    %1000 = vmatpush1.msra.mxu0 0.0
    %1001 = vmatprep.subr.mxu0 0.0
    %1002 = vmatpush1.msra.mxu0 0.0
    %1003 = vmatprep.subr.mxu0 0.0
    %1004 = vmatpush1.msra.mxu0 0.0
    %1005 = vmatprep.subr.mxu0 0.0
    %1006 = vmatpush1.msra.mxu0 0.0
    %1007 = vmatprep.subr.mxu0 0.0
    %1008 = vmatpush1.msra.mxu0 0.0
    %1009 = vmatprep.subr.mxu0 0.0
    %1010 = vmatpush1.msra.mxu0 0.0
    %1011 = vmatprep.subr.mxu0 0.0
    %1012 = vmatpush1.msra.mxu0 0.0
    %1013 = vmatprep.subr.mxu0 0.0
    %1014 = vmatpush1.msra.mxu0 0.0
    %1015 = vmatprep.subr.mxu0 0.0
    %1016 = vmatpush1.msra.mxu0 0.0
    %1017 = vmatprep.subr.mxu0 0.0
    %1018 = vmatpush1.msra.mxu0 0.0
    %1019 = vmatprep.subr.mxu0 0.0
    %1020 = vmatpush1.msra.mxu0 0.0
    %1021 = vmatprep.mubr.f32.mxu0 0.0
    %1022 = vmatmul.mubr.f32.gmra.mrb[0].mxu0 %v946
    %v1023 = vpop.f32.mrb[0].mxu0
    %v1024 = vadd.f32 0.0, %v1023
    %v1025 = vpop.f32.mrb[0].mxu0
    %1026 = vmatprep.mubr.f32.mxu0 0.0
    %1027 = vmatmul.mubr.f32.gmra.mrb[0].mxu0 %v949
    %v1028 = vpop.f32.mrb[0].mxu0
    %v1029 = vadd.f32 0.0, %v1028
    %v1030 = vpop.f32.mrb[0].mxu0
    %1031 = vmatprep.mubr.f32.mxu0 0.0
    %1032 = vmatmul.mubr.f32.gmra.mrb[0].mxu0 %v952
    %v1033 = vpop.f32.mrb[0].mxu0
    %v1034 = vadd.f32 0.0, %v1033
    %v1035 = vpop.f32.mrb[0].mxu0
    %1036 = vmatprep.mubr.f32.mxu0 0.0
    %1037 = vmatmul.mubr.f32.gmra.mrb[0].mxu0 %v955
    %v1038 = vpop.f32.mrb[0].mxu0
    %v1039 = vadd.f32 0.0, %v1038
    %v1040 = vpop.f32.mrb[0].mxu0
    %1041 = vdwg.mxu0
    %v1042 = vmul.f32 %v1024, 0.03125
    %v1043 = vmul.f32 %v1029, 0.03125
    %v1044 = vmul.f32 %v1034, 0.03125
    %v1045 = vmul.f32 %v1039, 0.03125
    %1047 = vset.pattern.permute.xlu0 0
    %1048 = vperm.xlu0 %1047, %v1042
    %v1049 = vpop.permute.xlu0 %1048
    %1052 = vset.pattern.permute.xlu0 0
    %1053 = vperm.xlu0 %1052, %v1043
    %v1054 = vpop.permute.xlu0 %1053
    %1057 = vset.pattern.permute.xlu0 0
    %1058 = vperm.xlu0 %1057, %v1044
    %v1059 = vpop.permute.xlu0 %1058
    %1062 = vset.pattern.permute.xlu0 0
    %1063 = vperm.xlu0 %1062, %v1045
    %v1064 = vpop.permute.xlu0 %1063
    %v1066 = vsub.f32 %v927, %v1049
    %v1067 = vsub.f32 %v932, %v1054
    %v1068 = vsub.f32 %v937, %v1059
    %v1069 = vsub.f32 %v942, %v1064
    %v1070 = vmul.f32 %v1066, %v1066
    %v1071 = vmul.f32 %v1067, %v1067
    %v1072 = vmul.f32 %v1068, %v1068
    %v1073 = vmul.f32 %v1069, %v1069
    %v1075 = vsel %vm54, %v1070, 0
    %v1078 = vsel %vm54, %v1071, 0
    %v1081 = vsel %vm54, %v1072, 0
    %v1084 = vsel %vm54, %v1073, 0
    %1086 = vmatprep.subr.mxu0 0.0
    %1087 = vmatpush1.msra.mxu0 1.0
    %1088 = vmatprep.subr.mxu0 0.0
    %1089 = vmatpush1.msra.mxu0 1.0
    %1090 = vmatprep.subr.mxu0 0.0
    %1091 = vmatpush1.msra.mxu0 1.0
    %1092 = vmatprep.subr.mxu0 0.0
    %1093 = vmatpush1.msra.mxu0 1.0
    %1094 = vmatprep.subr.mxu0 0.0
    %1095 = vmatpush1.msra.mxu0 0.0
    %1096 = vmatprep.subr.mxu0 0.0
    %1097 = vmatpush1.msra.mxu0 0.0
    %1098 = vmatprep.subr.mxu0 0.0
    %1099 = vmatpush1.msra.mxu0 0.0
    %1100 = vmatprep.subr.mxu0 0.0
    %1101 = vmatpush1.msra.mxu0 0.0
    %1102 = vmatprep.subr.mxu0 0.0
    %1103 = vmatpush1.msra.mxu0 0.0
    %1104 = vmatprep.subr.mxu0 0.0
    %1105 = vmatpush1.msra.mxu0 0.0
    %1106 = vmatprep.subr.mxu0 0.0
    %1107 = vmatpush1.msra.mxu0 0.0
    %1108 = vmatprep.subr.mxu0 0.0
    %1109 = vmatpush1.msra.mxu0 0.0
    %1110 = vmatprep.subr.mxu0 0.0
    %1111 = vmatpush1.msra.mxu0 0.0
    %1112 = vmatprep.subr.mxu0 0.0
    %1113 = vmatpush1.msra.mxu0 0.0
    %1114 = vmatprep.subr.mxu0 0.0
    %1115 = vmatpush1.msra.mxu0 0.0
    %1116 = vmatprep.subr.mxu0 0.0
    %1117 = vmatpush1.msra.mxu0 0.0
    %1118 = vmatprep.subr.mxu0 0.0
    %1119 = vmatpush1.msra.mxu0 0.0
    %1120 = vmatprep.subr.mxu0 0.0
    %1121 = vmatpush1.msra.mxu0 0.0
    %1122 = vmatprep.subr.mxu0 0.0
    %1123 = vmatpush1.msra.mxu0 0.0
    %1124 = vmatprep.subr.mxu0 0.0
    %1125 = vmatpush1.msra.mxu0 0.0
    %1126 = vmatprep.subr.mxu0 0.0
    %1127 = vmatpush1.msra.mxu0 0.0
    %1128 = vmatprep.subr.mxu0 0.0
    %1129 = vmatpush1.msra.mxu0 0.0
    %1130 = vmatprep.subr.mxu0 0.0
    %1131 = vmatpush1.msra.mxu0 0.0
    %1132 = vmatprep.subr.mxu0 0.0
    %1133 = vmatpush1.msra.mxu0 0.0
    %1134 = vmatprep.subr.mxu0 0.0
    %1135 = vmatpush1.msra.mxu0 0.0
    %1136 = vmatprep.subr.mxu0 0.0
    %1137 = vmatpush1.msra.mxu0 0.0
    %1138 = vmatprep.subr.mxu0 0.0
    %1139 = vmatpush1.msra.mxu0 0.0
    %1140 = vmatprep.subr.mxu0 0.0
    %1141 = vmatpush1.msra.mxu0 0.0
    %1142 = vmatprep.subr.mxu0 0.0
    %1143 = vmatpush1.msra.mxu0 0.0
    %1144 = vmatprep.subr.mxu0 0.0
    %1145 = vmatpush1.msra.mxu0 0.0
    %1146 = vmatprep.subr.mxu0 0.0
    %1147 = vmatpush1.msra.mxu0 0.0
    %1148 = vmatprep.subr.mxu0 0.0
    %1149 = vmatpush1.msra.mxu0 0.0
    %1150 = vmatprep.mubr.f32.mxu0 0.0
    %1151 = vmatmul.mubr.f32.gmra.mrb[0].mxu0 %v1075
    %v1152 = vpop.f32.mrb[0].mxu0
    %v1153 = vadd.f32 0.0, %v1152
    %v1154 = vpop.f32.mrb[0].mxu0
    %1155 = vmatprep.mubr.f32.mxu0 0.0
    %1156 = vmatmul.mubr.f32.gmra.mrb[0].mxu0 %v1078
    %v1157 = vpop.f32.mrb[0].mxu0
    %v1158 = vadd.f32 0.0, %v1157
    %v1159 = vpop.f32.mrb[0].mxu0
    %1160 = vmatprep.mubr.f32.mxu0 0.0
    %1161 = vmatmul.mubr.f32.gmra.mrb[0].mxu0 %v1081
    %v1162 = vpop.f32.mrb[0].mxu0
    %v1163 = vadd.f32 0.0, %v1162
    %v1164 = vpop.f32.mrb[0].mxu0
    %1165 = vmatprep.mubr.f32.mxu0 0.0
    %1166 = vmatmul.mubr.f32.gmra.mrb[0].mxu0 %v1084
    %v1167 = vpop.f32.mrb[0].mxu0
    %v1168 = vadd.f32 0.0, %v1167
    %v1169 = vpop.f32.mrb[0].mxu0
    %1170 = vdwg.mxu0
    %v1171 = vmul.f32 %v1153, 0.03125
    %v1172 = vmul.f32 %v1158, 0.03125
    %v1173 = vmul.f32 %v1163, 0.03125
    %v1174 = vmul.f32 %v1168, 0.03125
    %v1175 = vadd.f32 %v1171, 1e-05
    %v1176 = vadd.f32 %v1172, 1e-05
    %v1177 = vadd.f32 %v1173, 1e-05
    %v1178 = vadd.f32 %v1174, 1e-05
    %v1179 = vrsqrt.pop %v1175
    %v1180 = vrsqrt.pop %v1176
    %v1181 = vrsqrt.pop %v1177
    %v1182 = vrsqrt.pop %v1178
    %1187 = vrot.lane.b32.xlu0 %v1179, 97
    %v1188 = vpop.permute.xlu0 %1187
    %1189 = vrot.lane.b32.xlu0 %v1180, 97
    %v1190 = vpop.permute.xlu0 %1189
    %1191 = vrot.lane.b32.xlu0 %v1181, 97
    %v1192 = vpop.permute.xlu0 %1191
    %1193 = vrot.lane.b32.xlu0 %v1182, 97
    %v1194 = vpop.permute.xlu0 %1193
    %v1199 = vmul.f32 %v767, %v1188
    %v1200 = vmul.f32 %v768, %v1190
    %v1201 = vmul.f32 %v769, %v1192
    %v1202 = vmul.f32 %v770, %v1194
    %1204 = vset.pattern.permute.xlu0 97
    %1205 = vperm.xlu0 %1204, %v1199
    %v1206 = vpop.permute.xlu0 %1205
    %1209 = vset.pattern.permute.xlu0 97
    %1210 = vperm.xlu0 %1209, %v1200
    %v1211 = vpop.permute.xlu0 %1210
    %1214 = vset.pattern.permute.xlu0 97
    %1215 = vperm.xlu0 %1214, %v1201
    %v1216 = vpop.permute.xlu0 %1215
    %1219 = vset.pattern.permute.xlu0 97
    %1220 = vperm.xlu0 %1219, %v1202
    %v1221 = vpop.permute.xlu0 %1220
    %v1223 = vmul.f32 %v1066, %v1206
    %v1224 = vmul.f32 %v1067, %v1211
    %v1225 = vmul.f32 %v1068, %v1216
    %v1226 = vmul.f32 %v1069, %v1221
    %1227 = vset.pattern.permute.xlu0 98
    %1228 = vperm.xlu0 %1227, %v767
    %v1229 = vpop.permute.xlu0 %1228
    %1231 = vset.pattern.permute.xlu0 98
    %1232 = vperm.xlu0 %1231, %v768
    %v1233 = vpop.permute.xlu0 %1232
    %1235 = vset.pattern.permute.xlu0 98
    %1236 = vperm.xlu0 %1235, %v769
    %v1237 = vpop.permute.xlu0 %1236
    %1239 = vset.pattern.permute.xlu0 98
    %1240 = vperm.xlu0 %1239, %v770
    %v1241 = vpop.permute.xlu0 %1240
    %v1243 = vadd.f32 %v1223, %v1229
    %v1244 = vadd.f32 %v1224, %v1233
    %v1245 = vadd.f32 %v1225, %v1237
    %v1246 = vadd.f32 %v1226, %v1241
    %v1247 = vmul.f32 %v1243, 0.01
    %v1248 = vmul.f32 %v1244, 0.01
    %v1249 = vmul.f32 %v1245, 0.01
    %v1250 = vmul.f32 %v1246, 0.01
    %v1251 = vmax.f32 %v1243, %v1247
    %v1252 = vmax.f32 %v1244, %v1248
    %v1253 = vmax.f32 %v1245, %v1249
    %v1254 = vmax.f32 %v1246, %v1250
    %v1255 = vadd.f32 %v763, %v1251
    %v1256 = vadd.f32 %v764, %v1252
    %v1257 = vadd.f32 %v765, %v1253
    %v1258 = vadd.f32 %v766, %v1254
    %v1260 = vsel %vm54, %v1255, 0
    %v1263 = vsel %vm54, %v1256, 0
    %v1266 = vsel %vm54, %v1257, 0
    %v1269 = vsel %vm54, %v1258, 0
    %1271 = vmatprep.subr.mxu0 0.0
    %1272 = vmatpush1.msra.mxu0 %v47
    %1273 = vmatprep.subr.mxu0 0.0
    %1274 = vmatpush1.msra.mxu0 %v48
    %1275 = vmatprep.subr.mxu0 0.0
    %1276 = vmatpush1.msra.mxu0 %v49
    %1277 = vmatprep.subr.mxu0 0.0
    %1278 = vmatpush1.msra.mxu0 %v50
    %1279 = vmatprep.subr.mxu0 0.0
    %1280 = vmatpush1.msra.mxu0 0.0
    %1281 = vmatprep.subr.mxu0 0.0
    %1282 = vmatpush1.msra.mxu0 0.0
    %1283 = vmatprep.subr.mxu0 0.0
    %1284 = vmatpush1.msra.mxu0 0.0
    %1285 = vmatprep.subr.mxu0 0.0
    %1286 = vmatpush1.msra.mxu0 0.0
    %1287 = vmatprep.subr.mxu0 0.0
    %1288 = vmatpush1.msra.mxu0 0.0
    %1289 = vmatprep.subr.mxu0 0.0
    %1290 = vmatpush1.msra.mxu0 0.0
    %1291 = vmatprep.subr.mxu0 0.0
    %1292 = vmatpush1.msra.mxu0 0.0
    %1293 = vmatprep.subr.mxu0 0.0
    %1294 = vmatpush1.msra.mxu0 0.0
    %1295 = vmatprep.subr.mxu0 0.0
    %1296 = vmatpush1.msra.mxu0 0.0
    %1297 = vmatprep.subr.mxu0 0.0
    %1298 = vmatpush1.msra.mxu0 0.0
    %1299 = vmatprep.subr.mxu0 0.0
    %1300 = vmatpush1.msra.mxu0 0.0
    %1301 = vmatprep.subr.mxu0 0.0
    %1302 = vmatpush1.msra.mxu0 0.0
    %1303 = vmatprep.subr.mxu0 0.0
    %1304 = vmatpush1.msra.mxu0 0.0
    %1305 = vmatprep.subr.mxu0 0.0
    %1306 = vmatpush1.msra.mxu0 0.0
    %1307 = vmatprep.subr.mxu0 0.0
    %1308 = vmatpush1.msra.mxu0 0.0
    %1309 = vmatprep.subr.mxu0 0.0
    %1310 = vmatpush1.msra.mxu0 0.0
    %1311 = vmatprep.subr.mxu0 0.0
    %1312 = vmatpush1.msra.mxu0 0.0
    %1313 = vmatprep.subr.mxu0 0.0
    %1314 = vmatpush1.msra.mxu0 0.0
    %1315 = vmatprep.subr.mxu0 0.0
    %1316 = vmatpush1.msra.mxu0 0.0
    %1317 = vmatprep.subr.mxu0 0.0
    %1318 = vmatpush1.msra.mxu0 0.0
    %1319 = vmatprep.subr.mxu0 0.0
    %1320 = vmatpush1.msra.mxu0 0.0
    %1321 = vmatprep.subr.mxu0 0.0
    %1322 = vmatpush1.msra.mxu0 0.0
    %1323 = vmatprep.subr.mxu0 0.0
    %1324 = vmatpush1.msra.mxu0 0.0
    %1325 = vmatprep.subr.mxu0 0.0
    %1326 = vmatpush1.msra.mxu0 0.0
    %1327 = vmatprep.subr.mxu0 0.0
    %1328 = vmatpush1.msra.mxu0 0.0
    %1329 = vmatprep.subr.mxu0 0.0
    %1330 = vmatpush1.msra.mxu0 0.0
    %1331 = vmatprep.subr.mxu0 0.0
    %1332 = vmatpush1.msra.mxu0 0.0
    %1333 = vmatprep.subr.mxu0 0.0
    %1334 = vmatpush1.msra.mxu0 0.0
    %1335 = vmatprep.mubr.f32.mxu0 0.0
    %1336 = vmatmul.mubr.f32.gmra.mrb[0].mxu0 %v1260
    %v1337 = vpop.f32.mrb[0].mxu0
    %v1338 = vadd.f32 0.0, %v1337
    %v1339 = vpop.f32.mrb[0].mxu0
    %1340 = vmatprep.mubr.f32.mxu0 0.0
    %1341 = vmatmul.mubr.f32.gmra.mrb[0].mxu0 %v1263
    %v1342 = vpop.f32.mrb[0].mxu0
    %v1343 = vadd.f32 0.0, %v1342
    %v1344 = vpop.f32.mrb[0].mxu0
    %1345 = vmatprep.mubr.f32.mxu0 0.0
    %1346 = vmatmul.mubr.f32.gmra.mrb[0].mxu0 %v1266
    %v1347 = vpop.f32.mrb[0].mxu0
    %v1348 = vadd.f32 0.0, %v1347
    %v1349 = vpop.f32.mrb[0].mxu0
    %1350 = vmatprep.mubr.f32.mxu0 0.0
    %1351 = vmatmul.mubr.f32.gmra.mrb[0].mxu0 %v1269
    %v1352 = vpop.f32.mrb[0].mxu0
    %v1353 = vadd.f32 0.0, %v1352
    %v1354 = vpop.f32.mrb[0].mxu0
    %1355 = vdwg.mxu0
    %v1356 = vmul.f32 %v1338, 0.0625
    %v1357 = vmul.f32 %v1343, 0.0625
    %v1358 = vmul.f32 %v1348, 0.0625
    %v1359 = vmul.f32 %v1353, 0.0625
    %1361 = vset.pattern.permute.xlu0 1
    %1362 = vperm.xlu0 %1361, %v1356
    %v1363 = vpop.permute.xlu0 %1362
    %1366 = vset.pattern.permute.xlu0 1
    %1367 = vperm.xlu0 %1366, %v1357
    %v1368 = vpop.permute.xlu0 %1367
    %1371 = vset.pattern.permute.xlu0 1
    %1372 = vperm.xlu0 %1371, %v1358
    %v1373 = vpop.permute.xlu0 %1372
    %1376 = vset.pattern.permute.xlu0 1
    %1377 = vperm.xlu0 %1376, %v1359
    %v1378 = vpop.permute.xlu0 %1377
    %1380 = vset.pattern.permute.xlu0 0
    %1381 = vperm.xlu0 %1380, %v1356
    %v1382 = vpop.permute.xlu0 %1381
    %1384 = vset.pattern.permute.xlu0 0
    %1385 = vperm.xlu0 %1384, %v1357
    %v1386 = vpop.permute.xlu0 %1385
    %1388 = vset.pattern.permute.xlu0 0
    %1389 = vperm.xlu0 %1388, %v1358
    %v1390 = vpop.permute.xlu0 %1389
    %1392 = vset.pattern.permute.xlu0 0
    %1393 = vperm.xlu0 %1392, %v1359
    %v1394 = vpop.permute.xlu0 %1393
    %v1396 = vsel %vm131, %v1363, %v1382
    %v1397 = vsel %vm131, %v1368, %v1386
    %v1398 = vsel %vm131, %v1373, %v1390
    %v1399 = vsel %vm131, %v1378, %v1394
    %v1400 = vsub.f32 %v1255, %v1396
    %v1401 = vsub.f32 %v1256, %v1397
    %v1402 = vsub.f32 %v1257, %v1398
    %v1403 = vsub.f32 %v1258, %v1399
    %v1404 = vmul.f32 %v1400, %v1400
    %v1405 = vmul.f32 %v1401, %v1401
    %v1406 = vmul.f32 %v1402, %v1402
    %v1407 = vmul.f32 %v1403, %v1403
    %v1409 = vsel %vm54, %v1404, 0
    %v1412 = vsel %vm54, %v1405, 0
    %v1415 = vsel %vm54, %v1406, 0
    %v1418 = vsel %vm54, %v1407, 0
    %1420 = vmatprep.subr.mxu0 0.0
    %1421 = vmatpush1.msra.mxu0 %v47
    %1422 = vmatprep.subr.mxu0 0.0
    %1423 = vmatpush1.msra.mxu0 %v48
    %1424 = vmatprep.subr.mxu0 0.0
    %1425 = vmatpush1.msra.mxu0 %v49
    %1426 = vmatprep.subr.mxu0 0.0
    %1427 = vmatpush1.msra.mxu0 %v50
    %1428 = vmatprep.subr.mxu0 0.0
    %1429 = vmatpush1.msra.mxu0 0.0
    %1430 = vmatprep.subr.mxu0 0.0
    %1431 = vmatpush1.msra.mxu0 0.0
    %1432 = vmatprep.subr.mxu0 0.0
    %1433 = vmatpush1.msra.mxu0 0.0
    %1434 = vmatprep.subr.mxu0 0.0
    %1435 = vmatpush1.msra.mxu0 0.0
    %1436 = vmatprep.subr.mxu0 0.0
    %1437 = vmatpush1.msra.mxu0 0.0
    %1438 = vmatprep.subr.mxu0 0.0
    %1439 = vmatpush1.msra.mxu0 0.0
    %1440 = vmatprep.subr.mxu0 0.0
    %1441 = vmatpush1.msra.mxu0 0.0
    %1442 = vmatprep.subr.mxu0 0.0
    %1443 = vmatpush1.msra.mxu0 0.0
    %1444 = vmatprep.subr.mxu0 0.0
    %1445 = vmatpush1.msra.mxu0 0.0
    %1446 = vmatprep.subr.mxu0 0.0
    %1447 = vmatpush1.msra.mxu0 0.0
    %1448 = vmatprep.subr.mxu0 0.0
    %1449 = vmatpush1.msra.mxu0 0.0
    %1450 = vmatprep.subr.mxu0 0.0
    %1451 = vmatpush1.msra.mxu0 0.0
    %1452 = vmatprep.subr.mxu0 0.0
    %1453 = vmatpush1.msra.mxu0 0.0
    %1454 = vmatprep.subr.mxu0 0.0
    %1455 = vmatpush1.msra.mxu0 0.0
    %1456 = vmatprep.subr.mxu0 0.0
    %1457 = vmatpush1.msra.mxu0 0.0
    %1458 = vmatprep.subr.mxu0 0.0
    %1459 = vmatpush1.msra.mxu0 0.0
    %1460 = vmatprep.subr.mxu0 0.0
    %1461 = vmatpush1.msra.mxu0 0.0
    %1462 = vmatprep.subr.mxu0 0.0
    %1463 = vmatpush1.msra.mxu0 0.0
    %1464 = vmatprep.subr.mxu0 0.0
    %1465 = vmatpush1.msra.mxu0 0.0
    %1466 = vmatprep.subr.mxu0 0.0
    %1467 = vmatpush1.msra.mxu0 0.0
    %1468 = vmatprep.subr.mxu0 0.0
    %1469 = vmatpush1.msra.mxu0 0.0
    %1470 = vmatprep.subr.mxu0 0.0
    %1471 = vmatpush1.msra.mxu0 0.0
    %1472 = vmatprep.subr.mxu0 0.0
    %1473 = vmatpush1.msra.mxu0 0.0
    %1474 = vmatprep.subr.mxu0 0.0
    %1475 = vmatpush1.msra.mxu0 0.0
    %1476 = vmatprep.subr.mxu0 0.0
    %1477 = vmatpush1.msra.mxu0 0.0
    %1478 = vmatprep.subr.mxu0 0.0
    %1479 = vmatpush1.msra.mxu0 0.0
    %1480 = vmatprep.subr.mxu0 0.0
    %1481 = vmatpush1.msra.mxu0 0.0
    %1482 = vmatprep.subr.mxu0 0.0
    %1483 = vmatpush1.msra.mxu0 0.0
    %1484 = vmatprep.mubr.f32.mxu0 0.0
    %1485 = vmatmul.mubr.f32.gmra.mrb[0].mxu0 %v1409
    %v1486 = vpop.f32.mrb[0].mxu0
    %v1487 = vadd.f32 0.0, %v1486
    %v1488 = vpop.f32.mrb[0].mxu0
    %1489 = vmatprep.mubr.f32.mxu0 0.0
    %1490 = vmatmul.mubr.f32.gmra.mrb[0].mxu0 %v1412
    %v1491 = vpop.f32.mrb[0].mxu0
    %v1492 = vadd.f32 0.0, %v1491
    %v1493 = vpop.f32.mrb[0].mxu0
    %1494 = vmatprep.mubr.f32.mxu0 0.0
    %1495 = vmatmul.mubr.f32.gmra.mrb[0].mxu0 %v1415
    %v1496 = vpop.f32.mrb[0].mxu0
    %v1497 = vadd.f32 0.0, %v1496
    %v1498 = vpop.f32.mrb[0].mxu0
    %1499 = vmatprep.mubr.f32.mxu0 0.0
    %1500 = vmatmul.mubr.f32.gmra.mrb[0].mxu0 %v1418
    %v1501 = vpop.f32.mrb[0].mxu0
    %v1502 = vadd.f32 0.0, %v1501
    %v1503 = vpop.f32.mrb[0].mxu0
    %1504 = vdwg.mxu0
    %v1505 = vmul.f32 %v1487, 0.06666667
    %v1506 = vmul.f32 %v1492, 0.06666667
    %v1507 = vmul.f32 %v1497, 0.06666667
    %v1508 = vmul.f32 %v1502, 0.06666667
    %v1509 = vld [vmem:[%s1] sm:$0xff]
    %v1510 = vld [vmem:[%s1 + $0x8] sm:$0xff]
    %v1511 = vld [vmem:[%s1 + $0x10] sm:$0xff]
    %v1512 = vld [vmem:[%s1 + $0x18] sm:$0xff]
    %s1513 = scalar_lea.vmem %s1, 32
    %v1514 = vld [vmem:[%s1513] sm:$0xff]
    %v1515 = vld [vmem:[%s1513 + $0x8] sm:$0xff]
    %v1516 = vld [vmem:[%s1513 + $0x10] sm:$0xff]
    %v1517 = vld [vmem:[%s1513 + $0x18] sm:$0xff]
    %v1518 = vadd.f32 %v1505, 1e-05
    %v1519 = vadd.f32 %v1506, 1e-05
    %v1520 = vadd.f32 %v1507, 1e-05
    %v1521 = vadd.f32 %v1508, 1e-05
    %v1522 = vrsqrt.pop %v1518
    %v1523 = vrsqrt.pop %v1519
    %v1524 = vrsqrt.pop %v1520
    %v1525 = vrsqrt.pop %v1521
    %v1526 = vmul.f32 %v1514, %v1522
    %v1527 = vmul.f32 %v1515, %v1523
    %v1528 = vmul.f32 %v1516, %v1524
    %v1529 = vmul.f32 %v1517, %v1525
    %1531 = vset.pattern.permute.xlu0 1
    %1532 = vperm.xlu0 %1531, %v1526
    %v1533 = vpop.permute.xlu0 %1532
    %1536 = vset.pattern.permute.xlu0 1
    %1537 = vperm.xlu0 %1536, %v1527
    %v1538 = vpop.permute.xlu0 %1537
    %1541 = vset.pattern.permute.xlu0 1
    %1542 = vperm.xlu0 %1541, %v1528
    %v1543 = vpop.permute.xlu0 %1542
    %1546 = vset.pattern.permute.xlu0 1
    %1547 = vperm.xlu0 %1546, %v1529
    %v1548 = vpop.permute.xlu0 %1547
    %1550 = vset.pattern.permute.xlu0 0
    %1551 = vperm.xlu0 %1550, %v1526
    %v1552 = vpop.permute.xlu0 %1551
    %1554 = vset.pattern.permute.xlu0 0
    %1555 = vperm.xlu0 %1554, %v1527
    %v1556 = vpop.permute.xlu0 %1555
    %1558 = vset.pattern.permute.xlu0 0
    %1559 = vperm.xlu0 %1558, %v1528
    %v1560 = vpop.permute.xlu0 %1559
    %1562 = vset.pattern.permute.xlu0 0
    %1563 = vperm.xlu0 %1562, %v1529
    %v1564 = vpop.permute.xlu0 %1563
    %v1566 = vsel %vm131, %v1533, %v1552
    %v1567 = vsel %vm131, %v1538, %v1556
    %v1568 = vsel %vm131, %v1543, %v1560
    %v1569 = vsel %vm131, %v1548, %v1564
    %v1570 = vmul.f32 %v1400, %v1566
    %v1571 = vmul.f32 %v1401, %v1567
    %v1572 = vmul.f32 %v1402, %v1568
    %v1573 = vmul.f32 %v1403, %v1569
    %1575 = vset.pattern.permute.xlu0 1
    %1576 = vperm.xlu0 %1575, %v1509
    %v1577 = vpop.permute.xlu0 %1576
    %1580 = vset.pattern.permute.xlu0 1
    %1581 = vperm.xlu0 %1580, %v1510
    %v1582 = vpop.permute.xlu0 %1581
    %1585 = vset.pattern.permute.xlu0 1
    %1586 = vperm.xlu0 %1585, %v1511
    %v1587 = vpop.permute.xlu0 %1586
    %1590 = vset.pattern.permute.xlu0 1
    %1591 = vperm.xlu0 %1590, %v1512
    %v1592 = vpop.permute.xlu0 %1591
    %1594 = vset.pattern.permute.xlu0 0
    %1595 = vperm.xlu0 %1594, %v1509
    %v1596 = vpop.permute.xlu0 %1595
    %1598 = vset.pattern.permute.xlu0 0
    %1599 = vperm.xlu0 %1598, %v1510
    %v1600 = vpop.permute.xlu0 %1599
    %1602 = vset.pattern.permute.xlu0 0
    %1603 = vperm.xlu0 %1602, %v1511
    %v1604 = vpop.permute.xlu0 %1603
    %1606 = vset.pattern.permute.xlu0 0
    %1607 = vperm.xlu0 %1606, %v1512
    %v1608 = vpop.permute.xlu0 %1607
    %v1610 = vsel %vm131, %v1577, %v1596
    %v1611 = vsel %vm131, %v1582, %v1600
    %v1612 = vsel %vm131, %v1587, %v1604
    %v1613 = vsel %vm131, %v1592, %v1608
    %v1614 = vadd.f32 %v1570, %v1610
    %v1615 = vadd.f32 %v1571, %v1611
    %v1616 = vadd.f32 %v1572, %v1612
    %v1617 = vadd.f32 %v1573, %v1613
    %v1618 = vld [vmem:[%s2 + $0x40] sm:$0xff]
    %v1619 = vld [vmem:[%s2 + $0x48] sm:$0xff]
    %v1620 = vld [vmem:[%s2 + $0x50] sm:$0xff]
    %v1621 = vld [vmem:[%s2 + $0x58] sm:$0xff]
    %1622 = vrot.lane.b32.xlu0 %v1614, 32
    %v1623 = vpop.permute.xlu0 %1622
    %v1624 = vsel %vm405, %v1623, %v1614
    %1625 = vrot.lane.b32.xlu0 %v1615, 32
    %v1626 = vpop.permute.xlu0 %1625
    %v1627 = vsel %vm405, %v1626, %v1615
    %1628 = vrot.lane.b32.xlu0 %v1616, 32
    %v1629 = vpop.permute.xlu0 %1628
    %v1630 = vsel %vm405, %v1629, %v1616
    %1631 = vrot.lane.b32.xlu0 %v1617, 32
    %v1632 = vpop.permute.xlu0 %1631
    %v1633 = vsel %vm405, %v1632, %v1617
    %1634 = vrot.lane.b32.xlu0 %v1624, 32
    %v1635 = vpop.permute.xlu0 %1634
    %1636 = vrot.lane.b32.xlu0 %v1627, 32
    %v1637 = vpop.permute.xlu0 %1636
    %1638 = vrot.lane.b32.xlu0 %v1630, 32
    %v1639 = vpop.permute.xlu0 %1638
    %1640 = vrot.lane.b32.xlu0 %v1633, 32
    %v1641 = vpop.permute.xlu0 %1640
    %v1642 = vsel %vm405, %v1635, %v1614
    %v1643 = vsel %vm405, %v1637, %v1615
    %v1644 = vsel %vm405, %v1639, %v1616
    %v1645 = vsel %vm405, %v1641, %v1617
    %1650 = vrot.lane.b32.xlu0 %v1642, 97
    %v1651 = vpop.permute.xlu0 %1650
    %1652 = vrot.lane.b32.xlu0 %v1643, 97
    %v1653 = vpop.permute.xlu0 %1652
    %1654 = vrot.lane.b32.xlu0 %v1644, 97
    %v1655 = vpop.permute.xlu0 %1654
    %1656 = vrot.lane.b32.xlu0 %v1645, 97
    %v1657 = vpop.permute.xlu0 %1656
    %v1662 = vsel %vm413, 0.0, %v1651
    %v1663 = vsel %vm413, 0.0, %v1653
    %v1664 = vsel %vm413, 0.0, %v1655
    %v1665 = vsel %vm413, 0.0, %v1657
    %1666 = vrot.lane.b32.xlu0 %v1642, 127
    %v1667 = vpop.permute.xlu0 %1666
    %1668 = vrot.lane.b32.xlu0 %v1643, 127
    %v1669 = vpop.permute.xlu0 %1668
    %1670 = vrot.lane.b32.xlu0 %v1644, 127
    %v1671 = vpop.permute.xlu0 %1670
    %1672 = vrot.lane.b32.xlu0 %v1645, 127
    %v1673 = vpop.permute.xlu0 %1672
    %v1678 = vsel %vm420, 0.0, %v1667
    %v1679 = vsel %vm420, 0.0, %v1669
    %v1680 = vsel %vm420, 0.0, %v1671
    %v1681 = vsel %vm420, 0.0, %v1673
    %1683 = vset.pattern.permute.xlu0 96
    %1684 = vperm.xlu0 %1683, %v1618
    %v1685 = vpop.permute.xlu0 %1684
    %1688 = vset.pattern.permute.xlu0 96
    %1689 = vperm.xlu0 %1688, %v1619
    %v1690 = vpop.permute.xlu0 %1689
    %1693 = vset.pattern.permute.xlu0 96
    %1694 = vperm.xlu0 %1693, %v1620
    %v1695 = vpop.permute.xlu0 %1694
    %1698 = vset.pattern.permute.xlu0 96
    %1699 = vperm.xlu0 %1698, %v1621
    %v1700 = vpop.permute.xlu0 %1699
    %v1702 = vsel %vm851, %v1618, 0
    %v1704 = vsel %vm851, %v1619, 0
    %v1706 = vsel %vm851, %v1620, 0
    %v1708 = vsel %vm851, %v1621, 0
    %1710 = vmatprep.subr.mxu0 0.0
    %1711 = vmatpush1.msra.mxu0 %v1662
    %1712 = vmatprep.subr.mxu0 0.0
    %1713 = vmatpush1.msra.mxu0 %v1663
    %1714 = vmatprep.subr.mxu0 0.0
    %1715 = vmatpush1.msra.mxu0 %v1664
    %1716 = vmatprep.subr.mxu0 0.0
    %1717 = vmatpush1.msra.mxu0 %v1665
    %1718 = vmatprep.subr.mxu0 0.0
    %1719 = vmatpush1.msra.mxu0 %v1614
    %1720 = vmatprep.subr.mxu0 0.0
    %1721 = vmatpush1.msra.mxu0 %v1615
    %1722 = vmatprep.subr.mxu0 0.0
    %1723 = vmatpush1.msra.mxu0 %v1616
    %1724 = vmatprep.subr.mxu0 0.0
    %1725 = vmatpush1.msra.mxu0 %v1617
    %1726 = vmatprep.subr.mxu0 0.0
    %1727 = vmatpush1.msra.mxu0 %v1678
    %1728 = vmatprep.subr.mxu0 0.0
    %1729 = vmatpush1.msra.mxu0 %v1679
    %1730 = vmatprep.subr.mxu0 0.0
    %1731 = vmatpush1.msra.mxu0 %v1680
    %1732 = vmatprep.subr.mxu0 0.0
    %1733 = vmatpush1.msra.mxu0 %v1681
    %1734 = vmatprep.subr.mxu0 0.0
    %1735 = vmatpush1.msra.mxu0 0.0
    %1736 = vmatprep.subr.mxu0 0.0
    %1737 = vmatpush1.msra.mxu0 0.0
    %1738 = vmatprep.subr.mxu0 0.0
    %1739 = vmatpush1.msra.mxu0 0.0
    %1740 = vmatprep.subr.mxu0 0.0
    %1741 = vmatpush1.msra.mxu0 0.0
    %1742 = vmatprep.subr.mxu0 0.0
    %1743 = vmatpush1.msra.mxu0 0.0
    %1744 = vmatprep.subr.mxu0 0.0
    %1745 = vmatpush1.msra.mxu0 0.0
    %1746 = vmatprep.subr.mxu0 0.0
    %1747 = vmatpush1.msra.mxu0 0.0
    %1748 = vmatprep.subr.mxu0 0.0
    %1749 = vmatpush1.msra.mxu0 0.0
    %1750 = vmatprep.subr.mxu0 0.0
    %1751 = vmatpush1.msra.mxu0 0.0
    %1752 = vmatprep.subr.mxu0 0.0
    %1753 = vmatpush1.msra.mxu0 0.0
    %1754 = vmatprep.subr.mxu0 0.0
    %1755 = vmatpush1.msra.mxu0 0.0
    %1756 = vmatprep.subr.mxu0 0.0
    %1757 = vmatpush1.msra.mxu0 0.0
    %1758 = vmatprep.subr.mxu0 0.0
    %1759 = vmatpush1.msra.mxu0 0.0
    %1760 = vmatprep.subr.mxu0 0.0
    %1761 = vmatpush1.msra.mxu0 0.0
    %1762 = vmatprep.subr.mxu0 0.0
    %1763 = vmatpush1.msra.mxu0 0.0
    %1764 = vmatprep.subr.mxu0 0.0
    %1765 = vmatpush1.msra.mxu0 0.0
    %1766 = vmatprep.subr.mxu0 0.0
    %1767 = vmatpush1.msra.mxu0 0.0
    %1768 = vmatprep.subr.mxu0 0.0
    %1769 = vmatpush1.msra.mxu0 0.0
    %1770 = vmatprep.subr.mxu0 0.0
    %1771 = vmatpush1.msra.mxu0 0.0
    %1772 = vmatprep.subr.mxu0 0.0
    %1773 = vmatpush1.msra.mxu0 0.0
    %1774 = vmatprep.mubr.f32.mxu0 0.0
    %1775 = vmatmul.mubr.f32.gmra.mrb[0].mxu0 %v1702
    %v1776 = vpop.f32.mrb[0].mxu0
    %v1777 = vadd.f32 %v1685, %v1776
    %v1778 = vpop.f32.mrb[0].mxu0
    %1779 = vmatprep.mubr.f32.mxu0 0.0
    %1780 = vmatmul.mubr.f32.gmra.mrb[0].mxu0 %v1704
    %v1781 = vpop.f32.mrb[0].mxu0
    %v1782 = vadd.f32 %v1690, %v1781
    %v1783 = vpop.f32.mrb[0].mxu0
    %1784 = vmatprep.mubr.f32.mxu0 0.0
    %1785 = vmatmul.mubr.f32.gmra.mrb[0].mxu0 %v1706
    %v1786 = vpop.f32.mrb[0].mxu0
    %v1787 = vadd.f32 %v1695, %v1786
    %v1788 = vpop.f32.mrb[0].mxu0
    %1789 = vmatprep.mubr.f32.mxu0 0.0
    %1790 = vmatmul.mubr.f32.gmra.mrb[0].mxu0 %v1708
    %v1791 = vpop.f32.mrb[0].mxu0
    %v1792 = vadd.f32 %v1700, %v1791
    %v1793 = vpop.f32.mrb[0].mxu0
    %1794 = vdwg.mxu0
    %v1796 = vsel %vm54, %v1777, 0
    %v1799 = vsel %vm54, %v1782, 0
    %v1802 = vsel %vm54, %v1787, 0
    %v1805 = vsel %vm54, %v1792, 0
    %1807 = vmatprep.subr.mxu0 0.0
    %1808 = vmatpush1.msra.mxu0 1.0
    %1809 = vmatprep.subr.mxu0 0.0
    %1810 = vmatpush1.msra.mxu0 1.0
    %1811 = vmatprep.subr.mxu0 0.0
    %1812 = vmatpush1.msra.mxu0 1.0
    %1813 = vmatprep.subr.mxu0 0.0
    %1814 = vmatpush1.msra.mxu0 1.0
    %1815 = vmatprep.subr.mxu0 0.0
    %1816 = vmatpush1.msra.mxu0 0.0
    %1817 = vmatprep.subr.mxu0 0.0
    %1818 = vmatpush1.msra.mxu0 0.0
    %1819 = vmatprep.subr.mxu0 0.0
    %1820 = vmatpush1.msra.mxu0 0.0
    %1821 = vmatprep.subr.mxu0 0.0
    %1822 = vmatpush1.msra.mxu0 0.0
    %1823 = vmatprep.subr.mxu0 0.0
    %1824 = vmatpush1.msra.mxu0 0.0
    %1825 = vmatprep.subr.mxu0 0.0
    %1826 = vmatpush1.msra.mxu0 0.0
    %1827 = vmatprep.subr.mxu0 0.0
    %1828 = vmatpush1.msra.mxu0 0.0
    %1829 = vmatprep.subr.mxu0 0.0
    %1830 = vmatpush1.msra.mxu0 0.0
    %1831 = vmatprep.subr.mxu0 0.0
    %1832 = vmatpush1.msra.mxu0 0.0
    %1833 = vmatprep.subr.mxu0 0.0
    %1834 = vmatpush1.msra.mxu0 0.0
    %1835 = vmatprep.subr.mxu0 0.0
    %1836 = vmatpush1.msra.mxu0 0.0
    %1837 = vmatprep.subr.mxu0 0.0
    %1838 = vmatpush1.msra.mxu0 0.0
    %1839 = vmatprep.subr.mxu0 0.0
    %1840 = vmatpush1.msra.mxu0 0.0
    %1841 = vmatprep.subr.mxu0 0.0
    %1842 = vmatpush1.msra.mxu0 0.0
    %1843 = vmatprep.subr.mxu0 0.0
    %1844 = vmatpush1.msra.mxu0 0.0
    %1845 = vmatprep.subr.mxu0 0.0
    %1846 = vmatpush1.msra.mxu0 0.0
    %1847 = vmatprep.subr.mxu0 0.0
    %1848 = vmatpush1.msra.mxu0 0.0
    %1849 = vmatprep.subr.mxu0 0.0
    %1850 = vmatpush1.msra.mxu0 0.0
    %1851 = vmatprep.subr.mxu0 0.0
    %1852 = vmatpush1.msra.mxu0 0.0
    %1853 = vmatprep.subr.mxu0 0.0
    %1854 = vmatpush1.msra.mxu0 0.0
    %1855 = vmatprep.subr.mxu0 0.0
    %1856 = vmatpush1.msra.mxu0 0.0
    %1857 = vmatprep.subr.mxu0 0.0
    %1858 = vmatpush1.msra.mxu0 0.0
    %1859 = vmatprep.subr.mxu0 0.0
    %1860 = vmatpush1.msra.mxu0 0.0
    %1861 = vmatprep.subr.mxu0 0.0
    %1862 = vmatpush1.msra.mxu0 0.0
    %1863 = vmatprep.subr.mxu0 0.0
    %1864 = vmatpush1.msra.mxu0 0.0
    %1865 = vmatprep.subr.mxu0 0.0
    %1866 = vmatpush1.msra.mxu0 0.0
    %1867 = vmatprep.subr.mxu0 0.0
    %1868 = vmatpush1.msra.mxu0 0.0
    %1869 = vmatprep.subr.mxu0 0.0
    %1870 = vmatpush1.msra.mxu0 0.0
    %1871 = vmatprep.mubr.f32.mxu0 0.0
    %1872 = vmatmul.mubr.f32.gmra.mrb[0].mxu0 %v1796
    %v1873 = vpop.f32.mrb[0].mxu0
    %v1874 = vadd.f32 0.0, %v1873
    %v1875 = vpop.f32.mrb[0].mxu0
    %1876 = vmatprep.mubr.f32.mxu0 0.0
    %1877 = vmatmul.mubr.f32.gmra.mrb[0].mxu0 %v1799
    %v1878 = vpop.f32.mrb[0].mxu0
    %v1879 = vadd.f32 0.0, %v1878
    %v1880 = vpop.f32.mrb[0].mxu0
    %1881 = vmatprep.mubr.f32.mxu0 0.0
    %1882 = vmatmul.mubr.f32.gmra.mrb[0].mxu0 %v1802
    %v1883 = vpop.f32.mrb[0].mxu0
    %v1884 = vadd.f32 0.0, %v1883
    %v1885 = vpop.f32.mrb[0].mxu0
    %1886 = vmatprep.mubr.f32.mxu0 0.0
    %1887 = vmatmul.mubr.f32.gmra.mrb[0].mxu0 %v1805
    %v1888 = vpop.f32.mrb[0].mxu0
    %v1889 = vadd.f32 0.0, %v1888
    %v1890 = vpop.f32.mrb[0].mxu0
    %1891 = vdwg.mxu0
    %v1892 = vmul.f32 %v1874, 0.03125
    %v1893 = vmul.f32 %v1879, 0.03125
    %v1894 = vmul.f32 %v1884, 0.03125
    %v1895 = vmul.f32 %v1889, 0.03125
    %1897 = vset.pattern.permute.xlu0 0
    %1898 = vperm.xlu0 %1897, %v1892
    %v1899 = vpop.permute.xlu0 %1898
    %1902 = vset.pattern.permute.xlu0 0
    %1903 = vperm.xlu0 %1902, %v1893
    %v1904 = vpop.permute.xlu0 %1903
    %1907 = vset.pattern.permute.xlu0 0
    %1908 = vperm.xlu0 %1907, %v1894
    %v1909 = vpop.permute.xlu0 %1908
    %1912 = vset.pattern.permute.xlu0 0
    %1913 = vperm.xlu0 %1912, %v1895
    %v1914 = vpop.permute.xlu0 %1913
    %v1916 = vsub.f32 %v1777, %v1899
    %v1917 = vsub.f32 %v1782, %v1904
    %v1918 = vsub.f32 %v1787, %v1909
    %v1919 = vsub.f32 %v1792, %v1914
    %v1920 = vmul.f32 %v1916, %v1916
    %v1921 = vmul.f32 %v1917, %v1917
    %v1922 = vmul.f32 %v1918, %v1918
    %v1923 = vmul.f32 %v1919, %v1919
    %v1925 = vsel %vm54, %v1920, 0
    %v1928 = vsel %vm54, %v1921, 0
    %v1931 = vsel %vm54, %v1922, 0
    %v1934 = vsel %vm54, %v1923, 0
    %1936 = vmatprep.subr.mxu0 0.0
    %1937 = vmatpush1.msra.mxu0 1.0
    %1938 = vmatprep.subr.mxu0 0.0
    %1939 = vmatpush1.msra.mxu0 1.0
    %1940 = vmatprep.subr.mxu0 0.0
    %1941 = vmatpush1.msra.mxu0 1.0
    %1942 = vmatprep.subr.mxu0 0.0
    %1943 = vmatpush1.msra.mxu0 1.0
    %1944 = vmatprep.subr.mxu0 0.0
    %1945 = vmatpush1.msra.mxu0 0.0
    %1946 = vmatprep.subr.mxu0 0.0
    %1947 = vmatpush1.msra.mxu0 0.0
    %1948 = vmatprep.subr.mxu0 0.0
    %1949 = vmatpush1.msra.mxu0 0.0
    %1950 = vmatprep.subr.mxu0 0.0
    %1951 = vmatpush1.msra.mxu0 0.0
    %1952 = vmatprep.subr.mxu0 0.0
    %1953 = vmatpush1.msra.mxu0 0.0
    %1954 = vmatprep.subr.mxu0 0.0
    %1955 = vmatpush1.msra.mxu0 0.0
    %1956 = vmatprep.subr.mxu0 0.0
    %1957 = vmatpush1.msra.mxu0 0.0
    %1958 = vmatprep.subr.mxu0 0.0
    %1959 = vmatpush1.msra.mxu0 0.0
    %1960 = vmatprep.subr.mxu0 0.0
    %1961 = vmatpush1.msra.mxu0 0.0
    %1962 = vmatprep.subr.mxu0 0.0
    %1963 = vmatpush1.msra.mxu0 0.0
    %1964 = vmatprep.subr.mxu0 0.0
    %1965 = vmatpush1.msra.mxu0 0.0
    %1966 = vmatprep.subr.mxu0 0.0
    %1967 = vmatpush1.msra.mxu0 0.0
    %1968 = vmatprep.subr.mxu0 0.0
    %1969 = vmatpush1.msra.mxu0 0.0
    %1970 = vmatprep.subr.mxu0 0.0
    %1971 = vmatpush1.msra.mxu0 0.0
    %1972 = vmatprep.subr.mxu0 0.0
    %1973 = vmatpush1.msra.mxu0 0.0
    %1974 = vmatprep.subr.mxu0 0.0
    %1975 = vmatpush1.msra.mxu0 0.0
    %1976 = vmatprep.subr.mxu0 0.0
    %1977 = vmatpush1.msra.mxu0 0.0
    %1978 = vmatprep.subr.mxu0 0.0
    %1979 = vmatpush1.msra.mxu0 0.0
    %1980 = vmatprep.subr.mxu0 0.0
    %1981 = vmatpush1.msra.mxu0 0.0
    %1982 = vmatprep.subr.mxu0 0.0
    %1983 = vmatpush1.msra.mxu0 0.0
    %1984 = vmatprep.subr.mxu0 0.0
    %1985 = vmatpush1.msra.mxu0 0.0
    %1986 = vmatprep.subr.mxu0 0.0
    %1987 = vmatpush1.msra.mxu0 0.0
    %1988 = vmatprep.subr.mxu0 0.0
    %1989 = vmatpush1.msra.mxu0 0.0
    %1990 = vmatprep.subr.mxu0 0.0
    %1991 = vmatpush1.msra.mxu0 0.0
    %1992 = vmatprep.subr.mxu0 0.0
    %1993 = vmatpush1.msra.mxu0 0.0
    %1994 = vmatprep.subr.mxu0 0.0
    %1995 = vmatpush1.msra.mxu0 0.0
    %1996 = vmatprep.subr.mxu0 0.0
    %1997 = vmatpush1.msra.mxu0 0.0
    %1998 = vmatprep.subr.mxu0 0.0
    %1999 = vmatpush1.msra.mxu0 0.0
    %2000 = vmatprep.mubr.f32.mxu0 0.0
    %2001 = vmatmul.mubr.f32.gmra.mrb[0].mxu0 %v1925
    %v2002 = vpop.f32.mrb[0].mxu0
    %v2003 = vadd.f32 0.0, %v2002
    %v2004 = vpop.f32.mrb[0].mxu0
    %2005 = vmatprep.mubr.f32.mxu0 0.0
    %2006 = vmatmul.mubr.f32.gmra.mrb[0].mxu0 %v1928
    %v2007 = vpop.f32.mrb[0].mxu0
    %v2008 = vadd.f32 0.0, %v2007
    %v2009 = vpop.f32.mrb[0].mxu0
    %2010 = vmatprep.mubr.f32.mxu0 0.0
    %2011 = vmatmul.mubr.f32.gmra.mrb[0].mxu0 %v1931
    %v2012 = vpop.f32.mrb[0].mxu0
    %v2013 = vadd.f32 0.0, %v2012
    %v2014 = vpop.f32.mrb[0].mxu0
    %2015 = vmatprep.mubr.f32.mxu0 0.0
    %2016 = vmatmul.mubr.f32.gmra.mrb[0].mxu0 %v1934
    %v2017 = vpop.f32.mrb[0].mxu0
    %v2018 = vadd.f32 0.0, %v2017
    %v2019 = vpop.f32.mrb[0].mxu0
    %2020 = vdwg.mxu0
    %v2021 = vmul.f32 %v2003, 0.03125
    %v2022 = vmul.f32 %v2008, 0.03125
    %v2023 = vmul.f32 %v2013, 0.03125
    %v2024 = vmul.f32 %v2018, 0.03125
    %v2025 = vadd.f32 %v2021, 1e-05
    %v2026 = vadd.f32 %v2022, 1e-05
    %v2027 = vadd.f32 %v2023, 1e-05
    %v2028 = vadd.f32 %v2024, 1e-05
    %v2029 = vrsqrt.pop %v2025
    %v2030 = vrsqrt.pop %v2026
    %v2031 = vrsqrt.pop %v2027
    %v2032 = vrsqrt.pop %v2028
    %2037 = vrot.lane.b32.xlu0 %v2029, 97
    %v2038 = vpop.permute.xlu0 %2037
    %2039 = vrot.lane.b32.xlu0 %v2030, 97
    %v2040 = vpop.permute.xlu0 %2039
    %2041 = vrot.lane.b32.xlu0 %v2031, 97
    %v2042 = vpop.permute.xlu0 %2041
    %2043 = vrot.lane.b32.xlu0 %v2032, 97
    %v2044 = vpop.permute.xlu0 %2043
    %v2049 = vmul.f32 %v1618, %v2038
    %v2050 = vmul.f32 %v1619, %v2040
    %v2051 = vmul.f32 %v1620, %v2042
    %v2052 = vmul.f32 %v1621, %v2044
    %2054 = vset.pattern.permute.xlu0 97
    %2055 = vperm.xlu0 %2054, %v2049
    %v2056 = vpop.permute.xlu0 %2055
    %2059 = vset.pattern.permute.xlu0 97
    %2060 = vperm.xlu0 %2059, %v2050
    %v2061 = vpop.permute.xlu0 %2060
    %2064 = vset.pattern.permute.xlu0 97
    %2065 = vperm.xlu0 %2064, %v2051
    %v2066 = vpop.permute.xlu0 %2065
    %2069 = vset.pattern.permute.xlu0 97
    %2070 = vperm.xlu0 %2069, %v2052
    %v2071 = vpop.permute.xlu0 %2070
    %v2073 = vmul.f32 %v1916, %v2056
    %v2074 = vmul.f32 %v1917, %v2061
    %v2075 = vmul.f32 %v1918, %v2066
    %v2076 = vmul.f32 %v1919, %v2071
    %2077 = vset.pattern.permute.xlu0 98
    %2078 = vperm.xlu0 %2077, %v1618
    %v2079 = vpop.permute.xlu0 %2078
    %2081 = vset.pattern.permute.xlu0 98
    %2082 = vperm.xlu0 %2081, %v1619
    %v2083 = vpop.permute.xlu0 %2082
    %2085 = vset.pattern.permute.xlu0 98
    %2086 = vperm.xlu0 %2085, %v1620
    %v2087 = vpop.permute.xlu0 %2086
    %2089 = vset.pattern.permute.xlu0 98
    %2090 = vperm.xlu0 %2089, %v1621
    %v2091 = vpop.permute.xlu0 %2090
    %v2093 = vadd.f32 %v2073, %v2079
    %v2094 = vadd.f32 %v2074, %v2083
    %v2095 = vadd.f32 %v2075, %v2087
    %v2096 = vadd.f32 %v2076, %v2091
    %v2097 = vmul.f32 %v2093, 0.01
    %v2098 = vmul.f32 %v2094, 0.01
    %v2099 = vmul.f32 %v2095, 0.01
    %v2100 = vmul.f32 %v2096, 0.01
    %v2101 = vmax.f32 %v2093, %v2097
    %v2102 = vmax.f32 %v2094, %v2098
    %v2103 = vmax.f32 %v2095, %v2099
    %v2104 = vmax.f32 %v2096, %v2100
    %v2105 = vadd.f32 %v1614, %v2101
    %v2106 = vadd.f32 %v1615, %v2102
    %v2107 = vadd.f32 %v1616, %v2103
    %v2108 = vadd.f32 %v1617, %v2104
    %v2110 = vsel %vm54, %v2105, 0
    %v2113 = vsel %vm54, %v2106, 0
    %v2116 = vsel %vm54, %v2107, 0
    %v2119 = vsel %vm54, %v2108, 0
    %2121 = vmatprep.subr.mxu0 0.0
    %2122 = vmatpush1.msra.mxu0 %v47
    %2123 = vmatprep.subr.mxu0 0.0
    %2124 = vmatpush1.msra.mxu0 %v48
    %2125 = vmatprep.subr.mxu0 0.0
    %2126 = vmatpush1.msra.mxu0 %v49
    %2127 = vmatprep.subr.mxu0 0.0
    %2128 = vmatpush1.msra.mxu0 %v50
    %2129 = vmatprep.subr.mxu0 0.0
    %2130 = vmatpush1.msra.mxu0 0.0
    %2131 = vmatprep.subr.mxu0 0.0
    %2132 = vmatpush1.msra.mxu0 0.0
    %2133 = vmatprep.subr.mxu0 0.0
    %2134 = vmatpush1.msra.mxu0 0.0
    %2135 = vmatprep.subr.mxu0 0.0
    %2136 = vmatpush1.msra.mxu0 0.0
    %2137 = vmatprep.subr.mxu0 0.0
    %2138 = vmatpush1.msra.mxu0 0.0
    %2139 = vmatprep.subr.mxu0 0.0
    %2140 = vmatpush1.msra.mxu0 0.0
    %2141 = vmatprep.subr.mxu0 0.0
    %2142 = vmatpush1.msra.mxu0 0.0
    %2143 = vmatprep.subr.mxu0 0.0
    %2144 = vmatpush1.msra.mxu0 0.0
    %2145 = vmatprep.subr.mxu0 0.0
    %2146 = vmatpush1.msra.mxu0 0.0
    %2147 = vmatprep.subr.mxu0 0.0
    %2148 = vmatpush1.msra.mxu0 0.0
    %2149 = vmatprep.subr.mxu0 0.0
    %2150 = vmatpush1.msra.mxu0 0.0
    %2151 = vmatprep.subr.mxu0 0.0
    %2152 = vmatpush1.msra.mxu0 0.0
    %2153 = vmatprep.subr.mxu0 0.0
    %2154 = vmatpush1.msra.mxu0 0.0
    %2155 = vmatprep.subr.mxu0 0.0
    %2156 = vmatpush1.msra.mxu0 0.0
    %2157 = vmatprep.subr.mxu0 0.0
    %2158 = vmatpush1.msra.mxu0 0.0
    %2159 = vmatprep.subr.mxu0 0.0
    %2160 = vmatpush1.msra.mxu0 0.0
    %2161 = vmatprep.subr.mxu0 0.0
    %2162 = vmatpush1.msra.mxu0 0.0
    %2163 = vmatprep.subr.mxu0 0.0
    %2164 = vmatpush1.msra.mxu0 0.0
    %2165 = vmatprep.subr.mxu0 0.0
    %2166 = vmatpush1.msra.mxu0 0.0
    %2167 = vmatprep.subr.mxu0 0.0
    %2168 = vmatpush1.msra.mxu0 0.0
    %2169 = vmatprep.subr.mxu0 0.0
    %2170 = vmatpush1.msra.mxu0 0.0
    %2171 = vmatprep.subr.mxu0 0.0
    %2172 = vmatpush1.msra.mxu0 0.0
    %2173 = vmatprep.subr.mxu0 0.0
    %2174 = vmatpush1.msra.mxu0 0.0
    %2175 = vmatprep.subr.mxu0 0.0
    %2176 = vmatpush1.msra.mxu0 0.0
    %2177 = vmatprep.subr.mxu0 0.0
    %2178 = vmatpush1.msra.mxu0 0.0
    %2179 = vmatprep.subr.mxu0 0.0
    %2180 = vmatpush1.msra.mxu0 0.0
    %2181 = vmatprep.subr.mxu0 0.0
    %2182 = vmatpush1.msra.mxu0 0.0
    %2183 = vmatprep.subr.mxu0 0.0
    %2184 = vmatpush1.msra.mxu0 0.0
    %2185 = vmatprep.mubr.f32.mxu0 0.0
    %2186 = vmatmul.mubr.f32.gmra.mrb[0].mxu0 %v2110
    %v2187 = vpop.f32.mrb[0].mxu0
    %v2188 = vadd.f32 0.0, %v2187
    %v2189 = vpop.f32.mrb[0].mxu0
    %2190 = vmatprep.mubr.f32.mxu0 0.0
    %2191 = vmatmul.mubr.f32.gmra.mrb[0].mxu0 %v2113
    %v2192 = vpop.f32.mrb[0].mxu0
    %v2193 = vadd.f32 0.0, %v2192
    %v2194 = vpop.f32.mrb[0].mxu0
    %2195 = vmatprep.mubr.f32.mxu0 0.0
    %2196 = vmatmul.mubr.f32.gmra.mrb[0].mxu0 %v2116
    %v2197 = vpop.f32.mrb[0].mxu0
    %v2198 = vadd.f32 0.0, %v2197
    %v2199 = vpop.f32.mrb[0].mxu0
    %2200 = vmatprep.mubr.f32.mxu0 0.0
    %2201 = vmatmul.mubr.f32.gmra.mrb[0].mxu0 %v2119
    %v2202 = vpop.f32.mrb[0].mxu0
    %v2203 = vadd.f32 0.0, %v2202
    %v2204 = vpop.f32.mrb[0].mxu0
    %2205 = vdwg.mxu0
    %v2206 = vmul.f32 %v2188, 0.0625
    %v2207 = vmul.f32 %v2193, 0.0625
    %v2208 = vmul.f32 %v2198, 0.0625
    %v2209 = vmul.f32 %v2203, 0.0625
    %2211 = vset.pattern.permute.xlu0 1
    %2212 = vperm.xlu0 %2211, %v2206
    %v2213 = vpop.permute.xlu0 %2212
    %2216 = vset.pattern.permute.xlu0 1
    %2217 = vperm.xlu0 %2216, %v2207
    %v2218 = vpop.permute.xlu0 %2217
    %2221 = vset.pattern.permute.xlu0 1
    %2222 = vperm.xlu0 %2221, %v2208
    %v2223 = vpop.permute.xlu0 %2222
    %2226 = vset.pattern.permute.xlu0 1
    %2227 = vperm.xlu0 %2226, %v2209
    %v2228 = vpop.permute.xlu0 %2227
    %2230 = vset.pattern.permute.xlu0 0
    %2231 = vperm.xlu0 %2230, %v2206
    %v2232 = vpop.permute.xlu0 %2231
    %2234 = vset.pattern.permute.xlu0 0
    %2235 = vperm.xlu0 %2234, %v2207
    %v2236 = vpop.permute.xlu0 %2235
    %2238 = vset.pattern.permute.xlu0 0
    %2239 = vperm.xlu0 %2238, %v2208
    %v2240 = vpop.permute.xlu0 %2239
    %2242 = vset.pattern.permute.xlu0 0
    %2243 = vperm.xlu0 %2242, %v2209
    %v2244 = vpop.permute.xlu0 %2243
    %v2246 = vsel %vm131, %v2213, %v2232
    %v2247 = vsel %vm131, %v2218, %v2236
    %v2248 = vsel %vm131, %v2223, %v2240
    %v2249 = vsel %vm131, %v2228, %v2244
    %v2250 = vsub.f32 %v2105, %v2246
    %v2251 = vsub.f32 %v2106, %v2247
    %v2252 = vsub.f32 %v2107, %v2248
    %v2253 = vsub.f32 %v2108, %v2249
    %v2254 = vmul.f32 %v2250, %v2250
    %v2255 = vmul.f32 %v2251, %v2251
    %v2256 = vmul.f32 %v2252, %v2252
    %v2257 = vmul.f32 %v2253, %v2253
    %v2259 = vsel %vm54, %v2254, 0
    %v2262 = vsel %vm54, %v2255, 0
    %v2265 = vsel %vm54, %v2256, 0
    %v2268 = vsel %vm54, %v2257, 0
    %2270 = vmatprep.subr.mxu0 0.0
    %2271 = vmatpush1.msra.mxu0 %v47
    %2272 = vmatprep.subr.mxu0 0.0
    %2273 = vmatpush1.msra.mxu0 %v48
    %2274 = vmatprep.subr.mxu0 0.0
    %2275 = vmatpush1.msra.mxu0 %v49
    %2276 = vmatprep.subr.mxu0 0.0
    %2277 = vmatpush1.msra.mxu0 %v50
    %2278 = vmatprep.subr.mxu0 0.0
    %2279 = vmatpush1.msra.mxu0 0.0
    %2280 = vmatprep.subr.mxu0 0.0
    %2281 = vmatpush1.msra.mxu0 0.0
    %2282 = vmatprep.subr.mxu0 0.0
    %2283 = vmatpush1.msra.mxu0 0.0
    %2284 = vmatprep.subr.mxu0 0.0
    %2285 = vmatpush1.msra.mxu0 0.0
    %2286 = vmatprep.subr.mxu0 0.0
    %2287 = vmatpush1.msra.mxu0 0.0
    %2288 = vmatprep.subr.mxu0 0.0
    %2289 = vmatpush1.msra.mxu0 0.0
    %2290 = vmatprep.subr.mxu0 0.0
    %2291 = vmatpush1.msra.mxu0 0.0
    %2292 = vmatprep.subr.mxu0 0.0
    %2293 = vmatpush1.msra.mxu0 0.0
    %2294 = vmatprep.subr.mxu0 0.0
    %2295 = vmatpush1.msra.mxu0 0.0
    %2296 = vmatprep.subr.mxu0 0.0
    %2297 = vmatpush1.msra.mxu0 0.0
    %2298 = vmatprep.subr.mxu0 0.0
    %2299 = vmatpush1.msra.mxu0 0.0
    %2300 = vmatprep.subr.mxu0 0.0
    %2301 = vmatpush1.msra.mxu0 0.0
    %2302 = vmatprep.subr.mxu0 0.0
    %2303 = vmatpush1.msra.mxu0 0.0
    %2304 = vmatprep.subr.mxu0 0.0
    %2305 = vmatpush1.msra.mxu0 0.0
    %2306 = vmatprep.subr.mxu0 0.0
    %2307 = vmatpush1.msra.mxu0 0.0
    %2308 = vmatprep.subr.mxu0 0.0
    %2309 = vmatpush1.msra.mxu0 0.0
    %2310 = vmatprep.subr.mxu0 0.0
    %2311 = vmatpush1.msra.mxu0 0.0
    %2312 = vmatprep.subr.mxu0 0.0
    %2313 = vmatpush1.msra.mxu0 0.0
    %2314 = vmatprep.subr.mxu0 0.0
    %2315 = vmatpush1.msra.mxu0 0.0
    %2316 = vmatprep.subr.mxu0 0.0
    %2317 = vmatpush1.msra.mxu0 0.0
    %2318 = vmatprep.subr.mxu0 0.0
    %2319 = vmatpush1.msra.mxu0 0.0
    %2320 = vmatprep.subr.mxu0 0.0
    %2321 = vmatpush1.msra.mxu0 0.0
    %2322 = vmatprep.subr.mxu0 0.0
    %2323 = vmatpush1.msra.mxu0 0.0
    %2324 = vmatprep.subr.mxu0 0.0
    %2325 = vmatpush1.msra.mxu0 0.0
    %2326 = vmatprep.subr.mxu0 0.0
    %2327 = vmatpush1.msra.mxu0 0.0
    %2328 = vmatprep.subr.mxu0 0.0
    %2329 = vmatpush1.msra.mxu0 0.0
    %2330 = vmatprep.subr.mxu0 0.0
    %2331 = vmatpush1.msra.mxu0 0.0
    %2332 = vmatprep.subr.mxu0 0.0
    %2333 = vmatpush1.msra.mxu0 0.0
    %2334 = vmatprep.mubr.f32.mxu0 0.0
    %2335 = vmatmul.mubr.f32.gmra.mrb[0].mxu0 %v2259
    %v2336 = vpop.f32.mrb[0].mxu0
    %v2337 = vadd.f32 0.0, %v2336
    %v2338 = vpop.f32.mrb[0].mxu0
    %2339 = vmatprep.mubr.f32.mxu0 0.0
    %2340 = vmatmul.mubr.f32.gmra.mrb[0].mxu0 %v2262
    %v2341 = vpop.f32.mrb[0].mxu0
    %v2342 = vadd.f32 0.0, %v2341
    %v2343 = vpop.f32.mrb[0].mxu0
    %2344 = vmatprep.mubr.f32.mxu0 0.0
    %2345 = vmatmul.mubr.f32.gmra.mrb[0].mxu0 %v2265
    %v2346 = vpop.f32.mrb[0].mxu0
    %v2347 = vadd.f32 0.0, %v2346
    %v2348 = vpop.f32.mrb[0].mxu0
    %2349 = vmatprep.mubr.f32.mxu0 0.0
    %2350 = vmatmul.mubr.f32.gmra.mrb[0].mxu0 %v2268
    %v2351 = vpop.f32.mrb[0].mxu0
    %v2352 = vadd.f32 0.0, %v2351
    %v2353 = vpop.f32.mrb[0].mxu0
    %2354 = vdwg.mxu0
    %v2355 = vmul.f32 %v2337, 0.06666667
    %v2356 = vmul.f32 %v2342, 0.06666667
    %v2357 = vmul.f32 %v2347, 0.06666667
    %v2358 = vmul.f32 %v2352, 0.06666667
    %s2359 = scalar_lea.vmem %s1, 64
    %v2360 = vld [vmem:[%s2359] sm:$0xff]
    %v2361 = vld [vmem:[%s2359 + $0x8] sm:$0xff]
    %v2362 = vld [vmem:[%s2359 + $0x10] sm:$0xff]
    %v2363 = vld [vmem:[%s2359 + $0x18] sm:$0xff]
    %s2364 = scalar_lea.vmem %s1, 96
    %v2365 = vld [vmem:[%s2364] sm:$0xff]
    %v2366 = vld [vmem:[%s2364 + $0x8] sm:$0xff]
    %v2367 = vld [vmem:[%s2364 + $0x10] sm:$0xff]
    %v2368 = vld [vmem:[%s2364 + $0x18] sm:$0xff]
    %v2369 = vadd.f32 %v2355, 1e-05
    %v2370 = vadd.f32 %v2356, 1e-05
    %v2371 = vadd.f32 %v2357, 1e-05
    %v2372 = vadd.f32 %v2358, 1e-05
    %v2373 = vrsqrt.pop %v2369
    %v2374 = vrsqrt.pop %v2370
    %v2375 = vrsqrt.pop %v2371
    %v2376 = vrsqrt.pop %v2372
    %v2377 = vmul.f32 %v2365, %v2373
    %v2378 = vmul.f32 %v2366, %v2374
    %v2379 = vmul.f32 %v2367, %v2375
    %v2380 = vmul.f32 %v2368, %v2376
    %2382 = vset.pattern.permute.xlu0 1
    %2383 = vperm.xlu0 %2382, %v2377
    %v2384 = vpop.permute.xlu0 %2383
    %2387 = vset.pattern.permute.xlu0 1
    %2388 = vperm.xlu0 %2387, %v2378
    %v2389 = vpop.permute.xlu0 %2388
    %2392 = vset.pattern.permute.xlu0 1
    %2393 = vperm.xlu0 %2392, %v2379
    %v2394 = vpop.permute.xlu0 %2393
    %2397 = vset.pattern.permute.xlu0 1
    %2398 = vperm.xlu0 %2397, %v2380
    %v2399 = vpop.permute.xlu0 %2398
    %2401 = vset.pattern.permute.xlu0 0
    %2402 = vperm.xlu0 %2401, %v2377
    %v2403 = vpop.permute.xlu0 %2402
    %2405 = vset.pattern.permute.xlu0 0
    %2406 = vperm.xlu0 %2405, %v2378
    %v2407 = vpop.permute.xlu0 %2406
    %2409 = vset.pattern.permute.xlu0 0
    %2410 = vperm.xlu0 %2409, %v2379
    %v2411 = vpop.permute.xlu0 %2410
    %2413 = vset.pattern.permute.xlu0 0
    %2414 = vperm.xlu0 %2413, %v2380
    %v2415 = vpop.permute.xlu0 %2414
    %v2417 = vsel %vm131, %v2384, %v2403
    %v2418 = vsel %vm131, %v2389, %v2407
    %v2419 = vsel %vm131, %v2394, %v2411
    %v2420 = vsel %vm131, %v2399, %v2415
    %v2421 = vmul.f32 %v2250, %v2417
    %v2422 = vmul.f32 %v2251, %v2418
    %v2423 = vmul.f32 %v2252, %v2419
    %v2424 = vmul.f32 %v2253, %v2420
    %2426 = vset.pattern.permute.xlu0 1
    %2427 = vperm.xlu0 %2426, %v2360
    %v2428 = vpop.permute.xlu0 %2427
    %2431 = vset.pattern.permute.xlu0 1
    %2432 = vperm.xlu0 %2431, %v2361
    %v2433 = vpop.permute.xlu0 %2432
    %2436 = vset.pattern.permute.xlu0 1
    %2437 = vperm.xlu0 %2436, %v2362
    %v2438 = vpop.permute.xlu0 %2437
    %2441 = vset.pattern.permute.xlu0 1
    %2442 = vperm.xlu0 %2441, %v2363
    %v2443 = vpop.permute.xlu0 %2442
    %2445 = vset.pattern.permute.xlu0 0
    %2446 = vperm.xlu0 %2445, %v2360
    %v2447 = vpop.permute.xlu0 %2446
    %2449 = vset.pattern.permute.xlu0 0
    %2450 = vperm.xlu0 %2449, %v2361
    %v2451 = vpop.permute.xlu0 %2450
    %2453 = vset.pattern.permute.xlu0 0
    %2454 = vperm.xlu0 %2453, %v2362
    %v2455 = vpop.permute.xlu0 %2454
    %2457 = vset.pattern.permute.xlu0 0
    %2458 = vperm.xlu0 %2457, %v2363
    %v2459 = vpop.permute.xlu0 %2458
    %v2461 = vsel %vm131, %v2428, %v2447
    %v2462 = vsel %vm131, %v2433, %v2451
    %v2463 = vsel %vm131, %v2438, %v2455
    %v2464 = vsel %vm131, %v2443, %v2459
    %v2465 = vadd.f32 %v2421, %v2461
    %v2466 = vadd.f32 %v2422, %v2462
    %v2467 = vadd.f32 %v2423, %v2463
    %v2468 = vadd.f32 %v2424, %v2464
    %v2469 = vld [vmem:[%s2 + $0x60] sm:$0xff]
    %v2470 = vld [vmem:[%s2 + $0x68] sm:$0xff]
    %v2471 = vld [vmem:[%s2 + $0x70] sm:$0xff]
    %v2472 = vld [vmem:[%s2 + $0x78] sm:$0xff]
    %v2473 = vld [vmem:[%s2 + $0x80] sm:$0xff]
    %v2474 = vld [vmem:[%s2 + $0x88] sm:$0xff]
    %v2475 = vld [vmem:[%s2 + $0x90] sm:$0xff]
    %v2476 = vld [vmem:[%s2 + $0x98] sm:$0xff]
    %v2477 = vld [vmem:[%s2 + $0xa0] sm:$0xff]
    %v2478 = vld [vmem:[%s2 + $0xa8] sm:$0xff]
    %v2479 = vld [vmem:[%s2 + $0xb0] sm:$0xff]
    %v2480 = vld [vmem:[%s2 + $0xb8] sm:$0xff]
    %v2481 = vld [vmem:[%s2 + $0xc0] sm:$0xff]
    %v2482 = vld [vmem:[%s2 + $0xc8] sm:$0xff]
    %v2483 = vld [vmem:[%s2 + $0xd0] sm:$0xff]
    %v2484 = vld [vmem:[%s2 + $0xd8] sm:$0xff]
    %v2485 = vld [vmem:[%s2 + $0xe0] sm:$0xff]
    %v2486 = vld [vmem:[%s2 + $0xe8] sm:$0xff]
    %v2487 = vld [vmem:[%s2 + $0xf0] sm:$0xff]
    %v2488 = vld [vmem:[%s2 + $0xf8] sm:$0xff]
    %v2489 = vld [vmem:[%s2 + $0x100] sm:$0xff]
    %v2490 = vld [vmem:[%s2 + $0x108] sm:$0xff]
    %v2491 = vld [vmem:[%s2 + $0x110] sm:$0xff]
    %v2492 = vld [vmem:[%s2 + $0x118] sm:$0xff]
    %v2493 = vld [vmem:[%s2 + $0x120] sm:$0xff]
    %v2494 = vld [vmem:[%s2 + $0x128] sm:$0xff]
    %v2495 = vld [vmem:[%s2 + $0x130] sm:$0xff]
    %v2496 = vld [vmem:[%s2 + $0x138] sm:$0xff]
    %v2497 = vld [vmem:[%s2 + $0x140] sm:$0xff]
    %v2498 = vld [vmem:[%s2 + $0x148] sm:$0xff]
    %v2499 = vld [vmem:[%s2 + $0x150] sm:$0xff]
    %v2500 = vld [vmem:[%s2 + $0x158] sm:$0xff]
    %v2501 = vld [vmem:[%s2 + $0x160] sm:$0xff]
    %v2502 = vld [vmem:[%s2 + $0x168] sm:$0xff]
    %v2503 = vld [vmem:[%s2 + $0x170] sm:$0xff]
    %v2504 = vld [vmem:[%s2 + $0x178] sm:$0xff]
    %v2505 = vld [vmem:[%s2 + $0x180] sm:$0xff]
    %v2506 = vld [vmem:[%s2 + $0x188] sm:$0xff]
    %v2507 = vld [vmem:[%s2 + $0x190] sm:$0xff]
    %v2508 = vld [vmem:[%s2 + $0x198] sm:$0xff]
    %v2509 = vld [vmem:[%s2 + $0x1a0] sm:$0xff]
    %v2510 = vld [vmem:[%s2 + $0x1a8] sm:$0xff]
    %v2511 = vld [vmem:[%s2 + $0x1b0] sm:$0xff]
    %v2512 = vld [vmem:[%s2 + $0x1b8] sm:$0xff]
    %v2513 = vld [vmem:[%s2 + $0x1c0] sm:$0xff]
    %v2514 = vld [vmem:[%s2 + $0x1c8] sm:$0xff]
    %v2515 = vld [vmem:[%s2 + $0x1d0] sm:$0xff]
    %v2516 = vld [vmem:[%s2 + $0x1d8] sm:$0xff]
    %2518 = vset.pattern.permute.xlu0 32
    %2519 = vperm.xlu0 %2518, %v2469
    %v2520 = vpop.permute.xlu0 %2519
    %2523 = vset.pattern.permute.xlu0 32
    %2524 = vperm.xlu0 %2523, %v2470
    %v2525 = vpop.permute.xlu0 %2524
    %2528 = vset.pattern.permute.xlu0 32
    %2529 = vperm.xlu0 %2528, %v2471
    %v2530 = vpop.permute.xlu0 %2529
    %2533 = vset.pattern.permute.xlu0 32
    %2534 = vperm.xlu0 %2533, %v2472
    %v2535 = vpop.permute.xlu0 %2534
    %2538 = vset.pattern.permute.xlu0 32
    %2539 = vperm.xlu0 %2538, %v2473
    %v2540 = vpop.permute.xlu0 %2539
    %2543 = vset.pattern.permute.xlu0 32
    %2544 = vperm.xlu0 %2543, %v2474
    %v2545 = vpop.permute.xlu0 %2544
    %2548 = vset.pattern.permute.xlu0 32
    %2549 = vperm.xlu0 %2548, %v2475
    %v2550 = vpop.permute.xlu0 %2549
    %2553 = vset.pattern.permute.xlu0 32
    %2554 = vperm.xlu0 %2553, %v2476
    %v2555 = vpop.permute.xlu0 %2554
    %2558 = vset.pattern.permute.xlu0 32
    %2559 = vperm.xlu0 %2558, %v2477
    %v2560 = vpop.permute.xlu0 %2559
    %2563 = vset.pattern.permute.xlu0 32
    %2564 = vperm.xlu0 %2563, %v2478
    %v2565 = vpop.permute.xlu0 %2564
    %2568 = vset.pattern.permute.xlu0 32
    %2569 = vperm.xlu0 %2568, %v2479
    %v2570 = vpop.permute.xlu0 %2569
    %2573 = vset.pattern.permute.xlu0 32
    %2574 = vperm.xlu0 %2573, %v2480
    %v2575 = vpop.permute.xlu0 %2574
    %v2577 = vsel %vm54, %v2469, 0
    %v2579 = vsel %vm54, %v2470, 0
    %v2581 = vsel %vm54, %v2471, 0
    %v2583 = vsel %vm54, %v2472, 0
    %v2585 = vsel %vm54, %v2473, 0
    %v2587 = vsel %vm54, %v2474, 0
    %v2589 = vsel %vm54, %v2475, 0
    %v2591 = vsel %vm54, %v2476, 0
    %v2593 = vsel %vm54, %v2477, 0
    %v2595 = vsel %vm54, %v2478, 0
    %v2597 = vsel %vm54, %v2479, 0
    %v2599 = vsel %vm54, %v2480, 0
    %2601 = vmatprep.subr.mxu0 0.0
    %2602 = vmatpush1.msra.mxu0 %v2465
    %2603 = vmatprep.subr.mxu0 0.0
    %2604 = vmatpush1.msra.mxu0 %v2466
    %2605 = vmatprep.subr.mxu0 0.0
    %2606 = vmatpush1.msra.mxu0 %v2467
    %2607 = vmatprep.subr.mxu0 0.0
    %2608 = vmatpush1.msra.mxu0 %v2468
    %2609 = vmatprep.subr.mxu0 0.0
    %2610 = vmatpush1.msra.mxu0 0.0
    %2611 = vmatprep.subr.mxu0 0.0
    %2612 = vmatpush1.msra.mxu0 0.0
    %2613 = vmatprep.subr.mxu0 0.0
    %2614 = vmatpush1.msra.mxu0 0.0
    %2615 = vmatprep.subr.mxu0 0.0
    %2616 = vmatpush1.msra.mxu0 0.0
    %2617 = vmatprep.subr.mxu0 0.0
    %2618 = vmatpush1.msra.mxu0 0.0
    %2619 = vmatprep.subr.mxu0 0.0
    %2620 = vmatpush1.msra.mxu0 0.0
    %2621 = vmatprep.subr.mxu0 0.0
    %2622 = vmatpush1.msra.mxu0 0.0
    %2623 = vmatprep.subr.mxu0 0.0
    %2624 = vmatpush1.msra.mxu0 0.0
    %2625 = vmatprep.subr.mxu0 0.0
    %2626 = vmatpush1.msra.mxu0 0.0
    %2627 = vmatprep.subr.mxu0 0.0
    %2628 = vmatpush1.msra.mxu0 0.0
    %2629 = vmatprep.subr.mxu0 0.0
    %2630 = vmatpush1.msra.mxu0 0.0
    %2631 = vmatprep.subr.mxu0 0.0
    %2632 = vmatpush1.msra.mxu0 0.0
    %2633 = vmatprep.subr.mxu0 0.0
    %2634 = vmatpush1.msra.mxu0 0.0
    %2635 = vmatprep.subr.mxu0 0.0
    %2636 = vmatpush1.msra.mxu0 0.0
    %2637 = vmatprep.subr.mxu0 0.0
    %2638 = vmatpush1.msra.mxu0 0.0
    %2639 = vmatprep.subr.mxu0 0.0
    %2640 = vmatpush1.msra.mxu0 0.0
    %2641 = vmatprep.subr.mxu0 0.0
    %2642 = vmatpush1.msra.mxu0 0.0
    %2643 = vmatprep.subr.mxu0 0.0
    %2644 = vmatpush1.msra.mxu0 0.0
    %2645 = vmatprep.subr.mxu0 0.0
    %2646 = vmatpush1.msra.mxu0 0.0
    %2647 = vmatprep.subr.mxu0 0.0
    %2648 = vmatpush1.msra.mxu0 0.0
    %2649 = vmatprep.subr.mxu0 0.0
    %2650 = vmatpush1.msra.mxu0 0.0
    %2651 = vmatprep.subr.mxu0 0.0
    %2652 = vmatpush1.msra.mxu0 0.0
    %2653 = vmatprep.subr.mxu0 0.0
    %2654 = vmatpush1.msra.mxu0 0.0
    %2655 = vmatprep.subr.mxu0 0.0
    %2656 = vmatpush1.msra.mxu0 0.0
    %2657 = vmatprep.subr.mxu0 0.0
    %2658 = vmatpush1.msra.mxu0 0.0
    %2659 = vmatprep.subr.mxu0 0.0
    %2660 = vmatpush1.msra.mxu0 0.0
    %2661 = vmatprep.subr.mxu0 0.0
    %2662 = vmatpush1.msra.mxu0 0.0
    %2663 = vmatprep.subr.mxu0 0.0
    %2664 = vmatpush1.msra.mxu0 0.0
    %2665 = vmatprep.mubr.f32.mxu0 0.0
    %2666 = vmatmul.mubr.f32.gmra.mrb[0].mxu0 %v2577
    %v2667 = vpop.f32.mrb[0].mxu0
    %v2668 = vadd.f32 %v2520, %v2667
    %v2669 = vpop.f32.mrb[0].mxu0
    %2670 = vmatprep.mubr.f32.mxu0 0.0
    %2671 = vmatmul.mubr.f32.gmra.mrb[0].mxu0 %v2579
    %v2672 = vpop.f32.mrb[0].mxu0
    %v2673 = vadd.f32 %v2525, %v2672
    %v2674 = vpop.f32.mrb[0].mxu0
    %2675 = vmatprep.mubr.f32.mxu0 0.0
    %2676 = vmatmul.mubr.f32.gmra.mrb[0].mxu0 %v2581
    %v2677 = vpop.f32.mrb[0].mxu0
    %v2678 = vadd.f32 %v2530, %v2677
    %v2679 = vpop.f32.mrb[0].mxu0
    %2680 = vmatprep.mubr.f32.mxu0 0.0
    %2681 = vmatmul.mubr.f32.gmra.mrb[0].mxu0 %v2583
    %v2682 = vpop.f32.mrb[0].mxu0
    %v2683 = vadd.f32 %v2535, %v2682
    %v2684 = vpop.f32.mrb[0].mxu0
    %2685 = vmatprep.mubr.f32.mxu0 0.0
    %2686 = vmatmul.mubr.f32.gmra.mrb[0].mxu0 %v2585
    %v2687 = vpop.f32.mrb[0].mxu0
    %v2688 = vadd.f32 %v2540, %v2687
    %v2689 = vpop.f32.mrb[0].mxu0
    %2690 = vmatprep.mubr.f32.mxu0 0.0
    %2691 = vmatmul.mubr.f32.gmra.mrb[0].mxu0 %v2587
    %v2692 = vpop.f32.mrb[0].mxu0
    %v2693 = vadd.f32 %v2545, %v2692
    %v2694 = vpop.f32.mrb[0].mxu0
    %2695 = vmatprep.mubr.f32.mxu0 0.0
    %2696 = vmatmul.mubr.f32.gmra.mrb[0].mxu0 %v2589
    %v2697 = vpop.f32.mrb[0].mxu0
    %v2698 = vadd.f32 %v2550, %v2697
    %v2699 = vpop.f32.mrb[0].mxu0
    %2700 = vmatprep.mubr.f32.mxu0 0.0
    %2701 = vmatmul.mubr.f32.gmra.mrb[0].mxu0 %v2591
    %v2702 = vpop.f32.mrb[0].mxu0
    %v2703 = vadd.f32 %v2555, %v2702
    %v2704 = vpop.f32.mrb[0].mxu0
    %2705 = vmatprep.mubr.f32.mxu0 0.0
    %2706 = vmatmul.mubr.f32.gmra.mrb[0].mxu0 %v2593
    %v2707 = vpop.f32.mrb[0].mxu0
    %v2708 = vadd.f32 %v2560, %v2707
    %v2709 = vpop.f32.mrb[0].mxu0
    %2710 = vmatprep.mubr.f32.mxu0 0.0
    %2711 = vmatmul.mubr.f32.gmra.mrb[0].mxu0 %v2595
    %v2712 = vpop.f32.mrb[0].mxu0
    %v2713 = vadd.f32 %v2565, %v2712
    %v2714 = vpop.f32.mrb[0].mxu0
    %2715 = vmatprep.mubr.f32.mxu0 0.0
    %2716 = vmatmul.mubr.f32.gmra.mrb[0].mxu0 %v2597
    %v2717 = vpop.f32.mrb[0].mxu0
    %v2718 = vadd.f32 %v2570, %v2717
    %v2719 = vpop.f32.mrb[0].mxu0
    %2720 = vmatprep.mubr.f32.mxu0 0.0
    %2721 = vmatmul.mubr.f32.gmra.mrb[0].mxu0 %v2599
    %v2722 = vpop.f32.mrb[0].mxu0
    %v2723 = vadd.f32 %v2575, %v2722
    %v2724 = vpop.f32.mrb[0].mxu0
    %2725 = vdwg.mxu0
    %2727 = vset.pattern.permute.xlu0 64
    %2728 = vperm.xlu0 %2727, %v2493
    %v2729 = vpop.permute.xlu0 %2728
    %2732 = vset.pattern.permute.xlu0 64
    %2733 = vperm.xlu0 %2732, %v2494
    %v2734 = vpop.permute.xlu0 %2733
    %2737 = vset.pattern.permute.xlu0 64
    %2738 = vperm.xlu0 %2737, %v2495
    %v2739 = vpop.permute.xlu0 %2738
    %2742 = vset.pattern.permute.xlu0 64
    %2743 = vperm.xlu0 %2742, %v2496
    %v2744 = vpop.permute.xlu0 %2743
    %v2746 = vadd.f32 %v2668, %v2729
    %v2747 = vadd.f32 %v2673, %v2734
    %v2748 = vadd.f32 %v2678, %v2739
    %v2749 = vadd.f32 %v2683, %v2744
    %v2750 = vxor.u32 %v2746, 2147483648
    %v2751 = vxor.u32 %v2747, 2147483648
    %v2752 = vxor.u32 %v2748, 2147483648
    %v2753 = vxor.u32 %v2749, 2147483648
    %v2754 = vmul.f32 %v2750, 1.442695
    %v2755 = vpow.pop %v2754
    %v2756 = vmul.f32 %v2751, 1.442695
    %v2757 = vpow.pop %v2756
    %v2758 = vmul.f32 %v2752, 1.442695
    %v2759 = vpow.pop %v2758
    %v2760 = vmul.f32 %v2753, 1.442695
    %v2761 = vpow.pop %v2760
    %v2762 = vadd.f32 %v2755, 1.0
    %v2763 = vadd.f32 %v2757, 1.0
    %v2764 = vadd.f32 %v2759, 1.0
    %v2765 = vadd.f32 %v2761, 1.0
    %v2766 = vrcp.pop %v2762
    %v2767 = vmul.f32 1.0, %v2766
    %v2768 = vrcp.pop %v2763
    %v2769 = vmul.f32 1.0, %v2768
    %v2770 = vrcp.pop %v2764
    %v2771 = vmul.f32 1.0, %v2770
    %v2772 = vrcp.pop %v2765
    %v2773 = vmul.f32 1.0, %v2772
    %2775 = vset.pattern.permute.xlu0 64
    %2776 = vperm.xlu0 %2775, %v2497
    %v2777 = vpop.permute.xlu0 %2776
    %2780 = vset.pattern.permute.xlu0 64
    %2781 = vperm.xlu0 %2780, %v2498
    %v2782 = vpop.permute.xlu0 %2781
    %2785 = vset.pattern.permute.xlu0 64
    %2786 = vperm.xlu0 %2785, %v2499
    %v2787 = vpop.permute.xlu0 %2786
    %2790 = vset.pattern.permute.xlu0 64
    %2791 = vperm.xlu0 %2790, %v2500
    %v2792 = vpop.permute.xlu0 %2791
    %v2794 = vadd.f32 %v2688, %v2777
    %v2795 = vadd.f32 %v2693, %v2782
    %v2796 = vadd.f32 %v2698, %v2787
    %v2797 = vadd.f32 %v2703, %v2792
    %v2798 = vxor.u32 %v2794, 2147483648
    %v2799 = vxor.u32 %v2795, 2147483648
    %v2800 = vxor.u32 %v2796, 2147483648
    %v2801 = vxor.u32 %v2797, 2147483648
    %v2802 = vmul.f32 %v2798, 1.442695
    %v2803 = vpow.pop %v2802
    %v2804 = vmul.f32 %v2799, 1.442695
    %v2805 = vpow.pop %v2804
    %v2806 = vmul.f32 %v2800, 1.442695
    %v2807 = vpow.pop %v2806
    %v2808 = vmul.f32 %v2801, 1.442695
    %v2809 = vpow.pop %v2808
    %v2810 = vadd.f32 %v2803, 1.0
    %v2811 = vadd.f32 %v2805, 1.0
    %v2812 = vadd.f32 %v2807, 1.0
    %v2813 = vadd.f32 %v2809, 1.0
    %v2814 = vrcp.pop %v2810
    %v2815 = vmul.f32 1.0, %v2814
    %v2816 = vrcp.pop %v2811
    %v2817 = vmul.f32 1.0, %v2816
    %v2818 = vrcp.pop %v2812
    %v2819 = vmul.f32 1.0, %v2818
    %v2820 = vrcp.pop %v2813
    %v2821 = vmul.f32 1.0, %v2820
    %2823 = vset.pattern.permute.xlu0 64
    %2824 = vperm.xlu0 %2823, %v2501
    %v2825 = vpop.permute.xlu0 %2824
    %2828 = vset.pattern.permute.xlu0 64
    %2829 = vperm.xlu0 %2828, %v2502
    %v2830 = vpop.permute.xlu0 %2829
    %2833 = vset.pattern.permute.xlu0 64
    %2834 = vperm.xlu0 %2833, %v2503
    %v2835 = vpop.permute.xlu0 %2834
    %2838 = vset.pattern.permute.xlu0 64
    %2839 = vperm.xlu0 %2838, %v2504
    %v2840 = vpop.permute.xlu0 %2839
    %v2842 = vmul.f32 %v2767, %v2825
    %v2843 = vmul.f32 %v2769, %v2830
    %v2844 = vmul.f32 %v2771, %v2835
    %v2845 = vmul.f32 %v2773, %v2840
    %v2846 = vadd.f32 %v2708, %v2842
    %v2847 = vadd.f32 %v2713, %v2843
    %v2848 = vadd.f32 %v2718, %v2844
    %v2849 = vadd.f32 %v2723, %v2845
    %v2850 = vtanh.pop %v2846
    %v2851 = vtanh.pop %v2847
    %v2852 = vtanh.pop %v2848
    %v2853 = vtanh.pop %v2849
    %v2854 = vsub.f32 1.0, %v2815
    %v2855 = vsub.f32 1.0, %v2817
    %v2856 = vsub.f32 1.0, %v2819
    %v2857 = vsub.f32 1.0, %v2821
    %v2858 = vmul.f32 %v2854, %v2850
    %v2859 = vmul.f32 %v2855, %v2851
    %v2860 = vmul.f32 %v2856, %v2852
    %v2861 = vmul.f32 %v2857, %v2853
    %2863 = vset.pattern.permute.xlu0 32
    %2864 = vperm.xlu0 %2863, %v2481
    %v2865 = vpop.permute.xlu0 %2864
    %2868 = vset.pattern.permute.xlu0 32
    %2869 = vperm.xlu0 %2868, %v2482
    %v2870 = vpop.permute.xlu0 %2869
    %2873 = vset.pattern.permute.xlu0 32
    %2874 = vperm.xlu0 %2873, %v2483
    %v2875 = vpop.permute.xlu0 %2874
    %2878 = vset.pattern.permute.xlu0 32
    %2879 = vperm.xlu0 %2878, %v2484
    %v2880 = vpop.permute.xlu0 %2879
    %2883 = vset.pattern.permute.xlu0 32
    %2884 = vperm.xlu0 %2883, %v2485
    %v2885 = vpop.permute.xlu0 %2884
    %2888 = vset.pattern.permute.xlu0 32
    %2889 = vperm.xlu0 %2888, %v2486
    %v2890 = vpop.permute.xlu0 %2889
    %2893 = vset.pattern.permute.xlu0 32
    %2894 = vperm.xlu0 %2893, %v2487
    %v2895 = vpop.permute.xlu0 %2894
    %2898 = vset.pattern.permute.xlu0 32
    %2899 = vperm.xlu0 %2898, %v2488
    %v2900 = vpop.permute.xlu0 %2899
    %2903 = vset.pattern.permute.xlu0 32
    %2904 = vperm.xlu0 %2903, %v2489
    %v2905 = vpop.permute.xlu0 %2904
    %2908 = vset.pattern.permute.xlu0 32
    %2909 = vperm.xlu0 %2908, %v2490
    %v2910 = vpop.permute.xlu0 %2909
    %2913 = vset.pattern.permute.xlu0 32
    %2914 = vperm.xlu0 %2913, %v2491
    %v2915 = vpop.permute.xlu0 %2914
    %2918 = vset.pattern.permute.xlu0 32
    %2919 = vperm.xlu0 %2918, %v2492
    %v2920 = vpop.permute.xlu0 %2919
    %v2922 = vsel %vm54, %v2481, 0
    %v2924 = vsel %vm54, %v2482, 0
    %v2926 = vsel %vm54, %v2483, 0
    %v2928 = vsel %vm54, %v2484, 0
    %v2930 = vsel %vm54, %v2485, 0
    %v2932 = vsel %vm54, %v2486, 0
    %v2934 = vsel %vm54, %v2487, 0
    %v2936 = vsel %vm54, %v2488, 0
    %v2938 = vsel %vm54, %v2489, 0
    %v2940 = vsel %vm54, %v2490, 0
    %v2942 = vsel %vm54, %v2491, 0
    %v2944 = vsel %vm54, %v2492, 0
    %2946 = vmatprep.subr.mxu0 0.0
    %2947 = vmatpush1.msra.mxu0 %v2858
    %2948 = vmatprep.subr.mxu0 0.0
    %2949 = vmatpush1.msra.mxu0 %v2859
    %2950 = vmatprep.subr.mxu0 0.0
    %2951 = vmatpush1.msra.mxu0 %v2860
    %2952 = vmatprep.subr.mxu0 0.0
    %2953 = vmatpush1.msra.mxu0 %v2861
    %2954 = vmatprep.subr.mxu0 0.0
    %2955 = vmatpush1.msra.mxu0 0.0
    %2956 = vmatprep.subr.mxu0 0.0
    %2957 = vmatpush1.msra.mxu0 0.0
    %2958 = vmatprep.subr.mxu0 0.0
    %2959 = vmatpush1.msra.mxu0 0.0
    %2960 = vmatprep.subr.mxu0 0.0
    %2961 = vmatpush1.msra.mxu0 0.0
    %2962 = vmatprep.subr.mxu0 0.0
    %2963 = vmatpush1.msra.mxu0 0.0
    %2964 = vmatprep.subr.mxu0 0.0
    %2965 = vmatpush1.msra.mxu0 0.0
    %2966 = vmatprep.subr.mxu0 0.0
    %2967 = vmatpush1.msra.mxu0 0.0
    %2968 = vmatprep.subr.mxu0 0.0
    %2969 = vmatpush1.msra.mxu0 0.0
    %2970 = vmatprep.subr.mxu0 0.0
    %2971 = vmatpush1.msra.mxu0 0.0
    %2972 = vmatprep.subr.mxu0 0.0
    %2973 = vmatpush1.msra.mxu0 0.0
    %2974 = vmatprep.subr.mxu0 0.0
    %2975 = vmatpush1.msra.mxu0 0.0
    %2976 = vmatprep.subr.mxu0 0.0
    %2977 = vmatpush1.msra.mxu0 0.0
    %2978 = vmatprep.subr.mxu0 0.0
    %2979 = vmatpush1.msra.mxu0 0.0
    %2980 = vmatprep.subr.mxu0 0.0
    %2981 = vmatpush1.msra.mxu0 0.0
    %2982 = vmatprep.subr.mxu0 0.0
    %2983 = vmatpush1.msra.mxu0 0.0
    %2984 = vmatprep.subr.mxu0 0.0
    %2985 = vmatpush1.msra.mxu0 0.0
    %2986 = vmatprep.subr.mxu0 0.0
    %2987 = vmatpush1.msra.mxu0 0.0
    %2988 = vmatprep.subr.mxu0 0.0
    %2989 = vmatpush1.msra.mxu0 0.0
    %2990 = vmatprep.subr.mxu0 0.0
    %2991 = vmatpush1.msra.mxu0 0.0
    %2992 = vmatprep.subr.mxu0 0.0
    %2993 = vmatpush1.msra.mxu0 0.0
    %2994 = vmatprep.subr.mxu0 0.0
    %2995 = vmatpush1.msra.mxu0 0.0
    %2996 = vmatprep.subr.mxu0 0.0
    %2997 = vmatpush1.msra.mxu0 0.0
    %2998 = vmatprep.subr.mxu0 0.0
    %2999 = vmatpush1.msra.mxu0 0.0
    %3000 = vmatprep.subr.mxu0 0.0
    %3001 = vmatpush1.msra.mxu0 0.0
    %3002 = vmatprep.subr.mxu0 0.0
    %3003 = vmatpush1.msra.mxu0 0.0
    %3004 = vmatprep.subr.mxu0 0.0
    %3005 = vmatpush1.msra.mxu0 0.0
    %3006 = vmatprep.subr.mxu0 0.0
    %3007 = vmatpush1.msra.mxu0 0.0
    %3008 = vmatprep.subr.mxu0 0.0
    %3009 = vmatpush1.msra.mxu0 0.0
    %3010 = vmatprep.mubr.f32.mxu0 0.0
    %3011 = vmatmul.mubr.f32.gmra.mrb[0].mxu0 %v2922
    %v3012 = vpop.f32.mrb[0].mxu0
    %v3013 = vadd.f32 %v2865, %v3012
    %v3014 = vpop.f32.mrb[0].mxu0
    %3015 = vmatprep.mubr.f32.mxu0 0.0
    %3016 = vmatmul.mubr.f32.gmra.mrb[0].mxu0 %v2924
    %v3017 = vpop.f32.mrb[0].mxu0
    %v3018 = vadd.f32 %v2870, %v3017
    %v3019 = vpop.f32.mrb[0].mxu0
    %3020 = vmatprep.mubr.f32.mxu0 0.0
    %3021 = vmatmul.mubr.f32.gmra.mrb[0].mxu0 %v2926
    %v3022 = vpop.f32.mrb[0].mxu0
    %v3023 = vadd.f32 %v2875, %v3022
    %v3024 = vpop.f32.mrb[0].mxu0
    %3025 = vmatprep.mubr.f32.mxu0 0.0
    %3026 = vmatmul.mubr.f32.gmra.mrb[0].mxu0 %v2928
    %v3027 = vpop.f32.mrb[0].mxu0
    %v3028 = vadd.f32 %v2880, %v3027
    %v3029 = vpop.f32.mrb[0].mxu0
    %3030 = vmatprep.mubr.f32.mxu0 0.0
    %3031 = vmatmul.mubr.f32.gmra.mrb[0].mxu0 %v2930
    %v3032 = vpop.f32.mrb[0].mxu0
    %v3033 = vadd.f32 %v2885, %v3032
    %v3034 = vpop.f32.mrb[0].mxu0
    %3035 = vmatprep.mubr.f32.mxu0 0.0
    %3036 = vmatmul.mubr.f32.gmra.mrb[0].mxu0 %v2932
    %v3037 = vpop.f32.mrb[0].mxu0
    %v3038 = vadd.f32 %v2890, %v3037
    %v3039 = vpop.f32.mrb[0].mxu0
    %3040 = vmatprep.mubr.f32.mxu0 0.0
    %3041 = vmatmul.mubr.f32.gmra.mrb[0].mxu0 %v2934
    %v3042 = vpop.f32.mrb[0].mxu0
    %v3043 = vadd.f32 %v2895, %v3042
    %v3044 = vpop.f32.mrb[0].mxu0
    %3045 = vmatprep.mubr.f32.mxu0 0.0
    %3046 = vmatmul.mubr.f32.gmra.mrb[0].mxu0 %v2936
    %v3047 = vpop.f32.mrb[0].mxu0
    %v3048 = vadd.f32 %v2900, %v3047
    %v3049 = vpop.f32.mrb[0].mxu0
    %3050 = vmatprep.mubr.f32.mxu0 0.0
    %3051 = vmatmul.mubr.f32.gmra.mrb[0].mxu0 %v2938
    %v3052 = vpop.f32.mrb[0].mxu0
    %v3053 = vadd.f32 %v2905, %v3052
    %v3054 = vpop.f32.mrb[0].mxu0
    %3055 = vmatprep.mubr.f32.mxu0 0.0
    %3056 = vmatmul.mubr.f32.gmra.mrb[0].mxu0 %v2940
    %v3057 = vpop.f32.mrb[0].mxu0
    %v3058 = vadd.f32 %v2910, %v3057
    %v3059 = vpop.f32.mrb[0].mxu0
    %3060 = vmatprep.mubr.f32.mxu0 0.0
    %3061 = vmatmul.mubr.f32.gmra.mrb[0].mxu0 %v2942
    %v3062 = vpop.f32.mrb[0].mxu0
    %v3063 = vadd.f32 %v2915, %v3062
    %v3064 = vpop.f32.mrb[0].mxu0
    %3065 = vmatprep.mubr.f32.mxu0 0.0
    %3066 = vmatmul.mubr.f32.gmra.mrb[0].mxu0 %v2944
    %v3067 = vpop.f32.mrb[0].mxu0
    %v3068 = vadd.f32 %v2920, %v3067
    %v3069 = vpop.f32.mrb[0].mxu0
    %3070 = vdwg.mxu0
    %3072 = vset.pattern.permute.xlu0 64
    %3073 = vperm.xlu0 %3072, %v2505
    %v3074 = vpop.permute.xlu0 %3073
    %3077 = vset.pattern.permute.xlu0 64
    %3078 = vperm.xlu0 %3077, %v2506
    %v3079 = vpop.permute.xlu0 %3078
    %3082 = vset.pattern.permute.xlu0 64
    %3083 = vperm.xlu0 %3082, %v2507
    %v3084 = vpop.permute.xlu0 %3083
    %3087 = vset.pattern.permute.xlu0 64
    %3088 = vperm.xlu0 %3087, %v2508
    %v3089 = vpop.permute.xlu0 %3088
    %v3091 = vadd.f32 %v3013, %v3074
    %v3092 = vadd.f32 %v3018, %v3079
    %v3093 = vadd.f32 %v3023, %v3084
    %v3094 = vadd.f32 %v3028, %v3089
    %v3095 = vxor.u32 %v3091, 2147483648
    %v3096 = vxor.u32 %v3092, 2147483648
    %v3097 = vxor.u32 %v3093, 2147483648
    %v3098 = vxor.u32 %v3094, 2147483648
    %v3099 = vmul.f32 %v3095, 1.442695
    %v3100 = vpow.pop %v3099
    %v3101 = vmul.f32 %v3096, 1.442695
    %v3102 = vpow.pop %v3101
    %v3103 = vmul.f32 %v3097, 1.442695
    %v3104 = vpow.pop %v3103
    %v3105 = vmul.f32 %v3098, 1.442695
    %v3106 = vpow.pop %v3105
    %v3107 = vadd.f32 %v3100, 1.0
    %v3108 = vadd.f32 %v3102, 1.0
    %v3109 = vadd.f32 %v3104, 1.0
    %v3110 = vadd.f32 %v3106, 1.0
    %v3111 = vrcp.pop %v3107
    %v3112 = vmul.f32 1.0, %v3111
    %v3113 = vrcp.pop %v3108
    %v3114 = vmul.f32 1.0, %v3113
    %v3115 = vrcp.pop %v3109
    %v3116 = vmul.f32 1.0, %v3115
    %v3117 = vrcp.pop %v3110
    %v3118 = vmul.f32 1.0, %v3117
    %3120 = vset.pattern.permute.xlu0 64
    %3121 = vperm.xlu0 %3120, %v2509
    %v3122 = vpop.permute.xlu0 %3121
    %3125 = vset.pattern.permute.xlu0 64
    %3126 = vperm.xlu0 %3125, %v2510
    %v3127 = vpop.permute.xlu0 %3126
    %3130 = vset.pattern.permute.xlu0 64
    %3131 = vperm.xlu0 %3130, %v2511
    %v3132 = vpop.permute.xlu0 %3131
    %3135 = vset.pattern.permute.xlu0 64
    %3136 = vperm.xlu0 %3135, %v2512
    %v3137 = vpop.permute.xlu0 %3136
    %v3139 = vadd.f32 %v3033, %v3122
    %v3140 = vadd.f32 %v3038, %v3127
    %v3141 = vadd.f32 %v3043, %v3132
    %v3142 = vadd.f32 %v3048, %v3137
    %v3143 = vxor.u32 %v3139, 2147483648
    %v3144 = vxor.u32 %v3140, 2147483648
    %v3145 = vxor.u32 %v3141, 2147483648
    %v3146 = vxor.u32 %v3142, 2147483648
    %v3147 = vmul.f32 %v3143, 1.442695
    %v3148 = vpow.pop %v3147
    %v3149 = vmul.f32 %v3144, 1.442695
    %v3150 = vpow.pop %v3149
    %v3151 = vmul.f32 %v3145, 1.442695
    %v3152 = vpow.pop %v3151
    %v3153 = vmul.f32 %v3146, 1.442695
    %v3154 = vpow.pop %v3153
    %v3155 = vadd.f32 %v3148, 1.0
    %v3156 = vadd.f32 %v3150, 1.0
    %v3157 = vadd.f32 %v3152, 1.0
    %v3158 = vadd.f32 %v3154, 1.0
    %v3159 = vrcp.pop %v3155
    %v3160 = vmul.f32 1.0, %v3159
    %v3161 = vrcp.pop %v3156
    %v3162 = vmul.f32 1.0, %v3161
    %v3163 = vrcp.pop %v3157
    %v3164 = vmul.f32 1.0, %v3163
    %v3165 = vrcp.pop %v3158
    %v3166 = vmul.f32 1.0, %v3165
    %3168 = vset.pattern.permute.xlu0 64
    %3169 = vperm.xlu0 %3168, %v2513
    %v3170 = vpop.permute.xlu0 %3169
    %3173 = vset.pattern.permute.xlu0 64
    %3174 = vperm.xlu0 %3173, %v2514
    %v3175 = vpop.permute.xlu0 %3174
    %3178 = vset.pattern.permute.xlu0 64
    %3179 = vperm.xlu0 %3178, %v2515
    %v3180 = vpop.permute.xlu0 %3179
    %3183 = vset.pattern.permute.xlu0 64
    %3184 = vperm.xlu0 %3183, %v2516
    %v3185 = vpop.permute.xlu0 %3184
    %v3187 = vmul.f32 %v3112, %v3170
    %v3188 = vmul.f32 %v3114, %v3175
    %v3189 = vmul.f32 %v3116, %v3180
    %v3190 = vmul.f32 %v3118, %v3185
    %v3191 = vadd.f32 %v3053, %v3187
    %v3192 = vadd.f32 %v3058, %v3188
    %v3193 = vadd.f32 %v3063, %v3189
    %v3194 = vadd.f32 %v3068, %v3190
    %v3195 = vtanh.pop %v3191
    %v3196 = vtanh.pop %v3192
    %v3197 = vtanh.pop %v3193
    %v3198 = vtanh.pop %v3194
    %v3199 = vsub.f32 1.0, %v3160
    %v3200 = vsub.f32 1.0, %v3162
    %v3201 = vsub.f32 1.0, %v3164
    %v3202 = vsub.f32 1.0, %v3166
    %v3203 = vmul.f32 %v3199, %v3195
    %v3204 = vmul.f32 %v3200, %v3196
    %v3205 = vmul.f32 %v3201, %v3197
    %v3206 = vmul.f32 %v3202, %v3198
    %vm3207 = vcmask 523264
    %v3208 = vsel %vm3207, %v2493, 0
    %v3210 = vsel %vm3207, %v2494, 0
    %v3212 = vsel %vm3207, %v2495, 0
    %v3214 = vsel %vm3207, %v2496, 0
    %v3216 = vsel %vm3207, %v2497, 0
    %v3218 = vsel %vm3207, %v2498, 0
    %v3220 = vsel %vm3207, %v2499, 0
    %v3222 = vsel %vm3207, %v2500, 0
    %v3224 = vsel %vm3207, %v2501, 0
    %v3226 = vsel %vm3207, %v2502, 0
    %v3228 = vsel %vm3207, %v2503, 0
    %v3230 = vsel %vm3207, %v2504, 0
    %v3232 = vsel %vm3207, %v2505, 0
    %v3234 = vsel %vm3207, %v2506, 0
    %v3236 = vsel %vm3207, %v2507, 0
    %v3238 = vsel %vm3207, %v2508, 0
    %v3240 = vsel %vm3207, %v2509, 0
    %v3242 = vsel %vm3207, %v2510, 0
    %v3244 = vsel %vm3207, %v2511, 0
    %v3246 = vsel %vm3207, %v2512, 0
    %v3248 = vsel %vm3207, %v2513, 0
    %v3250 = vsel %vm3207, %v2514, 0
    %v3252 = vsel %vm3207, %v2515, 0
    %v3254 = vsel %vm3207, %v2516, 0
    %3256 = vmatprep.subr.mxu0 0.0
    %3257 = vmatpush1.msra.mxu0 %v2858
    %3258 = vmatprep.subr.mxu0 0.0
    %3259 = vmatpush1.msra.mxu0 %v2859
    %3260 = vmatprep.subr.mxu0 0.0
    %3261 = vmatpush1.msra.mxu0 %v2860
    %3262 = vmatprep.subr.mxu0 0.0
    %3263 = vmatpush1.msra.mxu0 %v2861
    %3264 = vmatprep.subr.mxu0 0.0
    %3265 = vmatpush1.msra.mxu0 %v3203
    %3266 = vmatprep.subr.mxu0 0.0
    %3267 = vmatpush1.msra.mxu0 %v3204
    %3268 = vmatprep.subr.mxu0 0.0
    %3269 = vmatpush1.msra.mxu0 %v3205
    %3270 = vmatprep.subr.mxu0 0.0
    %3271 = vmatpush1.msra.mxu0 %v3206
    %3272 = vmatprep.subr.mxu0 0.0
    %3273 = vmatpush1.msra.mxu0 0.0
    %3274 = vmatprep.subr.mxu0 0.0
    %3275 = vmatpush1.msra.mxu0 0.0
    %3276 = vmatprep.subr.mxu0 0.0
    %3277 = vmatpush1.msra.mxu0 0.0
    %3278 = vmatprep.subr.mxu0 0.0
    %3279 = vmatpush1.msra.mxu0 0.0
    %3280 = vmatprep.subr.mxu0 0.0
    %3281 = vmatpush1.msra.mxu0 0.0
    %3282 = vmatprep.subr.mxu0 0.0
    %3283 = vmatpush1.msra.mxu0 0.0
    %3284 = vmatprep.subr.mxu0 0.0
    %3285 = vmatpush1.msra.mxu0 0.0
    %3286 = vmatprep.subr.mxu0 0.0
    %3287 = vmatpush1.msra.mxu0 0.0
    %3288 = vmatprep.subr.mxu0 0.0
    %3289 = vmatpush1.msra.mxu0 0.0
    %3290 = vmatprep.subr.mxu0 0.0
    %3291 = vmatpush1.msra.mxu0 0.0
    %3292 = vmatprep.subr.mxu0 0.0
    %3293 = vmatpush1.msra.mxu0 0.0
    %3294 = vmatprep.subr.mxu0 0.0
    %3295 = vmatpush1.msra.mxu0 0.0
    %3296 = vmatprep.subr.mxu0 0.0
    %3297 = vmatpush1.msra.mxu0 0.0
    %3298 = vmatprep.subr.mxu0 0.0
    %3299 = vmatpush1.msra.mxu0 0.0
    %3300 = vmatprep.subr.mxu0 0.0
    %3301 = vmatpush1.msra.mxu0 0.0
    %3302 = vmatprep.subr.mxu0 0.0
    %3303 = vmatpush1.msra.mxu0 0.0
    %3304 = vmatprep.subr.mxu0 0.0
    %3305 = vmatpush1.msra.mxu0 0.0
    %3306 = vmatprep.subr.mxu0 0.0
    %3307 = vmatpush1.msra.mxu0 0.0
    %3308 = vmatprep.subr.mxu0 0.0
    %3309 = vmatpush1.msra.mxu0 0.0
    %3310 = vmatprep.subr.mxu0 0.0
    %3311 = vmatpush1.msra.mxu0 0.0
    %3312 = vmatprep.subr.mxu0 0.0
    %3313 = vmatpush1.msra.mxu0 0.0
    %3314 = vmatprep.subr.mxu0 0.0
    %3315 = vmatpush1.msra.mxu0 0.0
    %3316 = vmatprep.subr.mxu0 0.0
    %3317 = vmatpush1.msra.mxu0 0.0
    %3318 = vmatprep.subr.mxu0 0.0
    %3319 = vmatpush1.msra.mxu0 0.0
    %3320 = vmatprep.mubr.f32.mxu0 0.0
    %3321 = vmatmul.mubr.f32.gmra.mrb[0].mxu0 %v3208
    %v3322 = vpop.f32.mrb[0].mxu0
    %v3323 = vadd.f32 %v2729, %v3322
    %v3324 = vpop.f32.mrb[0].mxu0
    %3325 = vmatprep.mubr.f32.mxu0 0.0
    %3326 = vmatmul.mubr.f32.gmra.mrb[0].mxu0 %v3210
    %v3327 = vpop.f32.mrb[0].mxu0
    %v3328 = vadd.f32 %v2734, %v3327
    %v3329 = vpop.f32.mrb[0].mxu0
    %3330 = vmatprep.mubr.f32.mxu0 0.0
    %3331 = vmatmul.mubr.f32.gmra.mrb[0].mxu0 %v3212
    %v3332 = vpop.f32.mrb[0].mxu0
    %v3333 = vadd.f32 %v2739, %v3332
    %v3334 = vpop.f32.mrb[0].mxu0
    %3335 = vmatprep.mubr.f32.mxu0 0.0
    %3336 = vmatmul.mubr.f32.gmra.mrb[0].mxu0 %v3214
    %v3337 = vpop.f32.mrb[0].mxu0
    %v3338 = vadd.f32 %v2744, %v3337
    %v3339 = vpop.f32.mrb[0].mxu0
    %3340 = vmatprep.mubr.f32.mxu0 0.0
    %3341 = vmatmul.mubr.f32.gmra.mrb[0].mxu0 %v3216
    %v3342 = vpop.f32.mrb[0].mxu0
    %v3343 = vadd.f32 %v2777, %v3342
    %v3344 = vpop.f32.mrb[0].mxu0
    %3345 = vmatprep.mubr.f32.mxu0 0.0
    %3346 = vmatmul.mubr.f32.gmra.mrb[0].mxu0 %v3218
    %v3347 = vpop.f32.mrb[0].mxu0
    %v3348 = vadd.f32 %v2782, %v3347
    %v3349 = vpop.f32.mrb[0].mxu0
    %3350 = vmatprep.mubr.f32.mxu0 0.0
    %3351 = vmatmul.mubr.f32.gmra.mrb[0].mxu0 %v3220
    %v3352 = vpop.f32.mrb[0].mxu0
    %v3353 = vadd.f32 %v2787, %v3352
    %v3354 = vpop.f32.mrb[0].mxu0
    %3355 = vmatprep.mubr.f32.mxu0 0.0
    %3356 = vmatmul.mubr.f32.gmra.mrb[0].mxu0 %v3222
    %v3357 = vpop.f32.mrb[0].mxu0
    %v3358 = vadd.f32 %v2792, %v3357
    %v3359 = vpop.f32.mrb[0].mxu0
    %3360 = vmatprep.mubr.f32.mxu0 0.0
    %3361 = vmatmul.mubr.f32.gmra.mrb[0].mxu0 %v3224
    %v3362 = vpop.f32.mrb[0].mxu0
    %v3363 = vadd.f32 %v2825, %v3362
    %v3364 = vpop.f32.mrb[0].mxu0
    %3365 = vmatprep.mubr.f32.mxu0 0.0
    %3366 = vmatmul.mubr.f32.gmra.mrb[0].mxu0 %v3226
    %v3367 = vpop.f32.mrb[0].mxu0
    %v3368 = vadd.f32 %v2830, %v3367
    %v3369 = vpop.f32.mrb[0].mxu0
    %3370 = vmatprep.mubr.f32.mxu0 0.0
    %3371 = vmatmul.mubr.f32.gmra.mrb[0].mxu0 %v3228
    %v3372 = vpop.f32.mrb[0].mxu0
    %v3373 = vadd.f32 %v2835, %v3372
    %v3374 = vpop.f32.mrb[0].mxu0
    %3375 = vmatprep.mubr.f32.mxu0 0.0
    %3376 = vmatmul.mubr.f32.gmra.mrb[0].mxu0 %v3230
    %v3377 = vpop.f32.mrb[0].mxu0
    %v3378 = vadd.f32 %v2840, %v3377
    %v3379 = vpop.f32.mrb[0].mxu0
    %3380 = vmatprep.mubr.f32.mxu0 0.0
    %3381 = vmatmul.mubr.f32.gmra.mrb[0].mxu0 %v3232
    %v3382 = vpop.f32.mrb[0].mxu0
    %v3383 = vadd.f32 %v3074, %v3382
    %v3384 = vpop.f32.mrb[0].mxu0
    %3385 = vmatprep.mubr.f32.mxu0 0.0
    %3386 = vmatmul.mubr.f32.gmra.mrb[0].mxu0 %v3234
    %v3387 = vpop.f32.mrb[0].mxu0
    %v3388 = vadd.f32 %v3079, %v3387
    %v3389 = vpop.f32.mrb[0].mxu0
    %3390 = vmatprep.mubr.f32.mxu0 0.0
    %3391 = vmatmul.mubr.f32.gmra.mrb[0].mxu0 %v3236
    %v3392 = vpop.f32.mrb[0].mxu0
    %v3393 = vadd.f32 %v3084, %v3392
    %v3394 = vpop.f32.mrb[0].mxu0
    %3395 = vmatprep.mubr.f32.mxu0 0.0
    %3396 = vmatmul.mubr.f32.gmra.mrb[0].mxu0 %v3238
    %v3397 = vpop.f32.mrb[0].mxu0
    %v3398 = vadd.f32 %v3089, %v3397
    %v3399 = vpop.f32.mrb[0].mxu0
    %3400 = vmatprep.mubr.f32.mxu0 0.0
    %3401 = vmatmul.mubr.f32.gmra.mrb[0].mxu0 %v3240
    %v3402 = vpop.f32.mrb[0].mxu0
    %v3403 = vadd.f32 %v3122, %v3402
    %v3404 = vpop.f32.mrb[0].mxu0
    %3405 = vmatprep.mubr.f32.mxu0 0.0
    %3406 = vmatmul.mubr.f32.gmra.mrb[0].mxu0 %v3242
    %v3407 = vpop.f32.mrb[0].mxu0
    %v3408 = vadd.f32 %v3127, %v3407
    %v3409 = vpop.f32.mrb[0].mxu0
    %3410 = vmatprep.mubr.f32.mxu0 0.0
    %3411 = vmatmul.mubr.f32.gmra.mrb[0].mxu0 %v3244
    %v3412 = vpop.f32.mrb[0].mxu0
    %v3413 = vadd.f32 %v3132, %v3412
    %v3414 = vpop.f32.mrb[0].mxu0
    %3415 = vmatprep.mubr.f32.mxu0 0.0
    %3416 = vmatmul.mubr.f32.gmra.mrb[0].mxu0 %v3246
    %v3417 = vpop.f32.mrb[0].mxu0
    %v3418 = vadd.f32 %v3137, %v3417
    %v3419 = vpop.f32.mrb[0].mxu0
    %3420 = vmatprep.mubr.f32.mxu0 0.0
    %3421 = vmatmul.mubr.f32.gmra.mrb[0].mxu0 %v3248
    %v3422 = vpop.f32.mrb[0].mxu0
    %v3423 = vadd.f32 %v3170, %v3422
    %v3424 = vpop.f32.mrb[0].mxu0
    %3425 = vmatprep.mubr.f32.mxu0 0.0
    %3426 = vmatmul.mubr.f32.gmra.mrb[0].mxu0 %v3250
    %v3427 = vpop.f32.mrb[0].mxu0
    %v3428 = vadd.f32 %v3175, %v3427
    %v3429 = vpop.f32.mrb[0].mxu0
    %3430 = vmatprep.mubr.f32.mxu0 0.0
    %3431 = vmatmul.mubr.f32.gmra.mrb[0].mxu0 %v3252
    %v3432 = vpop.f32.mrb[0].mxu0
    %v3433 = vadd.f32 %v3180, %v3432
    %v3434 = vpop.f32.mrb[0].mxu0
    %3435 = vmatprep.mubr.f32.mxu0 0.0
    %3436 = vmatmul.mubr.f32.gmra.mrb[0].mxu0 %v3254
    %v3437 = vpop.f32.mrb[0].mxu0
    %v3438 = vadd.f32 %v3185, %v3437
    %v3439 = vpop.f32.mrb[0].mxu0
    %3440 = vdwg.mxu0
    %3445 = vrot.lane.b32.xlu0 %v3323, 16
    %v3446 = vpop.permute.xlu0 %3445
    %3447 = vrot.lane.b32.xlu0 %v3328, 16
    %v3448 = vpop.permute.xlu0 %3447
    %3449 = vrot.lane.b32.xlu0 %v3333, 16
    %v3450 = vpop.permute.xlu0 %3449
    %3451 = vrot.lane.b32.xlu0 %v3338, 16
    %v3452 = vpop.permute.xlu0 %3451
    %v3457 = vadd.f32 %v2668, %v3446
    %v3458 = vadd.f32 %v2673, %v3448
    %v3459 = vadd.f32 %v2678, %v3450
    %v3460 = vadd.f32 %v2683, %v3452
    %v3461 = vxor.u32 %v3457, 2147483648
    %v3462 = vxor.u32 %v3458, 2147483648
    %v3463 = vxor.u32 %v3459, 2147483648
    %v3464 = vxor.u32 %v3460, 2147483648
    %v3465 = vmul.f32 %v3461, 1.442695
    %v3466 = vpow.pop %v3465
    %v3467 = vmul.f32 %v3462, 1.442695
    %v3468 = vpow.pop %v3467
    %v3469 = vmul.f32 %v3463, 1.442695
    %v3470 = vpow.pop %v3469
    %v3471 = vmul.f32 %v3464, 1.442695
    %v3472 = vpow.pop %v3471
    %v3473 = vadd.f32 %v3466, 1.0
    %v3474 = vadd.f32 %v3468, 1.0
    %v3475 = vadd.f32 %v3470, 1.0
    %v3476 = vadd.f32 %v3472, 1.0
    %v3477 = vrcp.pop %v3473
    %v3478 = vmul.f32 1.0, %v3477
    %v3479 = vrcp.pop %v3474
    %v3480 = vmul.f32 1.0, %v3479
    %v3481 = vrcp.pop %v3475
    %v3482 = vmul.f32 1.0, %v3481
    %v3483 = vrcp.pop %v3476
    %v3484 = vmul.f32 1.0, %v3483
    %3489 = vrot.lane.b32.xlu0 %v3343, 16
    %v3490 = vpop.permute.xlu0 %3489
    %3491 = vrot.lane.b32.xlu0 %v3348, 16
    %v3492 = vpop.permute.xlu0 %3491
    %3493 = vrot.lane.b32.xlu0 %v3353, 16
    %v3494 = vpop.permute.xlu0 %3493
    %3495 = vrot.lane.b32.xlu0 %v3358, 16
    %v3496 = vpop.permute.xlu0 %3495
    %v3501 = vadd.f32 %v2688, %v3490
    %v3502 = vadd.f32 %v2693, %v3492
    %v3503 = vadd.f32 %v2698, %v3494
    %v3504 = vadd.f32 %v2703, %v3496
    %v3505 = vxor.u32 %v3501, 2147483648
    %v3506 = vxor.u32 %v3502, 2147483648
    %v3507 = vxor.u32 %v3503, 2147483648
    %v3508 = vxor.u32 %v3504, 2147483648
    %v3509 = vmul.f32 %v3505, 1.442695
    %v3510 = vpow.pop %v3509
    %v3511 = vmul.f32 %v3506, 1.442695
    %v3512 = vpow.pop %v3511
    %v3513 = vmul.f32 %v3507, 1.442695
    %v3514 = vpow.pop %v3513
    %v3515 = vmul.f32 %v3508, 1.442695
    %v3516 = vpow.pop %v3515
    %v3517 = vadd.f32 %v3510, 1.0
    %v3518 = vadd.f32 %v3512, 1.0
    %v3519 = vadd.f32 %v3514, 1.0
    %v3520 = vadd.f32 %v3516, 1.0
    %v3521 = vrcp.pop %v3517
    %v3522 = vmul.f32 1.0, %v3521
    %v3523 = vrcp.pop %v3518
    %v3524 = vmul.f32 1.0, %v3523
    %v3525 = vrcp.pop %v3519
    %v3526 = vmul.f32 1.0, %v3525
    %v3527 = vrcp.pop %v3520
    %v3528 = vmul.f32 1.0, %v3527
    %3533 = vrot.lane.b32.xlu0 %v3363, 16
    %v3534 = vpop.permute.xlu0 %3533
    %3535 = vrot.lane.b32.xlu0 %v3368, 16
    %v3536 = vpop.permute.xlu0 %3535
    %3537 = vrot.lane.b32.xlu0 %v3373, 16
    %v3538 = vpop.permute.xlu0 %3537
    %3539 = vrot.lane.b32.xlu0 %v3378, 16
    %v3540 = vpop.permute.xlu0 %3539
    %v3545 = vmul.f32 %v3478, %v3534
    %v3546 = vmul.f32 %v3480, %v3536
    %v3547 = vmul.f32 %v3482, %v3538
    %v3548 = vmul.f32 %v3484, %v3540
    %v3549 = vadd.f32 %v2708, %v3545
    %v3550 = vadd.f32 %v2713, %v3546
    %v3551 = vadd.f32 %v2718, %v3547
    %v3552 = vadd.f32 %v2723, %v3548
    %v3553 = vtanh.pop %v3549
    %v3554 = vtanh.pop %v3550
    %v3555 = vtanh.pop %v3551
    %v3556 = vtanh.pop %v3552
    %v3557 = vsub.f32 1.0, %v3522
    %v3558 = vsub.f32 1.0, %v3524
    %v3559 = vsub.f32 1.0, %v3526
    %v3560 = vsub.f32 1.0, %v3528
    %v3561 = vmul.f32 %v3557, %v3553
    %v3562 = vmul.f32 %v3558, %v3554
    %v3563 = vmul.f32 %v3559, %v3555
    %v3564 = vmul.f32 %v3560, %v3556
    %3569 = vrot.lane.b32.xlu0 %v2858, 16
    %v3570 = vpop.permute.xlu0 %3569
    %3571 = vrot.lane.b32.xlu0 %v2859, 16
    %v3572 = vpop.permute.xlu0 %3571
    %3573 = vrot.lane.b32.xlu0 %v2860, 16
    %v3574 = vpop.permute.xlu0 %3573
    %3575 = vrot.lane.b32.xlu0 %v2861, 16
    %v3576 = vpop.permute.xlu0 %3575
    %v3581 = vmul.f32 %v3522, %v3570
    %v3582 = vmul.f32 %v3524, %v3572
    %v3583 = vmul.f32 %v3526, %v3574
    %v3584 = vmul.f32 %v3528, %v3576
    %v3585 = vadd.f32 %v3561, %v3581
    %v3586 = vadd.f32 %v3562, %v3582
    %v3587 = vadd.f32 %v3563, %v3583
    %v3588 = vadd.f32 %v3564, %v3584
    %3593 = vrot.lane.b32.xlu0 %v3585, 112
    %v3594 = vpop.permute.xlu0 %3593
    %3595 = vrot.lane.b32.xlu0 %v3586, 112
    %v3596 = vpop.permute.xlu0 %3595
    %3597 = vrot.lane.b32.xlu0 %v3587, 112
    %v3598 = vpop.permute.xlu0 %3597
    %3599 = vrot.lane.b32.xlu0 %v3588, 112
    %v3600 = vpop.permute.xlu0 %3599
    %3605 = vmatprep.subr.mxu0 0.0
    %3606 = vmatpush1.msra.mxu0 %v3594
    %3607 = vmatprep.subr.mxu0 0.0
    %3608 = vmatpush1.msra.mxu0 %v3596
    %3609 = vmatprep.subr.mxu0 0.0
    %3610 = vmatpush1.msra.mxu0 %v3598
    %3611 = vmatprep.subr.mxu0 0.0
    %3612 = vmatpush1.msra.mxu0 %v3600
    %3613 = vmatprep.subr.mxu0 0.0
    %3614 = vmatpush1.msra.mxu0 0.0
    %3615 = vmatprep.subr.mxu0 0.0
    %3616 = vmatpush1.msra.mxu0 0.0
    %3617 = vmatprep.subr.mxu0 0.0
    %3618 = vmatpush1.msra.mxu0 0.0
    %3619 = vmatprep.subr.mxu0 0.0
    %3620 = vmatpush1.msra.mxu0 0.0
    %3621 = vmatprep.subr.mxu0 0.0
    %3622 = vmatpush1.msra.mxu0 0.0
    %3623 = vmatprep.subr.mxu0 0.0
    %3624 = vmatpush1.msra.mxu0 0.0
    %3625 = vmatprep.subr.mxu0 0.0
    %3626 = vmatpush1.msra.mxu0 0.0
    %3627 = vmatprep.subr.mxu0 0.0
    %3628 = vmatpush1.msra.mxu0 0.0
    %3629 = vmatprep.subr.mxu0 0.0
    %3630 = vmatpush1.msra.mxu0 0.0
    %3631 = vmatprep.subr.mxu0 0.0
    %3632 = vmatpush1.msra.mxu0 0.0
    %3633 = vmatprep.subr.mxu0 0.0
    %3634 = vmatpush1.msra.mxu0 0.0
    %3635 = vmatprep.subr.mxu0 0.0
    %3636 = vmatpush1.msra.mxu0 0.0
    %3637 = vmatprep.subr.mxu0 0.0
    %3638 = vmatpush1.msra.mxu0 0.0
    %3639 = vmatprep.subr.mxu0 0.0
    %3640 = vmatpush1.msra.mxu0 0.0
    %3641 = vmatprep.subr.mxu0 0.0
    %3642 = vmatpush1.msra.mxu0 0.0
    %3643 = vmatprep.subr.mxu0 0.0
    %3644 = vmatpush1.msra.mxu0 0.0
    %3645 = vmatprep.subr.mxu0 0.0
    %3646 = vmatpush1.msra.mxu0 0.0
    %3647 = vmatprep.subr.mxu0 0.0
    %3648 = vmatpush1.msra.mxu0 0.0
    %3649 = vmatprep.subr.mxu0 0.0
    %3650 = vmatpush1.msra.mxu0 0.0
    %3651 = vmatprep.subr.mxu0 0.0
    %3652 = vmatpush1.msra.mxu0 0.0
    %3653 = vmatprep.subr.mxu0 0.0
    %3654 = vmatpush1.msra.mxu0 0.0
    %3655 = vmatprep.subr.mxu0 0.0
    %3656 = vmatpush1.msra.mxu0 0.0
    %3657 = vmatprep.subr.mxu0 0.0
    %3658 = vmatpush1.msra.mxu0 0.0
    %3659 = vmatprep.subr.mxu0 0.0
    %3660 = vmatpush1.msra.mxu0 0.0
    %3661 = vmatprep.subr.mxu0 0.0
    %3662 = vmatpush1.msra.mxu0 0.0
    %3663 = vmatprep.subr.mxu0 0.0
    %3664 = vmatpush1.msra.mxu0 0.0
    %3665 = vmatprep.subr.mxu0 0.0
    %3666 = vmatpush1.msra.mxu0 0.0
    %3667 = vmatprep.subr.mxu0 0.0
    %3668 = vmatpush1.msra.mxu0 0.0
    %3669 = vmatprep.mubr.f32.mxu0 0.0
    %3670 = vmatmul.mubr.f32.gmra.mrb[0].mxu0 %v2922
    %v3671 = vpop.f32.mrb[0].mxu0
    %v3672 = vadd.f32 %v2865, %v3671
    %v3673 = vpop.f32.mrb[0].mxu0
    %3674 = vmatprep.mubr.f32.mxu0 0.0
    %3675 = vmatmul.mubr.f32.gmra.mrb[0].mxu0 %v2924
    %v3676 = vpop.f32.mrb[0].mxu0
    %v3677 = vadd.f32 %v2870, %v3676
    %v3678 = vpop.f32.mrb[0].mxu0
    %3679 = vmatprep.mubr.f32.mxu0 0.0
    %3680 = vmatmul.mubr.f32.gmra.mrb[0].mxu0 %v2926
    %v3681 = vpop.f32.mrb[0].mxu0
    %v3682 = vadd.f32 %v2875, %v3681
    %v3683 = vpop.f32.mrb[0].mxu0
    %3684 = vmatprep.mubr.f32.mxu0 0.0
    %3685 = vmatmul.mubr.f32.gmra.mrb[0].mxu0 %v2928
    %v3686 = vpop.f32.mrb[0].mxu0
    %v3687 = vadd.f32 %v2880, %v3686
    %v3688 = vpop.f32.mrb[0].mxu0
    %3689 = vmatprep.mubr.f32.mxu0 0.0
    %3690 = vmatmul.mubr.f32.gmra.mrb[0].mxu0 %v2930
    %v3691 = vpop.f32.mrb[0].mxu0
    %v3692 = vadd.f32 %v2885, %v3691
    %v3693 = vpop.f32.mrb[0].mxu0
    %3694 = vmatprep.mubr.f32.mxu0 0.0
    %3695 = vmatmul.mubr.f32.gmra.mrb[0].mxu0 %v2932
    %v3696 = vpop.f32.mrb[0].mxu0
    %v3697 = vadd.f32 %v2890, %v3696
    %v3698 = vpop.f32.mrb[0].mxu0
    %3699 = vmatprep.mubr.f32.mxu0 0.0
    %3700 = vmatmul.mubr.f32.gmra.mrb[0].mxu0 %v2934
    %v3701 = vpop.f32.mrb[0].mxu0
    %v3702 = vadd.f32 %v2895, %v3701
    %v3703 = vpop.f32.mrb[0].mxu0
    %3704 = vmatprep.mubr.f32.mxu0 0.0
    %3705 = vmatmul.mubr.f32.gmra.mrb[0].mxu0 %v2936
    %v3706 = vpop.f32.mrb[0].mxu0
    %v3707 = vadd.f32 %v2900, %v3706
    %v3708 = vpop.f32.mrb[0].mxu0
    %3709 = vmatprep.mubr.f32.mxu0 0.0
    %3710 = vmatmul.mubr.f32.gmra.mrb[0].mxu0 %v2938
    %v3711 = vpop.f32.mrb[0].mxu0
    %v3712 = vadd.f32 %v2905, %v3711
    %v3713 = vpop.f32.mrb[0].mxu0
    %3714 = vmatprep.mubr.f32.mxu0 0.0
    %3715 = vmatmul.mubr.f32.gmra.mrb[0].mxu0 %v2940
    %v3716 = vpop.f32.mrb[0].mxu0
    %v3717 = vadd.f32 %v2910, %v3716
    %v3718 = vpop.f32.mrb[0].mxu0
    %3719 = vmatprep.mubr.f32.mxu0 0.0
    %3720 = vmatmul.mubr.f32.gmra.mrb[0].mxu0 %v2942
    %v3721 = vpop.f32.mrb[0].mxu0
    %v3722 = vadd.f32 %v2915, %v3721
    %v3723 = vpop.f32.mrb[0].mxu0
    %3724 = vmatprep.mubr.f32.mxu0 0.0
    %3725 = vmatmul.mubr.f32.gmra.mrb[0].mxu0 %v2944
    %v3726 = vpop.f32.mrb[0].mxu0
    %v3727 = vadd.f32 %v2920, %v3726
    %v3728 = vpop.f32.mrb[0].mxu0
    %3729 = vdwg.mxu0
    %v3730 = vadd.f32 %v3672, %v3383
    %v3731 = vadd.f32 %v3677, %v3388
    %v3732 = vadd.f32 %v3682, %v3393
    %v3733 = vadd.f32 %v3687, %v3398
    %v3734 = vxor.u32 %v3730, 2147483648
    %v3735 = vxor.u32 %v3731, 2147483648
    %v3736 = vxor.u32 %v3732, 2147483648
    %v3737 = vxor.u32 %v3733, 2147483648
    %v3738 = vmul.f32 %v3734, 1.442695
    %v3739 = vpow.pop %v3738
    %v3740 = vmul.f32 %v3735, 1.442695
    %v3741 = vpow.pop %v3740
    %v3742 = vmul.f32 %v3736, 1.442695
    %v3743 = vpow.pop %v3742
    %v3744 = vmul.f32 %v3737, 1.442695
    %v3745 = vpow.pop %v3744
    %v3746 = vadd.f32 %v3739, 1.0
    %v3747 = vadd.f32 %v3741, 1.0
    %v3748 = vadd.f32 %v3743, 1.0
    %v3749 = vadd.f32 %v3745, 1.0
    %v3750 = vrcp.pop %v3746
    %v3751 = vmul.f32 1.0, %v3750
    %v3752 = vrcp.pop %v3747
    %v3753 = vmul.f32 1.0, %v3752
    %v3754 = vrcp.pop %v3748
    %v3755 = vmul.f32 1.0, %v3754
    %v3756 = vrcp.pop %v3749
    %v3757 = vmul.f32 1.0, %v3756
    %v3758 = vadd.f32 %v3692, %v3403
    %v3759 = vadd.f32 %v3697, %v3408
    %v3760 = vadd.f32 %v3702, %v3413
    %v3761 = vadd.f32 %v3707, %v3418
    %v3762 = vxor.u32 %v3758, 2147483648
    %v3763 = vxor.u32 %v3759, 2147483648
    %v3764 = vxor.u32 %v3760, 2147483648
    %v3765 = vxor.u32 %v3761, 2147483648
    %v3766 = vmul.f32 %v3762, 1.442695
    %v3767 = vpow.pop %v3766
    %v3768 = vmul.f32 %v3763, 1.442695
    %v3769 = vpow.pop %v3768
    %v3770 = vmul.f32 %v3764, 1.442695
    %v3771 = vpow.pop %v3770
    %v3772 = vmul.f32 %v3765, 1.442695
    %v3773 = vpow.pop %v3772
    %v3774 = vadd.f32 %v3767, 1.0
    %v3775 = vadd.f32 %v3769, 1.0
    %v3776 = vadd.f32 %v3771, 1.0
    %v3777 = vadd.f32 %v3773, 1.0
    %v3778 = vrcp.pop %v3774
    %v3779 = vmul.f32 1.0, %v3778
    %v3780 = vrcp.pop %v3775
    %v3781 = vmul.f32 1.0, %v3780
    %v3782 = vrcp.pop %v3776
    %v3783 = vmul.f32 1.0, %v3782
    %v3784 = vrcp.pop %v3777
    %v3785 = vmul.f32 1.0, %v3784
    %v3786 = vmul.f32 %v3751, %v3423
    %v3787 = vmul.f32 %v3753, %v3428
    %v3788 = vmul.f32 %v3755, %v3433
    %v3789 = vmul.f32 %v3757, %v3438
    %v3790 = vadd.f32 %v3712, %v3786
    %v3791 = vadd.f32 %v3717, %v3787
    %v3792 = vadd.f32 %v3722, %v3788
    %v3793 = vadd.f32 %v3727, %v3789
    %v3794 = vtanh.pop %v3790
    %v3795 = vtanh.pop %v3791
    %v3796 = vtanh.pop %v3792
    %v3797 = vtanh.pop %v3793
    %v3798 = vsub.f32 1.0, %v3779
    %v3799 = vsub.f32 1.0, %v3781
    %v3800 = vsub.f32 1.0, %v3783
    %v3801 = vsub.f32 1.0, %v3785
    %v3802 = vmul.f32 %v3798, %v3794
    %v3803 = vmul.f32 %v3799, %v3795
    %v3804 = vmul.f32 %v3800, %v3796
    %v3805 = vmul.f32 %v3801, %v3797
    %v3806 = vmul.f32 %v3779, %v3203
    %v3807 = vmul.f32 %v3781, %v3204
    %v3808 = vmul.f32 %v3783, %v3205
    %v3809 = vmul.f32 %v3785, %v3206
    %v3810 = vadd.f32 %v3802, %v3806
    %v3811 = vadd.f32 %v3803, %v3807
    %v3812 = vadd.f32 %v3804, %v3808
    %v3813 = vadd.f32 %v3805, %v3809
    %v3814 = vld [vmem:[%s2 + $0x1e0] sm:$0xff]
    %3816 = vset.pattern.permute.xlu0 64
    %3817 = vperm.xlu0 %3816, %v3814
    %v3818 = vpop.permute.xlu0 %3817
    %v3820 = vsel %vm3207, %v3814, 0
    %3822 = vmatprep.subr.mxu0 0.0
    %3823 = vmatpush1.msra.mxu0 %v3203
    %3824 = vmatprep.subr.mxu0 0.0
    %3825 = vmatpush1.msra.mxu0 %v3204
    %3826 = vmatprep.subr.mxu0 0.0
    %3827 = vmatpush1.msra.mxu0 %v3205
    %3828 = vmatprep.subr.mxu0 0.0
    %3829 = vmatpush1.msra.mxu0 %v3206
    %3830 = vmatprep.subr.mxu0 0.0
    %3831 = vmatpush1.msra.mxu0 %v3810
    %3832 = vmatprep.subr.mxu0 0.0
    %3833 = vmatpush1.msra.mxu0 %v3811
    %3834 = vmatprep.subr.mxu0 0.0
    %3835 = vmatpush1.msra.mxu0 %v3812
    %3836 = vmatprep.subr.mxu0 0.0
    %3837 = vmatpush1.msra.mxu0 %v3813
    %3838 = vmatprep.subr.mxu0 0.0
    %3839 = vmatpush1.msra.mxu0 0.0
    %3840 = vmatprep.subr.mxu0 0.0
    %3841 = vmatpush1.msra.mxu0 0.0
    %3842 = vmatprep.subr.mxu0 0.0
    %3843 = vmatpush1.msra.mxu0 0.0
    %3844 = vmatprep.subr.mxu0 0.0
    %3845 = vmatpush1.msra.mxu0 0.0
    %3846 = vmatprep.subr.mxu0 0.0
    %3847 = vmatpush1.msra.mxu0 0.0
    %3848 = vmatprep.subr.mxu0 0.0
    %3849 = vmatpush1.msra.mxu0 0.0
    %3850 = vmatprep.subr.mxu0 0.0
    %3851 = vmatpush1.msra.mxu0 0.0
    %3852 = vmatprep.subr.mxu0 0.0
    %3853 = vmatpush1.msra.mxu0 0.0
    %3854 = vmatprep.subr.mxu0 0.0
    %3855 = vmatpush1.msra.mxu0 0.0
    %3856 = vmatprep.subr.mxu0 0.0
    %3857 = vmatpush1.msra.mxu0 0.0
    %3858 = vmatprep.subr.mxu0 0.0
    %3859 = vmatpush1.msra.mxu0 0.0
    %3860 = vmatprep.subr.mxu0 0.0
    %3861 = vmatpush1.msra.mxu0 0.0
    %3862 = vmatprep.subr.mxu0 0.0
    %3863 = vmatpush1.msra.mxu0 0.0
    %3864 = vmatprep.subr.mxu0 0.0
    %3865 = vmatpush1.msra.mxu0 0.0
    %3866 = vmatprep.subr.mxu0 0.0
    %3867 = vmatpush1.msra.mxu0 0.0
    %3868 = vmatprep.subr.mxu0 0.0
    %3869 = vmatpush1.msra.mxu0 0.0
    %3870 = vmatprep.subr.mxu0 0.0
    %3871 = vmatpush1.msra.mxu0 0.0
    %3872 = vmatprep.subr.mxu0 0.0
    %3873 = vmatpush1.msra.mxu0 0.0
    %3874 = vmatprep.subr.mxu0 0.0
    %3875 = vmatpush1.msra.mxu0 0.0
    %3876 = vmatprep.subr.mxu0 0.0
    %3877 = vmatpush1.msra.mxu0 0.0
    %3878 = vmatprep.subr.mxu0 0.0
    %3879 = vmatpush1.msra.mxu0 0.0
    %3880 = vmatprep.subr.mxu0 0.0
    %3881 = vmatpush1.msra.mxu0 0.0
    %3882 = vmatprep.subr.mxu0 0.0
    %3883 = vmatpush1.msra.mxu0 0.0
    %3884 = vmatprep.subr.mxu0 0.0
    %3885 = vmatpush1.msra.mxu0 0.0
    %3886 = vmatprep.mubr.f32.mxu0 0.0
    %3887 = vmatmul.mubr.f32.gmra.mrb[0].mxu0 %v3820
    %v3888 = vpop.f32.mrb[0].mxu0
    %v3889 = vadd.f32 %v3818, %v3888
    %v3890 = vpop.f32.mrb[0].mxu0
    %3891 = vdwg.mxu0
    %vm3892 = vcmask 130048
    %3893 = vst.msk [vmem:[#allocation2] sm:$0xff] %vm3892, %v3889
    // Predicated region
    $region14: #{decoder_forward.1} parent=1 // pred_check
      _
    $region15: #{decoder_forward.1} parent=1 // pred_check_branch
      %3895 = sbr.rel (0) target = $region17
    $region16: #{decoder_forward.1} parent=1 // pred_region
      %s3897 = ssub.s32 128, 128
      %3898 = vsyncadd [#allocation3], %s3897
      %s3900 = sshll.u32 [#allocation2], 4
      %s3901 = int_to_ptr.vmem [resolvable:$true] %s3900
      %3903 = dma.vmem_to_hbm [thread:$0]  %s3901, 128, %s3, [#allocation3]
    $region17: #{decoder_forward.1} parent=1 // pred_fallthru
      _
    // Predicated region
    $region18: #{decoder_forward.1} parent=1 // pred_check
      _
    $region19: #{decoder_forward.1} parent=1 // pred_check_branch
      %3905 = sbr.rel (0) target = $region21
    $region20: #{decoder_forward.1} parent=1 // pred_region
      %3906 = dma.done [#allocation3], 128
    $region21: #{decoder_forward.1} parent=1 // pred_fallthru
      _
    %3907 = vsyncpa [#allocation3], 1

</llo_original>
